<compile_context>
chip_gen: v7x
topology: tpu7x:2x2x1
jax: 0.10.0
libtpu: 0.0.40
codegen_flags: <defaults>
</compile_context>

<pallas_src>
import math

import numpy as np

import jax
import jax.numpy as jnp
from jax.experimental import pallas as pl
from jax.experimental.pallas import tpu as pltpu

# ---------------- model hyper-parameters (module defaults) --------------------
LATENT_SIZE = 2            # kernel assumes 2 (dec_f scatters (1, 2) into 1 node)
HIDDEN_SIZE = 32
NUM_BASIS = 16
NUM_NODES = 10
NONZERO_NODES_INDEX = [9]  # kernel assumes a single nonzero node
BATCH = 8

IN_DIM = (NUM_NODES - 1) * 2       # 18
F_DIM = NUM_NODES * 2              # 20  (lane-dense flattened output)

assert LATENT_SIZE == 2, "kernel hard-codes latent_size == 2"
assert len(NONZERO_NODES_INDEX) == 1, "kernel hard-codes a single nonzero node"
assert 0 <= NONZERO_NODES_INDEX[0] < NUM_NODES

# ---------------- packed parameter slab layout (rows; all start at lane 0) ----
ROW_W1 = 0            # (F_DIM, HIDDEN)  w1^T shifted down 2 rows  rows   0:20
ROW_W2 = 24           # (HIDDEN, HIDDEN)                           rows  24:56
ROW_W3 = 56           # (HIDDEN, LATENT)                           rows  56:88
ROW_W3RS = 88         # (HIDDEN, NUM_BASIS)  w3^T @ [-2*s*c]       rows  88:120
ROW_REDW = 120        # (NUM_BASIS, 3)  cols [a*s*c0, a*s*c1, a*s] rows 120:136
ROW_REDA = 136        # (NUM_BASIS, 1)  a                          rows 136:152
ROW_OUT = 152         # (LATENT, F_DIM) Binv^T at nonzero-node cols rows 152:154
ROW_B1 = 154          # (1, HIDDEN)
ROW_B2 = 155          # (1, HIDDEN)
ROW_B3 = 156          # (1, LATENT)
ROW_B3RS = 157        # (1, NUM_BASIS)  b3 @ [-2*s*c] + s*||c||^2
ROW_S = 158           # (1, NUM_BASIS)  exp(log_sigmas)
ROW_LB = 159          # (1, 1)          lin1.bias
SLAB_ROWS = 160       # multiple of 8
SLAB_COLS = 32        # used width only (full-array block -> exempt from 128)

TB_CAP = 2048         # batch-tile cap (sweepable 1024-4096; safe for v5e VMEM)
_HI = jax.lax.Precision.HIGHEST


def _round_up(x, m):
    return ((x + m - 1) // m) * m


def _choose_tiles(batch):
    """Pick (TB, B_pad): minimal padding, >=2 grid steps once B >= 16 (v7x)."""
    rows = _round_up(max(batch, 1), 8)
    if rows <= 8:
        return rows, rows
    n_tiles = max(2, -(-rows // TB_CAP))
    tb = _round_up(-(-rows // n_tiles), 8)
    return tb, tb * n_tiles


# ------------------------------- Pallas kernel --------------------------------
def _energy_lat_kernel(u_ref, p_ref, out_ref):
    f32 = jnp.float32

    # ---- static views into the packed parameter slab (single DMA upstream) ---
    w1 = p_ref[ROW_W1:ROW_W1 + F_DIM, 0:HIDDEN_SIZE]             # (20, 32)
    w2 = p_ref[ROW_W2:ROW_W2 + HIDDEN_SIZE, 0:HIDDEN_SIZE]       # (32, 32)
    w3 = p_ref[ROW_W3:ROW_W3 + HIDDEN_SIZE, 0:LATENT_SIZE]       # (32, 2)
    w3_rs = p_ref[ROW_W3RS:ROW_W3RS + HIDDEN_SIZE, 0:NUM_BASIS]  # (32, 16)
    red_w = p_ref[ROW_REDW:ROW_REDW + NUM_BASIS, 0:3]            # (16, 3)
    red_a = p_ref[ROW_REDA:ROW_REDA + NUM_BASIS, 0:1]            # (16, 1)
    out_mat = p_ref[ROW_OUT:ROW_OUT + LATENT_SIZE, 0:F_DIM]      # (2, 20)
    b1 = p_ref[ROW_B1:ROW_B1 + 1, 0:HIDDEN_SIZE]
    b2 = p_ref[ROW_B2:ROW_B2 + 1, 0:HIDDEN_SIZE]
    b3 = p_ref[ROW_B3:ROW_B3 + 1, 0:LATENT_SIZE]
    b3_rs = p_ref[ROW_B3RS:ROW_B3RS + 1, 0:NUM_BASIS]
    s = p_ref[ROW_S:ROW_S + 1, 0:NUM_BASIS]
    lin_b = p_ref[ROW_LB:ROW_LB + 1, 0:1]

    # ---- enc_u: full 20-lane input; node-0 columns hit zero weight rows ------
    x = u_ref[...]                                               # (TB, 20)
    h1 = jnp.dot(x, w1, preferred_element_type=f32, precision=_HI) + b1
    h1 = jnp.where(h1 > 0, h1, jnp.exp(h1) - 1.0)                # ELU(a=1)
    h2 = jnp.dot(h1, w2, preferred_element_type=f32, precision=_HI) + b2
    h2 = jnp.where(h2 > 0, h2, jnp.exp(h2) - 1.0)
    h = jnp.dot(h2, w3, preferred_element_type=f32, precision=_HI) + b3  # (TB,2)

    h_sq = jnp.sum(h * h, axis=-1, keepdims=True)                # (TB, 1)

    # ---- r*s = s*||h-c||^2 with the linear-in-h part folded into one MXU dot -
    rs_lin = jnp.dot(h2, w3_rs, preferred_element_type=f32, precision=_HI) + b3_rs
    rs = jnp.maximum(h_sq * s + rs_lin, 0.0)                     # (TB, 16)

    one_rs = 1.0 + rs
    inv = jax.lax.rsqrt(one_rs)                                  # EUP rsqrt
    sqrt_term = one_rs * inv                                     # sqrt(1 + rs)

    # ---- cross-lane reductions on the (idle) MXU ------------------------------
    z = jnp.dot(sqrt_term, red_a, preferred_element_type=f32,
                precision=_HI) + lin_b                           # (TB, 1)
    t = jnp.tanh(z)
    sech2 = 1.0 - t * t

    red = jnp.dot(inv, red_w, preferred_element_type=f32, precision=_HI)  # (TB,3)
    wc = red[:, 0:2]                                             # sum w*c  (TB,2)
    wsum = red[:, 2:3]                                           # sum w    (TB,1)

    # gradV = (h*sum(w) - sum(w*c)) * sech^2(z) + h
    g = (wsum * h - wc) * sech2 + h                              # (TB, 2)

    # ---- f = dec_f(Binv @ gradV): one lane-dense output dot (no concat/mask) -
    out_ref[...] = jnp.dot(g, out_mat, preferred_element_type=f32, precision=_HI)


# ------------------------------- JAX wrapper -----------------------------------
def energy_lat_nn_forward(u, slab):
    """u: (B, NUM_NODES, 2) float32 -> f: (B, NUM_NODES, 2) float32."""
    B = u.shape[0]
    # contiguous flatten only; slice/scatter/zeros all happen inside the kernel
    u_flat = u.reshape(B, F_DIM)

    TB, B_pad = _choose_tiles(B)
    if B_pad != B:
        u_flat = jnp.pad(u_flat, ((0, B_pad - B), (0, 0)))

    f_flat = pl.pallas_call(
        _energy_lat_kernel,
        out_shape=jax.ShapeDtypeStruct((B_pad, F_DIM), jnp.float32),
        grid=(B_pad // TB,),
        in_specs=[
            pl.BlockSpec((TB, F_DIM), lambda i: (i, 0)),
            # constant block index -> the ~20 KB slab is DMA'd once, not per step
            pl.BlockSpec((SLAB_ROWS, SLAB_COLS), lambda i: (0, 0)),
        ],
        out_specs=pl.BlockSpec((TB, F_DIM), lambda i: (i, 0)),
        compiler_params=pltpu.CompilerParams(
            dimension_semantics=("parallel",)),
    )(u_flat, slab)

    if B_pad != B:
        f_flat = f_flat[:B]
    return f_flat.reshape(B, NUM_NODES, 2)


# -------------------------- deterministic parameter init ----------------------
def init_params(key):
    ks = jax.random.split(key, 10)

    def linear(kw, kb, fan_in, fan_out):
        bound = 1.0 / math.sqrt(fan_in)
        w = jax.random.uniform(kw, (fan_out, fan_in), jnp.float32, -bound, bound)
        b = jax.random.uniform(kb, (fan_out,), jnp.float32, -bound, bound)
        return w, b

    w1, b1 = linear(ks[0], ks[1], IN_DIM, HIDDEN_SIZE)
    w2, b2 = linear(ks[2], ks[3], HIDDEN_SIZE, HIDDEN_SIZE)
    w3, b3 = linear(ks[4], ks[5], HIDDEN_SIZE, LATENT_SIZE)

    centres = jax.random.normal(ks[6], (NUM_BASIS, LATENT_SIZE), jnp.float32)
    log_sigmas = jnp.zeros((NUM_BASIS,), jnp.float32)
    lin1_w, lin1_b = linear(ks[7], ks[8], NUM_BASIS, 1)
    binv = (jax.random.normal(ks[9], (LATENT_SIZE, LATENT_SIZE), jnp.float32)
            / math.sqrt(LATENT_SIZE))

    # ---- host-side (numpy, f64) parameter-only precomputations ---------------
    w1_n = np.asarray(w1, np.float64)
    w2_n = np.asarray(w2, np.float64)
    w3_n = np.asarray(w3, np.float64)
    b3_n = np.asarray(b3, np.float64)
    c_n = np.asarray(centres, np.float64)
    s_n = np.exp(np.asarray(log_sigmas, np.float64))            # (16,)
    a_n = np.asarray(lin1_w, np.float64)[0]                     # (16,)
    binv_n = np.asarray(binv, np.float64)

    sc = s_n[:, None] * c_n                                     # (16, 2)
    scc = s_n * np.sum(c_n * c_n, axis=1)                       # (16,)
    a_s = a_n * s_n                                             # (16,)

    w_lin = -2.0 * sc.T                                         # (2, 16)
    w3_rs = w3_n.T @ w_lin                                      # (32, 16)
    b3_rs = b3_n @ w_lin + scc                                  # (16,)
    red_w = np.stack([a_s * c_n[:, 0], a_s * c_n[:, 1], a_s], axis=1)  # (16, 3)

    out_mat = np.zeros((LATENT_SIZE, F_DIM), np.float64)
    idx = NONZERO_NODES_INDEX[0]
    out_mat[:, 2 * idx:2 * idx + 2] = binv_n.T   # out_mat[k, 2i+j] = Binv[j, k]

    # ---- pack everything into one small lane-aligned slab (single DMA) -------
    slab = np.zeros((SLAB_ROWS, SLAB_COLS), np.float32)
    slab[ROW_W1 + 2:ROW_W1 + 2 + IN_DIM, :HIDDEN_SIZE] = w1_n.T  # rows 0-1 zero
    slab[ROW_W2:ROW_W2 + HIDDEN_SIZE, :HIDDEN_SIZE] = w2_n.T
    slab[ROW_W3:ROW_W3 + HIDDEN_SIZE, :LATENT_SIZE] = w3_n.T
    slab[ROW_W3RS:ROW_W3RS + HIDDEN_SIZE, :NUM_BASIS] = w3_rs
    slab[ROW_REDW:ROW_REDW + NUM_BASIS, :3] = red_w
    slab[ROW_REDA:ROW_REDA + NUM_BASIS, 0] = a_n
    slab[ROW_OUT:ROW_OUT + LATENT_SIZE, :F_DIM] = out_mat
    slab[ROW_B1, :HIDDEN_SIZE] = np.asarray(b1)
    slab[ROW_B2, :HIDDEN_SIZE] = np.asarray(b2)
    slab[ROW_B3, :LATENT_SIZE] = np.asarray(b3)
    slab[ROW_B3RS, :NUM_BASIS] = b3_rs
    slab[ROW_S, :NUM_BASIS] = s_n
    slab[ROW_LB, 0] = float(np.asarray(lin1_b)[0])

    return {
        "slab": jnp.asarray(slab),
        # raw params kept only for the pure-JAX reference
        "w1T": w1.T, "b1": b1.reshape(1, -1),
        "w2T": w2.T, "b2": b2.reshape(1, -1),
        "w3T": w3.T, "b3": b3.reshape(1, -1),
        "centres": centres,
        "sigmas": jnp.asarray(s_n, jnp.float32),
        "a": jnp.asarray(a_n, jnp.float32),
        "lin1_bias": lin1_b.reshape(1, 1),
        "binv": binv,
    }


# ------------------------------- pure-JAX reference ----------------------------
def reference_forward(u, params):
    B = u.shape[0]
    x = u[:, 1:, :].reshape(B, IN_DIM)
    h1 = jnp.dot(x, params["w1T"], precision=_HI) + params["b1"]
    h1 = jnp.where(h1 > 0, h1, jnp.exp(h1) - 1.0)
    h2 = jnp.dot(h1, params["w2T"], precision=_HI) + params["b2"]
    h2 = jnp.where(h2 > 0, h2, jnp.exp(h2) - 1.0)
    h = jnp.dot(h2, params["w3T"], precision=_HI) + params["b3"]

    c = params["centres"]
    s = params["sigmas"]
    a = params["a"]
    R = h[:, None, :] - c[None, :, :]
    r = jnp.sum(R ** 2, -1)
    sqrt = jnp.sqrt(1.0 + r * s[None, :])
    z = jnp.dot(sqrt, a[:, None], precision=_HI) + params["lin1_bias"]
    grad_rbf = jnp.einsum("n,bnh,bn->bh", a * s, R, 1.0 / sqrt, precision=_HI)
    gradV = grad_rbf * (1.0 - jnp.tanh(z) ** 2) + h

    f_lat = jnp.dot(gradV, params["binv"].T, precision=_HI)
    f = jnp.zeros((B, NUM_NODES, 2), jnp.float32)
    f = f.at[:, jnp.asarray(NONZERO_NODES_INDEX), :].set(
        f_lat.reshape(B, len(NONZERO_NODES_INDEX), 2))
    return f


# ------------------------------------ main --------------------------------------
if __name__ == "__main__":
    key = jax.random.PRNGKey(0)
    k_params, k_u = jax.random.split(key)

    params = init_params(k_params)
    u = jax.random.normal(k_u, (BATCH, NUM_NODES, 2), jnp.float32)

    forward = jax.jit(energy_lat_nn_forward)
    f = forward(u, params["slab"])
    f = jax.block_until_ready(f)

    f_ref = reference_forward(u, params)
    assert f.shape == (BATCH, NUM_NODES, 2)
    assert jnp.allclose(f, f_ref, atol=1e-4, rtol=1e-4), "mismatch vs reference"

    print("KERNEL_OK")
</pallas_src>

<mosaic_0001>
module attributes {stable_mosaic.version = 11 : i64} {
  func.func @_energy_lat_kernel(%arg0: i32, %arg1: memref<8x20xf32, #tpu.memory_space<vmem>>, %arg2: memref<160x32xf32, #tpu.memory_space<vmem>>, %arg3: memref<8x20xf32, #tpu.memory_space<vmem>>) attributes {dimension_semantics = [#tpu.dimension_semantics<parallel>], iteration_bounds = array<i64: 1>, scalar_prefetch = 0 : i64, scratch_operands = 0 : i64, tpu.core_type = #tpu.core_type<tc>, window_params = [{transform_indices = @transform_0, window_bounds = array<i64: 8, 20>}, {pipeline_mode = #tpu.pipeline_mode<synchronous>, transform_indices = @transform_1, window_bounds = array<i64: 160, 32>}, {transform_indices = @transform_2, window_bounds = array<i64: 8, 20>}]} {
    %c0 = arith.constant 0 : index
    %c0_0 = arith.constant 0 : index
    %0 = vector.load %arg2[%c0, %c0_0] : memref<160x32xf32, #tpu.memory_space<vmem>>, vector<20x32xf32>
    %c24 = arith.constant 24 : index
    %c0_1 = arith.constant 0 : index
    %1 = vector.load %arg2[%c24, %c0_1] : memref<160x32xf32, #tpu.memory_space<vmem>>, vector<32x32xf32>
    %c56 = arith.constant 56 : index
    %c0_2 = arith.constant 0 : index
    %2 = vector.load %arg2[%c56, %c0_2] : memref<160x32xf32, #tpu.memory_space<vmem>>, vector<32x2xf32>
    %c88 = arith.constant 88 : index
    %c0_3 = arith.constant 0 : index
    %3 = vector.load %arg2[%c88, %c0_3] : memref<160x32xf32, #tpu.memory_space<vmem>>, vector<32x16xf32>
    %c120 = arith.constant 120 : index
    %c0_4 = arith.constant 0 : index
    %4 = vector.load %arg2[%c120, %c0_4] : memref<160x32xf32, #tpu.memory_space<vmem>>, vector<16x3xf32>
    %c136 = arith.constant 136 : index
    %c0_5 = arith.constant 0 : index
    %5 = vector.load %arg2[%c136, %c0_5] : memref<160x32xf32, #tpu.memory_space<vmem>>, vector<16x1xf32>
    %c152 = arith.constant 152 : index
    %c0_6 = arith.constant 0 : index
    %6 = vector.load %arg2[%c152, %c0_6] : memref<160x32xf32, #tpu.memory_space<vmem>>, vector<2x20xf32>
    %c154 = arith.constant 154 : index
    %c0_7 = arith.constant 0 : index
    %7 = vector.load %arg2[%c154, %c0_7] : memref<160x32xf32, #tpu.memory_space<vmem>>, vector<1x32xf32>
    %c155 = arith.constant 155 : index
    %c0_8 = arith.constant 0 : index
    %8 = vector.load %arg2[%c155, %c0_8] : memref<160x32xf32, #tpu.memory_space<vmem>>, vector<1x32xf32>
    %c156 = arith.constant 156 : index
    %c0_9 = arith.constant 0 : index
    %9 = vector.load %arg2[%c156, %c0_9] : memref<160x32xf32, #tpu.memory_space<vmem>>, vector<1x2xf32>
    %c157 = arith.constant 157 : index
    %c0_10 = arith.constant 0 : index
    %10 = vector.load %arg2[%c157, %c0_10] : memref<160x32xf32, #tpu.memory_space<vmem>>, vector<1x16xf32>
    %c158 = arith.constant 158 : index
    %c0_11 = arith.constant 0 : index
    %11 = vector.load %arg2[%c158, %c0_11] : memref<160x32xf32, #tpu.memory_space<vmem>>, vector<1x16xf32>
    %c159 = arith.constant 159 : index
    %c0_12 = arith.constant 0 : index
    %12 = vector.load %arg2[%c159, %c0_12] : memref<160x32xf32, #tpu.memory_space<vmem>>, vector<1x1xf32>
    %c0_13 = arith.constant 0 : index
    %c0_14 = arith.constant 0 : index
    %13 = vector.load %arg1[%c0_13, %c0_14] : memref<8x20xf32, #tpu.memory_space<vmem>>, vector<8x20xf32>
    %cst = arith.constant dense<0.000000e+00> : vector<8x32xf32>
    %14 = tpu.matmul %13, %0, %cst {dimension_numbers = #tpu.dot_dimension_numbers<[1], [0], [0], [1], [0, 0, 1, 1], [], []>, precision = #tpu.contract_precision<fp32>} : vector<8x20xf32>, vector<20x32xf32>, vector<8x32xf32> -> vector<8x32xf32>
    %15 = vector.broadcast %7 : vector<1x32xf32> to vector<8x32xf32>
    %16 = arith.addf %14, %15 : vector<8x32xf32>
    %cst_15 = arith.constant 0.000000e+00 : f32
    %17 = vector.broadcast %cst_15 : f32 to vector<8x32xf32>
    %18 = arith.cmpf ogt, %16, %17 : vector<8x32xf32>
    %19 = math.exp %16 : vector<8x32xf32>
    %cst_16 = arith.constant 1.000000e+00 : f32
    %20 = vector.broadcast %cst_16 : f32 to vector<8x32xf32>
    %21 = arith.subf %19, %20 : vector<8x32xf32>
    %22 = arith.select %18, %16, %21 : vector<8x32xi1>, vector<8x32xf32>
    %cst_17 = arith.constant dense<0.000000e+00> : vector<8x32xf32>
    %23 = tpu.matmul %22, %1, %cst_17 {dimension_numbers = #tpu.dot_dimension_numbers<[1], [0], [0], [1], [0, 0, 1, 1], [], []>, precision = #tpu.contract_precision<fp32>} : vector<8x32xf32>, vector<32x32xf32>, vector<8x32xf32> -> vector<8x32xf32>
    %24 = vector.broadcast %8 : vector<1x32xf32> to vector<8x32xf32>
    %25 = arith.addf %23, %24 : vector<8x32xf32>
    %cst_18 = arith.constant 0.000000e+00 : f32
    %26 = vector.broadcast %cst_18 : f32 to vector<8x32xf32>
    %27 = arith.cmpf ogt, %25, %26 : vector<8x32xf32>
    %28 = math.exp %25 : vector<8x32xf32>
    %cst_19 = arith.constant 1.000000e+00 : f32
    %29 = vector.broadcast %cst_19 : f32 to vector<8x32xf32>
    %30 = arith.subf %28, %29 : vector<8x32xf32>
    %31 = arith.select %27, %25, %30 : vector<8x32xi1>, vector<8x32xf32>
    %cst_20 = arith.constant dense<0.000000e+00> : vector<8x2xf32>
    %32 = tpu.matmul %31, %2, %cst_20 {dimension_numbers = #tpu.dot_dimension_numbers<[1], [0], [0], [1], [0, 0, 1, 1], [], []>, precision = #tpu.contract_precision<fp32>} : vector<8x32xf32>, vector<32x2xf32>, vector<8x2xf32> -> vector<8x2xf32>
    %33 = vector.broadcast %9 : vector<1x2xf32> to vector<8x2xf32>
    %34 = arith.addf %32, %33 : vector<8x2xf32>
    %35 = arith.mulf %34, %34 : vector<8x2xf32>
    %cst_21 = arith.constant dense<0.000000e+00> : vector<8xf32>
    %36 = vector.multi_reduction <add>, %35, %cst_21 [1] : vector<8x2xf32> to vector<8xf32>
    %37 = vector.shape_cast %36 : vector<8xf32> to vector<8x1xf32>
    %cst_22 = arith.constant dense<0.000000e+00> : vector<8x16xf32>
    %38 = tpu.matmul %31, %3, %cst_22 {dimension_numbers = #tpu.dot_dimension_numbers<[1], [0], [0], [1], [0, 0, 1, 1], [], []>, precision = #tpu.contract_precision<fp32>} : vector<8x32xf32>, vector<32x16xf32>, vector<8x16xf32> -> vector<8x16xf32>
    %39 = vector.broadcast %10 : vector<1x16xf32> to vector<8x16xf32>
    %40 = arith.addf %38, %39 : vector<8x16xf32>
    %41 = vector.broadcast %37 : vector<8x1xf32> to vector<8x16xf32>
    %42 = vector.broadcast %11 : vector<1x16xf32> to vector<8x16xf32>
    %43 = arith.mulf %41, %42 : vector<8x16xf32>
    %44 = arith.addf %43, %40 : vector<8x16xf32>
    %cst_23 = arith.constant 0.000000e+00 : f32
    %45 = vector.broadcast %cst_23 : f32 to vector<8x16xf32>
    %46 = arith.maximumf %44, %45 : vector<8x16xf32>
    %cst_24 = arith.constant 1.000000e+00 : f32
    %47 = vector.broadcast %cst_24 : f32 to vector<8x16xf32>
    %48 = arith.addf %47, %46 : vector<8x16xf32>
    %49 = math.rsqrt %48 : vector<8x16xf32>
    %50 = arith.mulf %48, %49 : vector<8x16xf32>
    %cst_25 = arith.constant dense<0.000000e+00> : vector<8x1xf32>
    %51 = tpu.matmul %50, %5, %cst_25 {dimension_numbers = #tpu.dot_dimension_numbers<[1], [0], [0], [1], [0, 0, 1, 1], [], []>, precision = #tpu.contract_precision<fp32>} : vector<8x16xf32>, vector<16x1xf32>, vector<8x1xf32> -> vector<8x1xf32>
    %52 = vector.broadcast %12 : vector<1x1xf32> to vector<8x1xf32>
    %53 = arith.addf %51, %52 : vector<8x1xf32>
    %54 = math.tanh %53 : vector<8x1xf32>
    %55 = arith.mulf %54, %54 : vector<8x1xf32>
    %cst_26 = arith.constant 1.000000e+00 : f32
    %56 = vector.broadcast %cst_26 : f32 to vector<8x1xf32>
    %57 = arith.subf %56, %55 : vector<8x1xf32>
    %cst_27 = arith.constant dense<0.000000e+00> : vector<8x3xf32>
    %58 = tpu.matmul %49, %4, %cst_27 {dimension_numbers = #tpu.dot_dimension_numbers<[1], [0], [0], [1], [0, 0, 1, 1], [], []>, precision = #tpu.contract_precision<fp32>} : vector<8x16xf32>, vector<16x3xf32>, vector<8x3xf32> -> vector<8x3xf32>
    %59 = vector.extract_strided_slice %58 {offsets = [0, 0], sizes = [8, 2], strides = [1, 1]} : vector<8x3xf32> to vector<8x2xf32>
    %60 = vector.extract_strided_slice %58 {offsets = [0, 2], sizes = [8, 1], strides = [1, 1]} : vector<8x3xf32> to vector<8x1xf32>
    %61 = vector.broadcast %60 : vector<8x1xf32> to vector<8x2xf32>
    %62 = arith.mulf %61, %34 : vector<8x2xf32>
    %63 = arith.subf %62, %59 : vector<8x2xf32>
    %64 = vector.broadcast %57 : vector<8x1xf32> to vector<8x2xf32>
    %65 = arith.mulf %63, %64 : vector<8x2xf32>
    %66 = arith.addf %65, %34 : vector<8x2xf32>
    %cst_28 = arith.constant dense<0.000000e+00> : vector<8x20xf32>
    %67 = tpu.matmul %66, %6, %cst_28 {dimension_numbers = #tpu.dot_dimension_numbers<[1], [0], [0], [1], [0, 0, 1, 1], [], []>, precision = #tpu.contract_precision<fp32>} : vector<8x2xf32>, vector<2x20xf32>, vector<8x20xf32> -> vector<8x20xf32>
    %c0_29 = arith.constant 0 : index
    %c0_30 = arith.constant 0 : index
    %68 = vector.load %arg3[%c0_29, %c0_30] : memref<8x20xf32, #tpu.memory_space<vmem>>, vector<8x20xf32>
    tpu.vector_store %arg3[%c0_29, %c0_30], %67 {strides = array<i32>} : memref<8x20xf32, #tpu.memory_space<vmem>>, vector<8x20xf32>,
    return
  }
  func.func @transform_0(%arg0: i32) -> (i32, i32) {
    %c0_i32 = arith.constant 0 : i32
    %c0_i32_0 = arith.constant 0 : i32
    return %arg0, %c0_i32 : i32, i32
  }
  func.func @transform_1(%arg0: i32) -> (i32, i32) {
    %c0_i32 = arith.constant 0 : i32
    %c0_i32_0 = arith.constant 0 : i32
    %c0_i32_1 = arith.constant 0 : i32
    return %c0_i32, %c0_i32_0 : i32, i32
  }
  func.func @transform_2(%arg0: i32) -> (i32, i32) {
    %c0_i32 = arith.constant 0 : i32
    %c0_i32_0 = arith.constant 0 : i32
    return %arg0, %c0_i32 : i32, i32
  }
}

</mosaic_0001>

<llo_original>
// kernel: energy_lat_nn_forward.1
$region0: #{energy_lat_nn_forward.1}
  #allocation0 [shape = 'u32[]', space=smem, size = 0x4, offset = 0x4, fixed_abs, tag = 'smem constant byte address 0x4 - core index']
  #allocation1 [shape = 'u32[144,128]{1,0:T(1,128)}', space=vmem, size = 0x12000, scoped, tag = 'internal scratch']
  %s0 = inlined_call_operand.vmem [shape: f32[8,20], index: 0, kind: input, shape index: {}]
  %s1 = inlined_call_operand.vmem [shape: f32[160,32], index: 1, kind: input, shape index: {}]
  %s2 = inlined_call_operand.vmem [shape: f32[8,20], index: 2, kind: output, shape index: {}]
  %s3 = sld [smem:[#allocation0]]
  $region18: #{energy_lat_nn_forward.1} parent=0
    _
  %s5 = ssub.s32 1, %s3
  %s6 = scalar_select 0, %s5, %s3
  // Predicated region
  $region2: #{energy_lat_nn_forward.1} parent=0 // pred_check
    _
  $region3: #{energy_lat_nn_forward.1} parent=0 // pred_check_branch
    %8 = sbr.rel (0) target = $region5
  $region4: #{energy_lat_nn_forward.1} parent=0 // pred_region
    _
  $region5: #{energy_lat_nn_forward.1} parent=0 // pred_fallthru
    _
  // Predicated region
  $region6: #{energy_lat_nn_forward.1} parent=0 // pred_check
    _
  $region7: #{energy_lat_nn_forward.1} parent=0 // pred_check_branch
    %10 = sbr.rel (0) target = $region9
  $region8: #{energy_lat_nn_forward.1} parent=0 // pred_region
    _
  $region9: #{energy_lat_nn_forward.1} parent=0 // pred_fallthru
    _
  %v11 = vld [vmem:[%s1] sm:$0xff]
  %v12 = vld [vmem:[%s1 + $0x8] sm:$0xff]
  %v13 = vld [vmem:[%s1 + $0x10] sm:$0xf]
  %v14 = vld [vmem:[%s1 + $0x18] sm:$0xff]
  %v15 = vld [vmem:[%s1 + $0x20] sm:$0xff]
  %v16 = vld [vmem:[%s1 + $0x28] sm:$0xff]
  %v17 = vld [vmem:[%s1 + $0x30] sm:$0xff]
  %v18 = vld [vmem:[%s1 + $0x38] sm:$0xff]
  %v19 = vld [vmem:[%s1 + $0x40] sm:$0xff]
  %v20 = vld [vmem:[%s1 + $0x48] sm:$0xff]
  %v21 = vld [vmem:[%s1 + $0x50] sm:$0xff]
  %v22 = vld [vmem:[%s1 + $0x58] sm:$0xff]
  %v23 = vld [vmem:[%s1 + $0x60] sm:$0xff]
  %v24 = vld [vmem:[%s1 + $0x68] sm:$0xff]
  %v25 = vld [vmem:[%s1 + $0x70] sm:$0xff]
  %v26 = vld [vmem:[%s1 + $0x78] sm:$0xff]
  %v27 = vld [vmem:[%s1 + $0x80] sm:$0xff]
  %v28 = vld [vmem:[%s1 + $0x88] sm:$0xff]
  %v29 = vld [vmem:[%s1 + $0x90] sm:$0xff]
  %v30 = vld [vmem:[%s1 + $0x98] sm:$0x3]
  %v31 = vld [vmem:[%s1 + $0x9a] sm:$0x1]
  %v32 = vld [vmem:[%s1 + $0x9b] sm:$0x1]
  %v33 = vld [vmem:[%s1 + $0x9c] sm:$0x1]
  %v34 = vld [vmem:[%s1 + $0x9d] sm:$0x1]
  %v35 = vld [vmem:[%s1 + $0x9e] sm:$0x1]
  %v36 = vld [vmem:[%s1 + $0x9f] sm:$0x1]
  %v37 = vld [vmem:[%s0] sm:$0xff]
  %v38 = vlaneseq
  %v39 = vshrl.u32 %v38, 7
  %v40 = vsub.s32 0, %v39
  %v41 = vrot.slane %v31, %v40
  %vm42 = vcmask 162816
  %v44 = vsel %vm42, %v37, 0
  %vm46 = vcmask 1043456
  %v48 = vsel %vm46, %v13, 0
  %50 = vmatprep.subr.mxu0 0.0
  %v51 = vand.u32 %v11, 4294901760
  %52 = vmatpush1.msra.mxu0 %v51
  %53 = vmatprep.subr.mxu0 0.0
  %v54 = vand.u32 %v12, 4294901760
  %55 = vmatpush1.msra.mxu0 %v54
  %56 = vmatprep.subr.mxu0 0.0
  %v57 = vand.u32 %v48, 4294901760
  %58 = vmatpush1.msra.mxu0 %v57
  %59 = vmatprep.subr.mxu0 0.0
  %60 = vmatpush1.msra.mxu0 0.0
  %61 = vmatprep.subr.mxu0 0.0
  %62 = vmatpush1.msra.mxu0 0.0
  %63 = vmatprep.subr.mxu0 0.0
  %64 = vmatpush1.msra.mxu0 0.0
  %65 = vmatprep.subr.mxu0 0.0
  %66 = vmatpush1.msra.mxu0 0.0
  %67 = vmatprep.subr.mxu0 0.0
  %68 = vmatpush1.msra.mxu0 0.0
  %69 = vmatprep.subr.mxu0 0.0
  %70 = vmatpush1.msra.mxu0 0.0
  %71 = vmatprep.subr.mxu0 0.0
  %72 = vmatpush1.msra.mxu0 0.0
  %73 = vmatprep.subr.mxu0 0.0
  %74 = vmatpush1.msra.mxu0 0.0
  %75 = vmatprep.subr.mxu0 0.0
  %76 = vmatpush1.msra.mxu0 0.0
  %77 = vmatprep.subr.mxu0 0.0
  %78 = vmatpush1.msra.mxu0 0.0
  %79 = vmatprep.subr.mxu0 0.0
  %80 = vmatpush1.msra.mxu0 0.0
  %81 = vmatprep.subr.mxu0 0.0
  %82 = vmatpush1.msra.mxu0 0.0
  %83 = vmatprep.subr.mxu0 0.0
  %84 = vmatpush1.msra.mxu0 0.0
  %85 = vmatprep.subr.mxu0 0.0
  %86 = vmatpush1.msra.mxu0 0.0
  %87 = vmatprep.subr.mxu0 0.0
  %88 = vmatpush1.msra.mxu0 0.0
  %89 = vmatprep.subr.mxu0 0.0
  %90 = vmatpush1.msra.mxu0 0.0
  %91 = vmatprep.subr.mxu0 0.0
  %92 = vmatpush1.msra.mxu0 0.0
  %93 = vmatprep.subr.mxu0 0.0
  %94 = vmatpush1.msra.mxu0 0.0
  %95 = vmatprep.subr.mxu0 0.0
  %96 = vmatpush1.msra.mxu0 0.0
  %97 = vmatprep.subr.mxu0 0.0
  %98 = vmatpush1.msra.mxu0 0.0
  %99 = vmatprep.subr.mxu0 0.0
  %100 = vmatpush1.msra.mxu0 0.0
  %101 = vmatprep.subr.mxu0 0.0
  %102 = vmatpush1.msra.mxu0 0.0
  %103 = vmatprep.subr.mxu0 0.0
  %104 = vmatpush1.msra.mxu0 0.0
  %105 = vmatprep.subr.mxu0 0.0
  %106 = vmatpush1.msra.mxu0 0.0
  %107 = vmatprep.subr.mxu0 0.0
  %108 = vmatpush1.msra.mxu0 0.0
  %109 = vmatprep.subr.mxu0 0.0
  %110 = vmatpush1.msra.mxu0 0.0
  %111 = vmatprep.subr.mxu0 0.0
  %112 = vmatpush1.msra.mxu0 0.0
  %113 = vmatprep.subr.mxu0 0.0
  %114 = vmatpush1.msra.mxu0 0.0
  %115 = vmatprep.subr.mxu0 0.0
  %116 = vmatpush1.msra.mxu0 0.0
  %117 = vmatprep.mubr.f32.mxu0 0.0
  %v118 = vand.u32 %v44, 4294901760
  %v119 = vsub.f32 %v44, %v118
  %v120 = vand.u32 %v119, 4294901760
  %v121 = vsub.f32 %v119, %v120
  %v122 = vand.u32 %v121, 4294901760
  %123 = vmatmul.mubr.f32.gmra.mrb[0].mxu0 %v122
  %v124 = vpop.f32.mrb[0].mxu0
  %v125 = vadd.f32 %v41, %v124
  %v126 = vpop.f32.mrb[0].mxu0
  %127 = vdwg.mxu0
  %128 = vmatprep.subr.mxu0 0.0
  %v129 = vand.u32 %v11, 4294901760
  %v130 = vsub.f32 %v11, %v129
  %v131 = vand.u32 %v130, 4294901760
  %v132 = vsub.f32 %v130, %v131
  %v133 = vand.u32 %v132, 4294901760
  %134 = vmatpush1.msra.mxu0 %v133
  %135 = vmatprep.subr.mxu0 0.0
  %v136 = vand.u32 %v12, 4294901760
  %v137 = vsub.f32 %v12, %v136
  %v138 = vand.u32 %v137, 4294901760
  %v139 = vsub.f32 %v137, %v138
  %v140 = vand.u32 %v139, 4294901760
  %141 = vmatpush1.msra.mxu0 %v140
  %142 = vmatprep.subr.mxu0 0.0
  %v143 = vand.u32 %v48, 4294901760
  %v144 = vsub.f32 %v48, %v143
  %v145 = vand.u32 %v144, 4294901760
  %v146 = vsub.f32 %v144, %v145
  %v147 = vand.u32 %v146, 4294901760
  %148 = vmatpush1.msra.mxu0 %v147
  %149 = vmatprep.subr.mxu0 0.0
  %150 = vmatpush1.msra.mxu0 0.0
  %151 = vmatprep.subr.mxu0 0.0
  %152 = vmatpush1.msra.mxu0 0.0
  %153 = vmatprep.subr.mxu0 0.0
  %154 = vmatpush1.msra.mxu0 0.0
  %155 = vmatprep.subr.mxu0 0.0
  %156 = vmatpush1.msra.mxu0 0.0
  %157 = vmatprep.subr.mxu0 0.0
  %158 = vmatpush1.msra.mxu0 0.0
  %159 = vmatprep.subr.mxu0 0.0
  %160 = vmatpush1.msra.mxu0 0.0
  %161 = vmatprep.subr.mxu0 0.0
  %162 = vmatpush1.msra.mxu0 0.0
  %163 = vmatprep.subr.mxu0 0.0
  %164 = vmatpush1.msra.mxu0 0.0
  %165 = vmatprep.subr.mxu0 0.0
  %166 = vmatpush1.msra.mxu0 0.0
  %167 = vmatprep.subr.mxu0 0.0
  %168 = vmatpush1.msra.mxu0 0.0
  %169 = vmatprep.subr.mxu0 0.0
  %170 = vmatpush1.msra.mxu0 0.0
  %171 = vmatprep.subr.mxu0 0.0
  %172 = vmatpush1.msra.mxu0 0.0
  %173 = vmatprep.subr.mxu0 0.0
  %174 = vmatpush1.msra.mxu0 0.0
  %175 = vmatprep.subr.mxu0 0.0
  %176 = vmatpush1.msra.mxu0 0.0
  %177 = vmatprep.subr.mxu0 0.0
  %178 = vmatpush1.msra.mxu0 0.0
  %179 = vmatprep.subr.mxu0 0.0
  %180 = vmatpush1.msra.mxu0 0.0
  %181 = vmatprep.subr.mxu0 0.0
  %182 = vmatpush1.msra.mxu0 0.0
  %183 = vmatprep.subr.mxu0 0.0
  %184 = vmatpush1.msra.mxu0 0.0
  %185 = vmatprep.subr.mxu0 0.0
  %186 = vmatpush1.msra.mxu0 0.0
  %187 = vmatprep.subr.mxu0 0.0
  %188 = vmatpush1.msra.mxu0 0.0
  %189 = vmatprep.subr.mxu0 0.0
  %190 = vmatpush1.msra.mxu0 0.0
  %191 = vmatprep.subr.mxu0 0.0
  %192 = vmatpush1.msra.mxu0 0.0
  %193 = vmatprep.subr.mxu0 0.0
  %194 = vmatpush1.msra.mxu0 0.0
  %195 = vmatprep.subr.mxu0 0.0
  %196 = vmatpush1.msra.mxu0 0.0
  %197 = vmatprep.subr.mxu0 0.0
  %198 = vmatpush1.msra.mxu0 0.0
  %199 = vmatprep.subr.mxu0 0.0
  %200 = vmatpush1.msra.mxu0 0.0
  %201 = vmatprep.subr.mxu0 0.0
  %202 = vmatpush1.msra.mxu0 0.0
  %203 = vmatprep.subr.mxu0 0.0
  %204 = vmatpush1.msra.mxu0 0.0
  %205 = vmatprep.subr.mxu0 0.0
  %206 = vmatpush1.msra.mxu0 0.0
  %207 = vmatprep.mubr.f32.mxu0 0.0
  %v208 = vand.u32 %v44, 4294901760
  %209 = vmatmul.mubr.f32.gmra.mrb[0].mxu0 %v208
  %v210 = vpop.f32.mrb[0].mxu0
  %v211 = vadd.f32 %v125, %v210
  %v212 = vpop.f32.mrb[0].mxu0
  %213 = vdwg.mxu0
  %214 = vmatprep.subr.mxu0 0.0
  %v215 = vand.u32 %v11, 4294901760
  %v216 = vsub.f32 %v11, %v215
  %217 = vmatpush1.msra.mxu0 %v216
  %218 = vmatprep.subr.mxu0 0.0
  %v219 = vand.u32 %v12, 4294901760
  %v220 = vsub.f32 %v12, %v219
  %221 = vmatpush1.msra.mxu0 %v220
  %222 = vmatprep.subr.mxu0 0.0
  %v223 = vand.u32 %v48, 4294901760
  %v224 = vsub.f32 %v48, %v223
  %225 = vmatpush1.msra.mxu0 %v224
  %226 = vmatprep.subr.mxu0 0.0
  %227 = vmatpush1.msra.mxu0 0.0
  %228 = vmatprep.subr.mxu0 0.0
  %229 = vmatpush1.msra.mxu0 0.0
  %230 = vmatprep.subr.mxu0 0.0
  %231 = vmatpush1.msra.mxu0 0.0
  %232 = vmatprep.subr.mxu0 0.0
  %233 = vmatpush1.msra.mxu0 0.0
  %234 = vmatprep.subr.mxu0 0.0
  %235 = vmatpush1.msra.mxu0 0.0
  %236 = vmatprep.subr.mxu0 0.0
  %237 = vmatpush1.msra.mxu0 0.0
  %238 = vmatprep.subr.mxu0 0.0
  %239 = vmatpush1.msra.mxu0 0.0
  %240 = vmatprep.subr.mxu0 0.0
  %241 = vmatpush1.msra.mxu0 0.0
  %242 = vmatprep.subr.mxu0 0.0
  %243 = vmatpush1.msra.mxu0 0.0
  %244 = vmatprep.subr.mxu0 0.0
  %245 = vmatpush1.msra.mxu0 0.0
  %246 = vmatprep.subr.mxu0 0.0
  %247 = vmatpush1.msra.mxu0 0.0
  %248 = vmatprep.subr.mxu0 0.0
  %249 = vmatpush1.msra.mxu0 0.0
  %250 = vmatprep.subr.mxu0 0.0
  %251 = vmatpush1.msra.mxu0 0.0
  %252 = vmatprep.subr.mxu0 0.0
  %253 = vmatpush1.msra.mxu0 0.0
  %254 = vmatprep.subr.mxu0 0.0
  %255 = vmatpush1.msra.mxu0 0.0
  %256 = vmatprep.subr.mxu0 0.0
  %257 = vmatpush1.msra.mxu0 0.0
  %258 = vmatprep.subr.mxu0 0.0
  %259 = vmatpush1.msra.mxu0 0.0
  %260 = vmatprep.subr.mxu0 0.0
  %261 = vmatpush1.msra.mxu0 0.0
  %262 = vmatprep.subr.mxu0 0.0
  %263 = vmatpush1.msra.mxu0 0.0
  %264 = vmatprep.subr.mxu0 0.0
  %265 = vmatpush1.msra.mxu0 0.0
  %266 = vmatprep.subr.mxu0 0.0
  %267 = vmatpush1.msra.mxu0 0.0
  %268 = vmatprep.subr.mxu0 0.0
  %269 = vmatpush1.msra.mxu0 0.0
  %270 = vmatprep.subr.mxu0 0.0
  %271 = vmatpush1.msra.mxu0 0.0
  %272 = vmatprep.subr.mxu0 0.0
  %273 = vmatpush1.msra.mxu0 0.0
  %274 = vmatprep.subr.mxu0 0.0
  %275 = vmatpush1.msra.mxu0 0.0
  %276 = vmatprep.subr.mxu0 0.0
  %277 = vmatpush1.msra.mxu0 0.0
  %278 = vmatprep.subr.mxu0 0.0
  %279 = vmatpush1.msra.mxu0 0.0
  %280 = vmatprep.subr.mxu0 0.0
  %281 = vmatpush1.msra.mxu0 0.0
  %282 = vmatprep.subr.mxu0 0.0
  %283 = vmatpush1.msra.mxu0 0.0
  %284 = vmatprep.mubr.f32.mxu0 0.0
  %v285 = vand.u32 %v44, 4294901760
  %v286 = vsub.f32 %v44, %v285
  %287 = vmatmul.mubr.f32.gmra.mrb[0].mxu0 %v286
  %v288 = vpop.f32.mrb[0].mxu0
  %v289 = vadd.f32 %v211, %v288
  %v290 = vpop.f32.mrb[0].mxu0
  %291 = vdwg.mxu0
  %292 = vmatprep.subr.mxu0 0.0
  %v293 = vand.u32 %v11, 4294901760
  %294 = vmatpush1.msra.mxu0 %v293
  %295 = vmatprep.subr.mxu0 0.0
  %v296 = vand.u32 %v12, 4294901760
  %297 = vmatpush1.msra.mxu0 %v296
  %298 = vmatprep.subr.mxu0 0.0
  %v299 = vand.u32 %v48, 4294901760
  %300 = vmatpush1.msra.mxu0 %v299
  %301 = vmatprep.subr.mxu0 0.0
  %302 = vmatpush1.msra.mxu0 0.0
  %303 = vmatprep.subr.mxu0 0.0
  %304 = vmatpush1.msra.mxu0 0.0
  %305 = vmatprep.subr.mxu0 0.0
  %306 = vmatpush1.msra.mxu0 0.0
  %307 = vmatprep.subr.mxu0 0.0
  %308 = vmatpush1.msra.mxu0 0.0
  %309 = vmatprep.subr.mxu0 0.0
  %310 = vmatpush1.msra.mxu0 0.0
  %311 = vmatprep.subr.mxu0 0.0
  %312 = vmatpush1.msra.mxu0 0.0
  %313 = vmatprep.subr.mxu0 0.0
  %314 = vmatpush1.msra.mxu0 0.0
  %315 = vmatprep.subr.mxu0 0.0
  %316 = vmatpush1.msra.mxu0 0.0
  %317 = vmatprep.subr.mxu0 0.0
  %318 = vmatpush1.msra.mxu0 0.0
  %319 = vmatprep.subr.mxu0 0.0
  %320 = vmatpush1.msra.mxu0 0.0
  %321 = vmatprep.subr.mxu0 0.0
  %322 = vmatpush1.msra.mxu0 0.0
  %323 = vmatprep.subr.mxu0 0.0
  %324 = vmatpush1.msra.mxu0 0.0
  %325 = vmatprep.subr.mxu0 0.0
  %326 = vmatpush1.msra.mxu0 0.0
  %327 = vmatprep.subr.mxu0 0.0
  %328 = vmatpush1.msra.mxu0 0.0
  %329 = vmatprep.subr.mxu0 0.0
  %330 = vmatpush1.msra.mxu0 0.0
  %331 = vmatprep.subr.mxu0 0.0
  %332 = vmatpush1.msra.mxu0 0.0
  %333 = vmatprep.subr.mxu0 0.0
  %334 = vmatpush1.msra.mxu0 0.0
  %335 = vmatprep.subr.mxu0 0.0
  %336 = vmatpush1.msra.mxu0 0.0
  %337 = vmatprep.subr.mxu0 0.0
  %338 = vmatpush1.msra.mxu0 0.0
  %339 = vmatprep.subr.mxu0 0.0
  %340 = vmatpush1.msra.mxu0 0.0
  %341 = vmatprep.subr.mxu0 0.0
  %342 = vmatpush1.msra.mxu0 0.0
  %343 = vmatprep.subr.mxu0 0.0
  %344 = vmatpush1.msra.mxu0 0.0
  %345 = vmatprep.subr.mxu0 0.0
  %346 = vmatpush1.msra.mxu0 0.0
  %347 = vmatprep.subr.mxu0 0.0
  %348 = vmatpush1.msra.mxu0 0.0
  %349 = vmatprep.subr.mxu0 0.0
  %350 = vmatpush1.msra.mxu0 0.0
  %351 = vmatprep.subr.mxu0 0.0
  %352 = vmatpush1.msra.mxu0 0.0
  %353 = vmatprep.subr.mxu0 0.0
  %354 = vmatpush1.msra.mxu0 0.0
  %355 = vmatprep.subr.mxu0 0.0
  %356 = vmatpush1.msra.mxu0 0.0
  %357 = vmatprep.subr.mxu0 0.0
  %358 = vmatpush1.msra.mxu0 0.0
  %359 = vmatprep.mubr.f32.mxu0 0.0
  %v360 = vand.u32 %v44, 4294901760
  %v361 = vsub.f32 %v44, %v360
  %v362 = vand.u32 %v361, 4294901760
  %363 = vmatmul.mubr.f32.gmra.mrb[0].mxu0 %v362
  %v364 = vpop.f32.mrb[0].mxu0
  %v365 = vadd.f32 %v289, %v364
  %v366 = vpop.f32.mrb[0].mxu0
  %367 = vdwg.mxu0
  %368 = vmatprep.subr.mxu0 0.0
  %v369 = vand.u32 %v11, 4294901760
  %v370 = vsub.f32 %v11, %v369
  %v371 = vand.u32 %v370, 4294901760
  %372 = vmatpush1.msra.mxu0 %v371
  %373 = vmatprep.subr.mxu0 0.0
  %v374 = vand.u32 %v12, 4294901760
  %v375 = vsub.f32 %v12, %v374
  %v376 = vand.u32 %v375, 4294901760
  %377 = vmatpush1.msra.mxu0 %v376
  %378 = vmatprep.subr.mxu0 0.0
  %v379 = vand.u32 %v48, 4294901760
  %v380 = vsub.f32 %v48, %v379
  %v381 = vand.u32 %v380, 4294901760
  %382 = vmatpush1.msra.mxu0 %v381
  %383 = vmatprep.subr.mxu0 0.0
  %384 = vmatpush1.msra.mxu0 0.0
  %385 = vmatprep.subr.mxu0 0.0
  %386 = vmatpush1.msra.mxu0 0.0
  %387 = vmatprep.subr.mxu0 0.0
  %388 = vmatpush1.msra.mxu0 0.0
  %389 = vmatprep.subr.mxu0 0.0
  %390 = vmatpush1.msra.mxu0 0.0
  %391 = vmatprep.subr.mxu0 0.0
  %392 = vmatpush1.msra.mxu0 0.0
  %393 = vmatprep.subr.mxu0 0.0
  %394 = vmatpush1.msra.mxu0 0.0
  %395 = vmatprep.subr.mxu0 0.0
  %396 = vmatpush1.msra.mxu0 0.0
  %397 = vmatprep.subr.mxu0 0.0
  %398 = vmatpush1.msra.mxu0 0.0
  %399 = vmatprep.subr.mxu0 0.0
  %400 = vmatpush1.msra.mxu0 0.0
  %401 = vmatprep.subr.mxu0 0.0
  %402 = vmatpush1.msra.mxu0 0.0
  %403 = vmatprep.subr.mxu0 0.0
  %404 = vmatpush1.msra.mxu0 0.0
  %405 = vmatprep.subr.mxu0 0.0
  %406 = vmatpush1.msra.mxu0 0.0
  %407 = vmatprep.subr.mxu0 0.0
  %408 = vmatpush1.msra.mxu0 0.0
  %409 = vmatprep.subr.mxu0 0.0
  %410 = vmatpush1.msra.mxu0 0.0
  %411 = vmatprep.subr.mxu0 0.0
  %412 = vmatpush1.msra.mxu0 0.0
  %413 = vmatprep.subr.mxu0 0.0
  %414 = vmatpush1.msra.mxu0 0.0
  %415 = vmatprep.subr.mxu0 0.0
  %416 = vmatpush1.msra.mxu0 0.0
  %417 = vmatprep.subr.mxu0 0.0
  %418 = vmatpush1.msra.mxu0 0.0
  %419 = vmatprep.subr.mxu0 0.0
  %420 = vmatpush1.msra.mxu0 0.0
  %421 = vmatprep.subr.mxu0 0.0
  %422 = vmatpush1.msra.mxu0 0.0
  %423 = vmatprep.subr.mxu0 0.0
  %424 = vmatpush1.msra.mxu0 0.0
  %425 = vmatprep.subr.mxu0 0.0
  %426 = vmatpush1.msra.mxu0 0.0
  %427 = vmatprep.subr.mxu0 0.0
  %428 = vmatpush1.msra.mxu0 0.0
  %429 = vmatprep.subr.mxu0 0.0
  %430 = vmatpush1.msra.mxu0 0.0
  %431 = vmatprep.subr.mxu0 0.0
  %432 = vmatpush1.msra.mxu0 0.0
  %433 = vmatprep.subr.mxu0 0.0
  %434 = vmatpush1.msra.mxu0 0.0
  %435 = vmatprep.subr.mxu0 0.0
  %436 = vmatpush1.msra.mxu0 0.0
  %437 = vmatprep.subr.mxu0 0.0
  %438 = vmatpush1.msra.mxu0 0.0
  %439 = vmatprep.subr.mxu0 0.0
  %440 = vmatpush1.msra.mxu0 0.0
  %441 = vmatprep.mubr.f32.mxu0 0.0
  %v442 = vand.u32 %v44, 4294901760
  %443 = vmatmul.mubr.f32.gmra.mrb[0].mxu0 %v442
  %v444 = vpop.f32.mrb[0].mxu0
  %v445 = vadd.f32 %v365, %v444
  %v446 = vpop.f32.mrb[0].mxu0
  %447 = vdwg.mxu0
  %448 = vmatprep.subr.mxu0 0.0
  %v449 = vand.u32 %v11, 4294901760
  %450 = vmatpush1.msra.mxu0 %v449
  %451 = vmatprep.subr.mxu0 0.0
  %v452 = vand.u32 %v12, 4294901760
  %453 = vmatpush1.msra.mxu0 %v452
  %454 = vmatprep.subr.mxu0 0.0
  %v455 = vand.u32 %v48, 4294901760
  %456 = vmatpush1.msra.mxu0 %v455
  %457 = vmatprep.subr.mxu0 0.0
  %458 = vmatpush1.msra.mxu0 0.0
  %459 = vmatprep.subr.mxu0 0.0
  %460 = vmatpush1.msra.mxu0 0.0
  %461 = vmatprep.subr.mxu0 0.0
  %462 = vmatpush1.msra.mxu0 0.0
  %463 = vmatprep.subr.mxu0 0.0
  %464 = vmatpush1.msra.mxu0 0.0
  %465 = vmatprep.subr.mxu0 0.0
  %466 = vmatpush1.msra.mxu0 0.0
  %467 = vmatprep.subr.mxu0 0.0
  %468 = vmatpush1.msra.mxu0 0.0
  %469 = vmatprep.subr.mxu0 0.0
  %470 = vmatpush1.msra.mxu0 0.0
  %471 = vmatprep.subr.mxu0 0.0
  %472 = vmatpush1.msra.mxu0 0.0
  %473 = vmatprep.subr.mxu0 0.0
  %474 = vmatpush1.msra.mxu0 0.0
  %475 = vmatprep.subr.mxu0 0.0
  %476 = vmatpush1.msra.mxu0 0.0
  %477 = vmatprep.subr.mxu0 0.0
  %478 = vmatpush1.msra.mxu0 0.0
  %479 = vmatprep.subr.mxu0 0.0
  %480 = vmatpush1.msra.mxu0 0.0
  %481 = vmatprep.subr.mxu0 0.0
  %482 = vmatpush1.msra.mxu0 0.0
  %483 = vmatprep.subr.mxu0 0.0
  %484 = vmatpush1.msra.mxu0 0.0
  %485 = vmatprep.subr.mxu0 0.0
  %486 = vmatpush1.msra.mxu0 0.0
  %487 = vmatprep.subr.mxu0 0.0
  %488 = vmatpush1.msra.mxu0 0.0
  %489 = vmatprep.subr.mxu0 0.0
  %490 = vmatpush1.msra.mxu0 0.0
  %491 = vmatprep.subr.mxu0 0.0
  %492 = vmatpush1.msra.mxu0 0.0
  %493 = vmatprep.subr.mxu0 0.0
  %494 = vmatpush1.msra.mxu0 0.0
  %495 = vmatprep.subr.mxu0 0.0
  %496 = vmatpush1.msra.mxu0 0.0
  %497 = vmatprep.subr.mxu0 0.0
  %498 = vmatpush1.msra.mxu0 0.0
  %499 = vmatprep.subr.mxu0 0.0
  %500 = vmatpush1.msra.mxu0 0.0
  %501 = vmatprep.subr.mxu0 0.0
  %502 = vmatpush1.msra.mxu0 0.0
  %503 = vmatprep.subr.mxu0 0.0
  %504 = vmatpush1.msra.mxu0 0.0
  %505 = vmatprep.subr.mxu0 0.0
  %506 = vmatpush1.msra.mxu0 0.0
  %507 = vmatprep.subr.mxu0 0.0
  %508 = vmatpush1.msra.mxu0 0.0
  %509 = vmatprep.subr.mxu0 0.0
  %510 = vmatpush1.msra.mxu0 0.0
  %511 = vmatprep.subr.mxu0 0.0
  %512 = vmatpush1.msra.mxu0 0.0
  %513 = vmatprep.subr.mxu0 0.0
  %514 = vmatpush1.msra.mxu0 0.0
  %515 = vmatprep.mubr.f32.mxu0 0.0
  %v516 = vand.u32 %v44, 4294901760
  %517 = vmatmul.mubr.f32.gmra.mrb[0].mxu0 %v516
  %v518 = vpop.f32.mrb[0].mxu0
  %v519 = vadd.f32 %v445, %v518
  %v520 = vpop.f32.mrb[0].mxu0
  %521 = vdwg.mxu0
  %vm522 = vcmp.gt.f32.partialorder %v519, 0.0
  %v523 = vmul.f32 %v519, 1.442695
  %v524 = vpow.pop %v523
  %v525 = vsub.f32 %v524, 1.0
  %v526 = vsel %vm522, %v519, %v525
  %v527 = vlaneseq
  %v528 = vshrl.u32 %v527, 7
  %v529 = vsub.s32 0, %v528
  %v530 = vrot.slane %v32, %v529
  %vm531 = vcmask 261120
  %v533 = vsel %vm531, %v526, 0
  %535 = vmatprep.subr.mxu0 0.0
  %v536 = vand.u32 %v14, 4294901760
  %537 = vmatpush1.msra.mxu0 %v536
  %538 = vmatprep.subr.mxu0 0.0
  %v539 = vand.u32 %v15, 4294901760
  %540 = vmatpush1.msra.mxu0 %v539
  %541 = vmatprep.subr.mxu0 0.0
  %v542 = vand.u32 %v16, 4294901760
  %543 = vmatpush1.msra.mxu0 %v542
  %544 = vmatprep.subr.mxu0 0.0
  %v545 = vand.u32 %v17, 4294901760
  %546 = vmatpush1.msra.mxu0 %v545
  %547 = vmatprep.subr.mxu0 0.0
  %548 = vmatpush1.msra.mxu0 0.0
  %549 = vmatprep.subr.mxu0 0.0
  %550 = vmatpush1.msra.mxu0 0.0
  %551 = vmatprep.subr.mxu0 0.0
  %552 = vmatpush1.msra.mxu0 0.0
  %553 = vmatprep.subr.mxu0 0.0
  %554 = vmatpush1.msra.mxu0 0.0
  %555 = vmatprep.subr.mxu0 0.0
  %556 = vmatpush1.msra.mxu0 0.0
  %557 = vmatprep.subr.mxu0 0.0
  %558 = vmatpush1.msra.mxu0 0.0
  %559 = vmatprep.subr.mxu0 0.0
  %560 = vmatpush1.msra.mxu0 0.0
  %561 = vmatprep.subr.mxu0 0.0
  %562 = vmatpush1.msra.mxu0 0.0
  %563 = vmatprep.subr.mxu0 0.0
  %564 = vmatpush1.msra.mxu0 0.0
  %565 = vmatprep.subr.mxu0 0.0
  %566 = vmatpush1.msra.mxu0 0.0
  %567 = vmatprep.subr.mxu0 0.0
  %568 = vmatpush1.msra.mxu0 0.0
  %569 = vmatprep.subr.mxu0 0.0
  %570 = vmatpush1.msra.mxu0 0.0
  %571 = vmatprep.subr.mxu0 0.0
  %572 = vmatpush1.msra.mxu0 0.0
  %573 = vmatprep.subr.mxu0 0.0
  %574 = vmatpush1.msra.mxu0 0.0
  %575 = vmatprep.subr.mxu0 0.0
  %576 = vmatpush1.msra.mxu0 0.0
  %577 = vmatprep.subr.mxu0 0.0
  %578 = vmatpush1.msra.mxu0 0.0
  %579 = vmatprep.subr.mxu0 0.0
  %580 = vmatpush1.msra.mxu0 0.0
  %581 = vmatprep.subr.mxu0 0.0
  %582 = vmatpush1.msra.mxu0 0.0
  %583 = vmatprep.subr.mxu0 0.0
  %584 = vmatpush1.msra.mxu0 0.0
  %585 = vmatprep.subr.mxu0 0.0
  %586 = vmatpush1.msra.mxu0 0.0
  %587 = vmatprep.subr.mxu0 0.0
  %588 = vmatpush1.msra.mxu0 0.0
  %589 = vmatprep.subr.mxu0 0.0
  %590 = vmatpush1.msra.mxu0 0.0
  %591 = vmatprep.subr.mxu0 0.0
  %592 = vmatpush1.msra.mxu0 0.0
  %593 = vmatprep.subr.mxu0 0.0
  %594 = vmatpush1.msra.mxu0 0.0
  %595 = vmatprep.subr.mxu0 0.0
  %596 = vmatpush1.msra.mxu0 0.0
  %597 = vmatprep.subr.mxu0 0.0
  %598 = vmatpush1.msra.mxu0 0.0
  %599 = vmatprep.subr.mxu0 0.0
  %600 = vmatpush1.msra.mxu0 0.0
  %601 = vmatprep.subr.mxu0 0.0
  %602 = vmatpush1.msra.mxu0 0.0
  %603 = vmatprep.mubr.f32.mxu0 0.0
  %v604 = vand.u32 %v533, 4294901760
  %v605 = vsub.f32 %v533, %v604
  %v606 = vand.u32 %v605, 4294901760
  %v607 = vsub.f32 %v605, %v606
  %v608 = vand.u32 %v607, 4294901760
  %609 = vmatmul.mubr.f32.gmra.mrb[0].mxu0 %v608
  %v610 = vpop.f32.mrb[0].mxu0
  %v611 = vadd.f32 %v530, %v610
  %v612 = vpop.f32.mrb[0].mxu0
  %613 = vdwg.mxu0
  %614 = vmatprep.subr.mxu0 0.0
  %v615 = vand.u32 %v14, 4294901760
  %v616 = vsub.f32 %v14, %v615
  %v617 = vand.u32 %v616, 4294901760
  %v618 = vsub.f32 %v616, %v617
  %v619 = vand.u32 %v618, 4294901760
  %620 = vmatpush1.msra.mxu0 %v619
  %621 = vmatprep.subr.mxu0 0.0
  %v622 = vand.u32 %v15, 4294901760
  %v623 = vsub.f32 %v15, %v622
  %v624 = vand.u32 %v623, 4294901760
  %v625 = vsub.f32 %v623, %v624
  %v626 = vand.u32 %v625, 4294901760
  %627 = vmatpush1.msra.mxu0 %v626
  %628 = vmatprep.subr.mxu0 0.0
  %v629 = vand.u32 %v16, 4294901760
  %v630 = vsub.f32 %v16, %v629
  %v631 = vand.u32 %v630, 4294901760
  %v632 = vsub.f32 %v630, %v631
  %v633 = vand.u32 %v632, 4294901760
  %634 = vmatpush1.msra.mxu0 %v633
  %635 = vmatprep.subr.mxu0 0.0
  %v636 = vand.u32 %v17, 4294901760
  %v637 = vsub.f32 %v17, %v636
  %v638 = vand.u32 %v637, 4294901760
  %v639 = vsub.f32 %v637, %v638
  %v640 = vand.u32 %v639, 4294901760
  %641 = vmatpush1.msra.mxu0 %v640
  %642 = vmatprep.subr.mxu0 0.0
  %643 = vmatpush1.msra.mxu0 0.0
  %644 = vmatprep.subr.mxu0 0.0
  %645 = vmatpush1.msra.mxu0 0.0
  %646 = vmatprep.subr.mxu0 0.0
  %647 = vmatpush1.msra.mxu0 0.0
  %648 = vmatprep.subr.mxu0 0.0
  %649 = vmatpush1.msra.mxu0 0.0
  %650 = vmatprep.subr.mxu0 0.0
  %651 = vmatpush1.msra.mxu0 0.0
  %652 = vmatprep.subr.mxu0 0.0
  %653 = vmatpush1.msra.mxu0 0.0
  %654 = vmatprep.subr.mxu0 0.0
  %655 = vmatpush1.msra.mxu0 0.0
  %656 = vmatprep.subr.mxu0 0.0
  %657 = vmatpush1.msra.mxu0 0.0
  %658 = vmatprep.subr.mxu0 0.0
  %659 = vmatpush1.msra.mxu0 0.0
  %660 = vmatprep.subr.mxu0 0.0
  %661 = vmatpush1.msra.mxu0 0.0
  %662 = vmatprep.subr.mxu0 0.0
  %663 = vmatpush1.msra.mxu0 0.0
  %664 = vmatprep.subr.mxu0 0.0
  %665 = vmatpush1.msra.mxu0 0.0
  %666 = vmatprep.subr.mxu0 0.0
  %667 = vmatpush1.msra.mxu0 0.0
  %668 = vmatprep.subr.mxu0 0.0
  %669 = vmatpush1.msra.mxu0 0.0
  %670 = vmatprep.subr.mxu0 0.0
  %671 = vmatpush1.msra.mxu0 0.0
  %672 = vmatprep.subr.mxu0 0.0
  %673 = vmatpush1.msra.mxu0 0.0
  %674 = vmatprep.subr.mxu0 0.0
  %675 = vmatpush1.msra.mxu0 0.0
  %676 = vmatprep.subr.mxu0 0.0
  %677 = vmatpush1.msra.mxu0 0.0
  %678 = vmatprep.subr.mxu0 0.0
  %679 = vmatpush1.msra.mxu0 0.0
  %680 = vmatprep.subr.mxu0 0.0
  %681 = vmatpush1.msra.mxu0 0.0
  %682 = vmatprep.subr.mxu0 0.0
  %683 = vmatpush1.msra.mxu0 0.0
  %684 = vmatprep.subr.mxu0 0.0
  %685 = vmatpush1.msra.mxu0 0.0
  %686 = vmatprep.subr.mxu0 0.0
  %687 = vmatpush1.msra.mxu0 0.0
  %688 = vmatprep.subr.mxu0 0.0
  %689 = vmatpush1.msra.mxu0 0.0
  %690 = vmatprep.subr.mxu0 0.0
  %691 = vmatpush1.msra.mxu0 0.0
  %692 = vmatprep.subr.mxu0 0.0
  %693 = vmatpush1.msra.mxu0 0.0
  %694 = vmatprep.subr.mxu0 0.0
  %695 = vmatpush1.msra.mxu0 0.0
  %696 = vmatprep.subr.mxu0 0.0
  %697 = vmatpush1.msra.mxu0 0.0
  %698 = vmatprep.mubr.f32.mxu0 0.0
  %v699 = vand.u32 %v533, 4294901760
  %700 = vmatmul.mubr.f32.gmra.mrb[0].mxu0 %v699
  %v701 = vpop.f32.mrb[0].mxu0
  %v702 = vadd.f32 %v611, %v701
  %v703 = vpop.f32.mrb[0].mxu0
  %704 = vdwg.mxu0
  %705 = vmatprep.subr.mxu0 0.0
  %v706 = vand.u32 %v14, 4294901760
  %v707 = vsub.f32 %v14, %v706
  %708 = vmatpush1.msra.mxu0 %v707
  %709 = vmatprep.subr.mxu0 0.0
  %v710 = vand.u32 %v15, 4294901760
  %v711 = vsub.f32 %v15, %v710
  %712 = vmatpush1.msra.mxu0 %v711
  %713 = vmatprep.subr.mxu0 0.0
  %v714 = vand.u32 %v16, 4294901760
  %v715 = vsub.f32 %v16, %v714
  %716 = vmatpush1.msra.mxu0 %v715
  %717 = vmatprep.subr.mxu0 0.0
  %v718 = vand.u32 %v17, 4294901760
  %v719 = vsub.f32 %v17, %v718
  %720 = vmatpush1.msra.mxu0 %v719
  %721 = vmatprep.subr.mxu0 0.0
  %722 = vmatpush1.msra.mxu0 0.0
  %723 = vmatprep.subr.mxu0 0.0
  %724 = vmatpush1.msra.mxu0 0.0
  %725 = vmatprep.subr.mxu0 0.0
  %726 = vmatpush1.msra.mxu0 0.0
  %727 = vmatprep.subr.mxu0 0.0
  %728 = vmatpush1.msra.mxu0 0.0
  %729 = vmatprep.subr.mxu0 0.0
  %730 = vmatpush1.msra.mxu0 0.0
  %731 = vmatprep.subr.mxu0 0.0
  %732 = vmatpush1.msra.mxu0 0.0
  %733 = vmatprep.subr.mxu0 0.0
  %734 = vmatpush1.msra.mxu0 0.0
  %735 = vmatprep.subr.mxu0 0.0
  %736 = vmatpush1.msra.mxu0 0.0
  %737 = vmatprep.subr.mxu0 0.0
  %738 = vmatpush1.msra.mxu0 0.0
  %739 = vmatprep.subr.mxu0 0.0
  %740 = vmatpush1.msra.mxu0 0.0
  %741 = vmatprep.subr.mxu0 0.0
  %742 = vmatpush1.msra.mxu0 0.0
  %743 = vmatprep.subr.mxu0 0.0
  %744 = vmatpush1.msra.mxu0 0.0
  %745 = vmatprep.subr.mxu0 0.0
  %746 = vmatpush1.msra.mxu0 0.0
  %747 = vmatprep.subr.mxu0 0.0
  %748 = vmatpush1.msra.mxu0 0.0
  %749 = vmatprep.subr.mxu0 0.0
  %750 = vmatpush1.msra.mxu0 0.0
  %751 = vmatprep.subr.mxu0 0.0
  %752 = vmatpush1.msra.mxu0 0.0
  %753 = vmatprep.subr.mxu0 0.0
  %754 = vmatpush1.msra.mxu0 0.0
  %755 = vmatprep.subr.mxu0 0.0
  %756 = vmatpush1.msra.mxu0 0.0
  %757 = vmatprep.subr.mxu0 0.0
  %758 = vmatpush1.msra.mxu0 0.0
  %759 = vmatprep.subr.mxu0 0.0
  %760 = vmatpush1.msra.mxu0 0.0
  %761 = vmatprep.subr.mxu0 0.0
  %762 = vmatpush1.msra.mxu0 0.0
  %763 = vmatprep.subr.mxu0 0.0
  %764 = vmatpush1.msra.mxu0 0.0
  %765 = vmatprep.subr.mxu0 0.0
  %766 = vmatpush1.msra.mxu0 0.0
  %767 = vmatprep.subr.mxu0 0.0
  %768 = vmatpush1.msra.mxu0 0.0
  %769 = vmatprep.subr.mxu0 0.0
  %770 = vmatpush1.msra.mxu0 0.0
  %771 = vmatprep.subr.mxu0 0.0
  %772 = vmatpush1.msra.mxu0 0.0
  %773 = vmatprep.subr.mxu0 0.0
  %774 = vmatpush1.msra.mxu0 0.0
  %775 = vmatprep.subr.mxu0 0.0
  %776 = vmatpush1.msra.mxu0 0.0
  %777 = vmatprep.mubr.f32.mxu0 0.0
  %v778 = vand.u32 %v533, 4294901760
  %v779 = vsub.f32 %v533, %v778
  %780 = vmatmul.mubr.f32.gmra.mrb[0].mxu0 %v779
  %v781 = vpop.f32.mrb[0].mxu0
  %v782 = vadd.f32 %v702, %v781
  %v783 = vpop.f32.mrb[0].mxu0
  %784 = vdwg.mxu0
  %785 = vmatprep.subr.mxu0 0.0
  %v786 = vand.u32 %v14, 4294901760
  %787 = vmatpush1.msra.mxu0 %v786
  %788 = vmatprep.subr.mxu0 0.0
  %v789 = vand.u32 %v15, 4294901760
  %790 = vmatpush1.msra.mxu0 %v789
  %791 = vmatprep.subr.mxu0 0.0
  %v792 = vand.u32 %v16, 4294901760
  %793 = vmatpush1.msra.mxu0 %v792
  %794 = vmatprep.subr.mxu0 0.0
  %v795 = vand.u32 %v17, 4294901760
  %796 = vmatpush1.msra.mxu0 %v795
  %797 = vmatprep.subr.mxu0 0.0
  %798 = vmatpush1.msra.mxu0 0.0
  %799 = vmatprep.subr.mxu0 0.0
  %800 = vmatpush1.msra.mxu0 0.0
  %801 = vmatprep.subr.mxu0 0.0
  %802 = vmatpush1.msra.mxu0 0.0
  %803 = vmatprep.subr.mxu0 0.0
  %804 = vmatpush1.msra.mxu0 0.0
  %805 = vmatprep.subr.mxu0 0.0
  %806 = vmatpush1.msra.mxu0 0.0
  %807 = vmatprep.subr.mxu0 0.0
  %808 = vmatpush1.msra.mxu0 0.0
  %809 = vmatprep.subr.mxu0 0.0
  %810 = vmatpush1.msra.mxu0 0.0
  %811 = vmatprep.subr.mxu0 0.0
  %812 = vmatpush1.msra.mxu0 0.0
  %813 = vmatprep.subr.mxu0 0.0
  %814 = vmatpush1.msra.mxu0 0.0
  %815 = vmatprep.subr.mxu0 0.0
  %816 = vmatpush1.msra.mxu0 0.0
  %817 = vmatprep.subr.mxu0 0.0
  %818 = vmatpush1.msra.mxu0 0.0
  %819 = vmatprep.subr.mxu0 0.0
  %820 = vmatpush1.msra.mxu0 0.0
  %821 = vmatprep.subr.mxu0 0.0
  %822 = vmatpush1.msra.mxu0 0.0
  %823 = vmatprep.subr.mxu0 0.0
  %824 = vmatpush1.msra.mxu0 0.0
  %825 = vmatprep.subr.mxu0 0.0
  %826 = vmatpush1.msra.mxu0 0.0
  %827 = vmatprep.subr.mxu0 0.0
  %828 = vmatpush1.msra.mxu0 0.0
  %829 = vmatprep.subr.mxu0 0.0
  %830 = vmatpush1.msra.mxu0 0.0
  %831 = vmatprep.subr.mxu0 0.0
  %832 = vmatpush1.msra.mxu0 0.0
  %833 = vmatprep.subr.mxu0 0.0
  %834 = vmatpush1.msra.mxu0 0.0
  %835 = vmatprep.subr.mxu0 0.0
  %836 = vmatpush1.msra.mxu0 0.0
  %837 = vmatprep.subr.mxu0 0.0
  %838 = vmatpush1.msra.mxu0 0.0
  %839 = vmatprep.subr.mxu0 0.0
  %840 = vmatpush1.msra.mxu0 0.0
  %841 = vmatprep.subr.mxu0 0.0
  %842 = vmatpush1.msra.mxu0 0.0
  %843 = vmatprep.subr.mxu0 0.0
  %844 = vmatpush1.msra.mxu0 0.0
  %845 = vmatprep.subr.mxu0 0.0
  %846 = vmatpush1.msra.mxu0 0.0
  %847 = vmatprep.subr.mxu0 0.0
  %848 = vmatpush1.msra.mxu0 0.0
  %849 = vmatprep.subr.mxu0 0.0
  %850 = vmatpush1.msra.mxu0 0.0
  %851 = vmatprep.subr.mxu0 0.0
  %852 = vmatpush1.msra.mxu0 0.0
  %853 = vmatprep.mubr.f32.mxu0 0.0
  %v854 = vand.u32 %v533, 4294901760
  %v855 = vsub.f32 %v533, %v854
  %v856 = vand.u32 %v855, 4294901760
  %857 = vmatmul.mubr.f32.gmra.mrb[0].mxu0 %v856
  %v858 = vpop.f32.mrb[0].mxu0
  %v859 = vadd.f32 %v782, %v858
  %v860 = vpop.f32.mrb[0].mxu0
  %861 = vdwg.mxu0
  %862 = vmatprep.subr.mxu0 0.0
  %v863 = vand.u32 %v14, 4294901760
  %v864 = vsub.f32 %v14, %v863
  %v865 = vand.u32 %v864, 4294901760
  %866 = vmatpush1.msra.mxu0 %v865
  %867 = vmatprep.subr.mxu0 0.0
  %v868 = vand.u32 %v15, 4294901760
  %v869 = vsub.f32 %v15, %v868
  %v870 = vand.u32 %v869, 4294901760
  %871 = vmatpush1.msra.mxu0 %v870
  %872 = vmatprep.subr.mxu0 0.0
  %v873 = vand.u32 %v16, 4294901760
  %v874 = vsub.f32 %v16, %v873
  %v875 = vand.u32 %v874, 4294901760
  %876 = vmatpush1.msra.mxu0 %v875
  %877 = vmatprep.subr.mxu0 0.0
  %v878 = vand.u32 %v17, 4294901760
  %v879 = vsub.f32 %v17, %v878
  %v880 = vand.u32 %v879, 4294901760
  %881 = vmatpush1.msra.mxu0 %v880
  %882 = vmatprep.subr.mxu0 0.0
  %883 = vmatpush1.msra.mxu0 0.0
  %884 = vmatprep.subr.mxu0 0.0
  %885 = vmatpush1.msra.mxu0 0.0
  %886 = vmatprep.subr.mxu0 0.0
  %887 = vmatpush1.msra.mxu0 0.0
  %888 = vmatprep.subr.mxu0 0.0
  %889 = vmatpush1.msra.mxu0 0.0
  %890 = vmatprep.subr.mxu0 0.0
  %891 = vmatpush1.msra.mxu0 0.0
  %892 = vmatprep.subr.mxu0 0.0
  %893 = vmatpush1.msra.mxu0 0.0
  %894 = vmatprep.subr.mxu0 0.0
  %895 = vmatpush1.msra.mxu0 0.0
  %896 = vmatprep.subr.mxu0 0.0
  %897 = vmatpush1.msra.mxu0 0.0
  %898 = vmatprep.subr.mxu0 0.0
  %899 = vmatpush1.msra.mxu0 0.0
  %900 = vmatprep.subr.mxu0 0.0
  %901 = vmatpush1.msra.mxu0 0.0
  %902 = vmatprep.subr.mxu0 0.0
  %903 = vmatpush1.msra.mxu0 0.0
  %904 = vmatprep.subr.mxu0 0.0
  %905 = vmatpush1.msra.mxu0 0.0
  %906 = vmatprep.subr.mxu0 0.0
  %907 = vmatpush1.msra.mxu0 0.0
  %908 = vmatprep.subr.mxu0 0.0
  %909 = vmatpush1.msra.mxu0 0.0
  %910 = vmatprep.subr.mxu0 0.0
  %911 = vmatpush1.msra.mxu0 0.0
  %912 = vmatprep.subr.mxu0 0.0
  %913 = vmatpush1.msra.mxu0 0.0
  %914 = vmatprep.subr.mxu0 0.0
  %915 = vmatpush1.msra.mxu0 0.0
  %916 = vmatprep.subr.mxu0 0.0
  %917 = vmatpush1.msra.mxu0 0.0
  %918 = vmatprep.subr.mxu0 0.0
  %919 = vmatpush1.msra.mxu0 0.0
  %920 = vmatprep.subr.mxu0 0.0
  %921 = vmatpush1.msra.mxu0 0.0
  %922 = vmatprep.subr.mxu0 0.0
  %923 = vmatpush1.msra.mxu0 0.0
  %924 = vmatprep.subr.mxu0 0.0
  %925 = vmatpush1.msra.mxu0 0.0
  %926 = vmatprep.subr.mxu0 0.0
  %927 = vmatpush1.msra.mxu0 0.0
  %928 = vmatprep.subr.mxu0 0.0
  %929 = vmatpush1.msra.mxu0 0.0
  %930 = vmatprep.subr.mxu0 0.0
  %931 = vmatpush1.msra.mxu0 0.0
  %932 = vmatprep.subr.mxu0 0.0
  %933 = vmatpush1.msra.mxu0 0.0
  %934 = vmatprep.subr.mxu0 0.0
  %935 = vmatpush1.msra.mxu0 0.0
  %936 = vmatprep.subr.mxu0 0.0
  %937 = vmatpush1.msra.mxu0 0.0
  %938 = vmatprep.mubr.f32.mxu0 0.0
  %v939 = vand.u32 %v533, 4294901760
  %940 = vmatmul.mubr.f32.gmra.mrb[0].mxu0 %v939
  %v941 = vpop.f32.mrb[0].mxu0
  %v942 = vadd.f32 %v859, %v941
  %v943 = vpop.f32.mrb[0].mxu0
  %944 = vdwg.mxu0
  %945 = vmatprep.subr.mxu0 0.0
  %v946 = vand.u32 %v14, 4294901760
  %947 = vmatpush1.msra.mxu0 %v946
  %948 = vmatprep.subr.mxu0 0.0
  %v949 = vand.u32 %v15, 4294901760
  %950 = vmatpush1.msra.mxu0 %v949
  %951 = vmatprep.subr.mxu0 0.0
  %v952 = vand.u32 %v16, 4294901760
  %953 = vmatpush1.msra.mxu0 %v952
  %954 = vmatprep.subr.mxu0 0.0
  %v955 = vand.u32 %v17, 4294901760
  %956 = vmatpush1.msra.mxu0 %v955
  %957 = vmatprep.subr.mxu0 0.0
  %958 = vmatpush1.msra.mxu0 0.0
  %959 = vmatprep.subr.mxu0 0.0
  %960 = vmatpush1.msra.mxu0 0.0
  %961 = vmatprep.subr.mxu0 0.0
  %962 = vmatpush1.msra.mxu0 0.0
  %963 = vmatprep.subr.mxu0 0.0
  %964 = vmatpush1.msra.mxu0 0.0
  %965 = vmatprep.subr.mxu0 0.0
  %966 = vmatpush1.msra.mxu0 0.0
  %967 = vmatprep.subr.mxu0 0.0
  %968 = vmatpush1.msra.mxu0 0.0
  %969 = vmatprep.subr.mxu0 0.0
  %970 = vmatpush1.msra.mxu0 0.0
  %971 = vmatprep.subr.mxu0 0.0
  %972 = vmatpush1.msra.mxu0 0.0
  %973 = vmatprep.subr.mxu0 0.0
  %974 = vmatpush1.msra.mxu0 0.0
  %975 = vmatprep.subr.mxu0 0.0
  %976 = vmatpush1.msra.mxu0 0.0
  %977 = vmatprep.subr.mxu0 0.0
  %978 = vmatpush1.msra.mxu0 0.0
  %979 = vmatprep.subr.mxu0 0.0
  %980 = vmatpush1.msra.mxu0 0.0
  %981 = vmatprep.subr.mxu0 0.0
  %982 = vmatpush1.msra.mxu0 0.0
  %983 = vmatprep.subr.mxu0 0.0
  %984 = vmatpush1.msra.mxu0 0.0
  %985 = vmatprep.subr.mxu0 0.0
  %986 = vmatpush1.msra.mxu0 0.0
  %987 = vmatprep.subr.mxu0 0.0
  %988 = vmatpush1.msra.mxu0 0.0
  %989 = vmatprep.subr.mxu0 0.0
  %990 = vmatpush1.msra.mxu0 0.0
  %991 = vmatprep.subr.mxu0 0.0
  %992 = vmatpush1.msra.mxu0 0.0
  %993 = vmatprep.subr.mxu0 0.0
  %994 = vmatpush1.msra.mxu0 0.0
  %995 = vmatprep.subr.mxu0 0.0
  %996 = vmatpush1.msra.mxu0 0.0
  %997 = vmatprep.subr.mxu0 0.0
  %998 = vmatpush1.msra.mxu0 0.0
  %999 = vmatprep.subr.mxu0 0.0
  %1000 = vmatpush1.msra.mxu0 0.0
  %1001 = vmatprep.subr.mxu0 0.0
  %1002 = vmatpush1.msra.mxu0 0.0
  %1003 = vmatprep.subr.mxu0 0.0
  %1004 = vmatpush1.msra.mxu0 0.0
  %1005 = vmatprep.subr.mxu0 0.0
  %1006 = vmatpush1.msra.mxu0 0.0
  %1007 = vmatprep.subr.mxu0 0.0
  %1008 = vmatpush1.msra.mxu0 0.0
  %1009 = vmatprep.subr.mxu0 0.0
  %1010 = vmatpush1.msra.mxu0 0.0
  %1011 = vmatprep.subr.mxu0 0.0
  %1012 = vmatpush1.msra.mxu0 0.0
  %1013 = vmatprep.mubr.f32.mxu0 0.0
  %v1014 = vand.u32 %v533, 4294901760
  %1015 = vmatmul.mubr.f32.gmra.mrb[0].mxu0 %v1014
  %v1016 = vpop.f32.mrb[0].mxu0
  %v1017 = vadd.f32 %v942, %v1016
  %v1018 = vpop.f32.mrb[0].mxu0
  %1019 = vdwg.mxu0
  %vm1020 = vcmp.gt.f32.partialorder %v1017, 0.0
  %v1021 = vmul.f32 %v1017, 1.442695
  %v1022 = vpow.pop %v1021
  %v1023 = vsub.f32 %v1022, 1.0
  %v1024 = vsel %vm1020, %v1017, %v1023
  %v1025 = vlaneseq
  %v1026 = vshrl.u32 %v1025, 7
  %v1027 = vsub.s32 0, %v1026
  %v1028 = vrot.slane %v33, %v1027
  %v1030 = vsel %vm531, %v1024, 0
  %1032 = vmatprep.subr.mxu0 0.0
  %v1033 = vand.u32 %v18, 4294901760
  %1034 = vmatpush1.msra.mxu0 %v1033
  %1035 = vmatprep.subr.mxu0 0.0
  %v1036 = vand.u32 %v19, 4294901760
  %1037 = vmatpush1.msra.mxu0 %v1036
  %1038 = vmatprep.subr.mxu0 0.0
  %v1039 = vand.u32 %v20, 4294901760
  %1040 = vmatpush1.msra.mxu0 %v1039
  %1041 = vmatprep.subr.mxu0 0.0
  %v1042 = vand.u32 %v21, 4294901760
  %1043 = vmatpush1.msra.mxu0 %v1042
  %1044 = vmatprep.subr.mxu0 0.0
  %1045 = vmatpush1.msra.mxu0 0.0
  %1046 = vmatprep.subr.mxu0 0.0
  %1047 = vmatpush1.msra.mxu0 0.0
  %1048 = vmatprep.subr.mxu0 0.0
  %1049 = vmatpush1.msra.mxu0 0.0
  %1050 = vmatprep.subr.mxu0 0.0
  %1051 = vmatpush1.msra.mxu0 0.0
  %1052 = vmatprep.subr.mxu0 0.0
  %1053 = vmatpush1.msra.mxu0 0.0
  %1054 = vmatprep.subr.mxu0 0.0
  %1055 = vmatpush1.msra.mxu0 0.0
  %1056 = vmatprep.subr.mxu0 0.0
  %1057 = vmatpush1.msra.mxu0 0.0
  %1058 = vmatprep.subr.mxu0 0.0
  %1059 = vmatpush1.msra.mxu0 0.0
  %1060 = vmatprep.subr.mxu0 0.0
  %1061 = vmatpush1.msra.mxu0 0.0
  %1062 = vmatprep.subr.mxu0 0.0
  %1063 = vmatpush1.msra.mxu0 0.0
  %1064 = vmatprep.subr.mxu0 0.0
  %1065 = vmatpush1.msra.mxu0 0.0
  %1066 = vmatprep.subr.mxu0 0.0
  %1067 = vmatpush1.msra.mxu0 0.0
  %1068 = vmatprep.subr.mxu0 0.0
  %1069 = vmatpush1.msra.mxu0 0.0
  %1070 = vmatprep.subr.mxu0 0.0
  %1071 = vmatpush1.msra.mxu0 0.0
  %1072 = vmatprep.subr.mxu0 0.0
  %1073 = vmatpush1.msra.mxu0 0.0
  %1074 = vmatprep.subr.mxu0 0.0
  %1075 = vmatpush1.msra.mxu0 0.0
  %1076 = vmatprep.subr.mxu0 0.0
  %1077 = vmatpush1.msra.mxu0 0.0
  %1078 = vmatprep.subr.mxu0 0.0
  %1079 = vmatpush1.msra.mxu0 0.0
  %1080 = vmatprep.subr.mxu0 0.0
  %1081 = vmatpush1.msra.mxu0 0.0
  %1082 = vmatprep.subr.mxu0 0.0
  %1083 = vmatpush1.msra.mxu0 0.0
  %1084 = vmatprep.subr.mxu0 0.0
  %1085 = vmatpush1.msra.mxu0 0.0
  %1086 = vmatprep.subr.mxu0 0.0
  %1087 = vmatpush1.msra.mxu0 0.0
  %1088 = vmatprep.subr.mxu0 0.0
  %1089 = vmatpush1.msra.mxu0 0.0
  %1090 = vmatprep.subr.mxu0 0.0
  %1091 = vmatpush1.msra.mxu0 0.0
  %1092 = vmatprep.subr.mxu0 0.0
  %1093 = vmatpush1.msra.mxu0 0.0
  %1094 = vmatprep.subr.mxu0 0.0
  %1095 = vmatpush1.msra.mxu0 0.0
  %1096 = vmatprep.subr.mxu0 0.0
  %1097 = vmatpush1.msra.mxu0 0.0
  %1098 = vmatprep.subr.mxu0 0.0
  %1099 = vmatpush1.msra.mxu0 0.0
  %1100 = vmatprep.mubr.f32.mxu0 0.0
  %v1101 = vand.u32 %v1030, 4294901760
  %v1102 = vsub.f32 %v1030, %v1101
  %v1103 = vand.u32 %v1102, 4294901760
  %v1104 = vsub.f32 %v1102, %v1103
  %v1105 = vand.u32 %v1104, 4294901760
  %1106 = vmatmul.mubr.f32.gmra.mrb[0].mxu0 %v1105
  %v1107 = vpop.f32.mrb[0].mxu0
  %v1108 = vadd.f32 %v1028, %v1107
  %v1109 = vpop.f32.mrb[0].mxu0
  %1110 = vdwg.mxu0
  %1111 = vmatprep.subr.mxu0 0.0
  %v1112 = vand.u32 %v18, 4294901760
  %v1113 = vsub.f32 %v18, %v1112
  %v1114 = vand.u32 %v1113, 4294901760
  %v1115 = vsub.f32 %v1113, %v1114
  %v1116 = vand.u32 %v1115, 4294901760
  %1117 = vmatpush1.msra.mxu0 %v1116
  %1118 = vmatprep.subr.mxu0 0.0
  %v1119 = vand.u32 %v19, 4294901760
  %v1120 = vsub.f32 %v19, %v1119
  %v1121 = vand.u32 %v1120, 4294901760
  %v1122 = vsub.f32 %v1120, %v1121
  %v1123 = vand.u32 %v1122, 4294901760
  %1124 = vmatpush1.msra.mxu0 %v1123
  %1125 = vmatprep.subr.mxu0 0.0
  %v1126 = vand.u32 %v20, 4294901760
  %v1127 = vsub.f32 %v20, %v1126
  %v1128 = vand.u32 %v1127, 4294901760
  %v1129 = vsub.f32 %v1127, %v1128
  %v1130 = vand.u32 %v1129, 4294901760
  %1131 = vmatpush1.msra.mxu0 %v1130
  %1132 = vmatprep.subr.mxu0 0.0
  %v1133 = vand.u32 %v21, 4294901760
  %v1134 = vsub.f32 %v21, %v1133
  %v1135 = vand.u32 %v1134, 4294901760
  %v1136 = vsub.f32 %v1134, %v1135
  %v1137 = vand.u32 %v1136, 4294901760
  %1138 = vmatpush1.msra.mxu0 %v1137
  %1139 = vmatprep.subr.mxu0 0.0
  %1140 = vmatpush1.msra.mxu0 0.0
  %1141 = vmatprep.subr.mxu0 0.0
  %1142 = vmatpush1.msra.mxu0 0.0
  %1143 = vmatprep.subr.mxu0 0.0
  %1144 = vmatpush1.msra.mxu0 0.0
  %1145 = vmatprep.subr.mxu0 0.0
  %1146 = vmatpush1.msra.mxu0 0.0
  %1147 = vmatprep.subr.mxu0 0.0
  %1148 = vmatpush1.msra.mxu0 0.0
  %1149 = vmatprep.subr.mxu0 0.0
  %1150 = vmatpush1.msra.mxu0 0.0
  %1151 = vmatprep.subr.mxu0 0.0
  %1152 = vmatpush1.msra.mxu0 0.0
  %1153 = vmatprep.subr.mxu0 0.0
  %1154 = vmatpush1.msra.mxu0 0.0
  %1155 = vmatprep.subr.mxu0 0.0
  %1156 = vmatpush1.msra.mxu0 0.0
  %1157 = vmatprep.subr.mxu0 0.0
  %1158 = vmatpush1.msra.mxu0 0.0
  %1159 = vmatprep.subr.mxu0 0.0
  %1160 = vmatpush1.msra.mxu0 0.0
  %1161 = vmatprep.subr.mxu0 0.0
  %1162 = vmatpush1.msra.mxu0 0.0
  %1163 = vmatprep.subr.mxu0 0.0
  %1164 = vmatpush1.msra.mxu0 0.0
  %1165 = vmatprep.subr.mxu0 0.0
  %1166 = vmatpush1.msra.mxu0 0.0
  %1167 = vmatprep.subr.mxu0 0.0
  %1168 = vmatpush1.msra.mxu0 0.0
  %1169 = vmatprep.subr.mxu0 0.0
  %1170 = vmatpush1.msra.mxu0 0.0
  %1171 = vmatprep.subr.mxu0 0.0
  %1172 = vmatpush1.msra.mxu0 0.0
  %1173 = vmatprep.subr.mxu0 0.0
  %1174 = vmatpush1.msra.mxu0 0.0
  %1175 = vmatprep.subr.mxu0 0.0
  %1176 = vmatpush1.msra.mxu0 0.0
  %1177 = vmatprep.subr.mxu0 0.0
  %1178 = vmatpush1.msra.mxu0 0.0
  %1179 = vmatprep.subr.mxu0 0.0
  %1180 = vmatpush1.msra.mxu0 0.0
  %1181 = vmatprep.subr.mxu0 0.0
  %1182 = vmatpush1.msra.mxu0 0.0
  %1183 = vmatprep.subr.mxu0 0.0
  %1184 = vmatpush1.msra.mxu0 0.0
  %1185 = vmatprep.subr.mxu0 0.0
  %1186 = vmatpush1.msra.mxu0 0.0
  %1187 = vmatprep.subr.mxu0 0.0
  %1188 = vmatpush1.msra.mxu0 0.0
  %1189 = vmatprep.subr.mxu0 0.0
  %1190 = vmatpush1.msra.mxu0 0.0
  %1191 = vmatprep.subr.mxu0 0.0
  %1192 = vmatpush1.msra.mxu0 0.0
  %1193 = vmatprep.subr.mxu0 0.0
  %1194 = vmatpush1.msra.mxu0 0.0
  %1195 = vmatprep.mubr.f32.mxu0 0.0
  %v1196 = vand.u32 %v1030, 4294901760
  %1197 = vmatmul.mubr.f32.gmra.mrb[0].mxu0 %v1196
  %v1198 = vpop.f32.mrb[0].mxu0
  %v1199 = vadd.f32 %v1108, %v1198
  %v1200 = vpop.f32.mrb[0].mxu0
  %1201 = vdwg.mxu0
  %1202 = vmatprep.subr.mxu0 0.0
  %v1203 = vand.u32 %v18, 4294901760
  %v1204 = vsub.f32 %v18, %v1203
  %1205 = vmatpush1.msra.mxu0 %v1204
  %1206 = vmatprep.subr.mxu0 0.0
  %v1207 = vand.u32 %v19, 4294901760
  %v1208 = vsub.f32 %v19, %v1207
  %1209 = vmatpush1.msra.mxu0 %v1208
  %1210 = vmatprep.subr.mxu0 0.0
  %v1211 = vand.u32 %v20, 4294901760
  %v1212 = vsub.f32 %v20, %v1211
  %1213 = vmatpush1.msra.mxu0 %v1212
  %1214 = vmatprep.subr.mxu0 0.0
  %v1215 = vand.u32 %v21, 4294901760
  %v1216 = vsub.f32 %v21, %v1215
  %1217 = vmatpush1.msra.mxu0 %v1216
  %1218 = vmatprep.subr.mxu0 0.0
  %1219 = vmatpush1.msra.mxu0 0.0
  %1220 = vmatprep.subr.mxu0 0.0
  %1221 = vmatpush1.msra.mxu0 0.0
  %1222 = vmatprep.subr.mxu0 0.0
  %1223 = vmatpush1.msra.mxu0 0.0
  %1224 = vmatprep.subr.mxu0 0.0
  %1225 = vmatpush1.msra.mxu0 0.0
  %1226 = vmatprep.subr.mxu0 0.0
  %1227 = vmatpush1.msra.mxu0 0.0
  %1228 = vmatprep.subr.mxu0 0.0
  %1229 = vmatpush1.msra.mxu0 0.0
  %1230 = vmatprep.subr.mxu0 0.0
  %1231 = vmatpush1.msra.mxu0 0.0
  %1232 = vmatprep.subr.mxu0 0.0
  %1233 = vmatpush1.msra.mxu0 0.0
  %1234 = vmatprep.subr.mxu0 0.0
  %1235 = vmatpush1.msra.mxu0 0.0
  %1236 = vmatprep.subr.mxu0 0.0
  %1237 = vmatpush1.msra.mxu0 0.0
  %1238 = vmatprep.subr.mxu0 0.0
  %1239 = vmatpush1.msra.mxu0 0.0
  %1240 = vmatprep.subr.mxu0 0.0
  %1241 = vmatpush1.msra.mxu0 0.0
  %1242 = vmatprep.subr.mxu0 0.0
  %1243 = vmatpush1.msra.mxu0 0.0
  %1244 = vmatprep.subr.mxu0 0.0
  %1245 = vmatpush1.msra.mxu0 0.0
  %1246 = vmatprep.subr.mxu0 0.0
  %1247 = vmatpush1.msra.mxu0 0.0
  %1248 = vmatprep.subr.mxu0 0.0
  %1249 = vmatpush1.msra.mxu0 0.0
  %1250 = vmatprep.subr.mxu0 0.0
  %1251 = vmatpush1.msra.mxu0 0.0
  %1252 = vmatprep.subr.mxu0 0.0
  %1253 = vmatpush1.msra.mxu0 0.0
  %1254 = vmatprep.subr.mxu0 0.0
  %1255 = vmatpush1.msra.mxu0 0.0
  %1256 = vmatprep.subr.mxu0 0.0
  %1257 = vmatpush1.msra.mxu0 0.0
  %1258 = vmatprep.subr.mxu0 0.0
  %1259 = vmatpush1.msra.mxu0 0.0
  %1260 = vmatprep.subr.mxu0 0.0
  %1261 = vmatpush1.msra.mxu0 0.0
  %1262 = vmatprep.subr.mxu0 0.0
  %1263 = vmatpush1.msra.mxu0 0.0
  %1264 = vmatprep.subr.mxu0 0.0
  %1265 = vmatpush1.msra.mxu0 0.0
  %1266 = vmatprep.subr.mxu0 0.0
  %1267 = vmatpush1.msra.mxu0 0.0
  %1268 = vmatprep.subr.mxu0 0.0
  %1269 = vmatpush1.msra.mxu0 0.0
  %1270 = vmatprep.subr.mxu0 0.0
  %1271 = vmatpush1.msra.mxu0 0.0
  %1272 = vmatprep.subr.mxu0 0.0
  %1273 = vmatpush1.msra.mxu0 0.0
  %1274 = vmatprep.mubr.f32.mxu0 0.0
  %v1275 = vand.u32 %v1030, 4294901760
  %v1276 = vsub.f32 %v1030, %v1275
  %1277 = vmatmul.mubr.f32.gmra.mrb[0].mxu0 %v1276
  %v1278 = vpop.f32.mrb[0].mxu0
  %v1279 = vadd.f32 %v1199, %v1278
  %v1280 = vpop.f32.mrb[0].mxu0
  %1281 = vdwg.mxu0
  %1282 = vmatprep.subr.mxu0 0.0
  %v1283 = vand.u32 %v18, 4294901760
  %1284 = vmatpush1.msra.mxu0 %v1283
  %1285 = vmatprep.subr.mxu0 0.0
  %v1286 = vand.u32 %v19, 4294901760
  %1287 = vmatpush1.msra.mxu0 %v1286
  %1288 = vmatprep.subr.mxu0 0.0
  %v1289 = vand.u32 %v20, 4294901760
  %1290 = vmatpush1.msra.mxu0 %v1289
  %1291 = vmatprep.subr.mxu0 0.0
  %v1292 = vand.u32 %v21, 4294901760
  %1293 = vmatpush1.msra.mxu0 %v1292
  %1294 = vmatprep.subr.mxu0 0.0
  %1295 = vmatpush1.msra.mxu0 0.0
  %1296 = vmatprep.subr.mxu0 0.0
  %1297 = vmatpush1.msra.mxu0 0.0
  %1298 = vmatprep.subr.mxu0 0.0
  %1299 = vmatpush1.msra.mxu0 0.0
  %1300 = vmatprep.subr.mxu0 0.0
  %1301 = vmatpush1.msra.mxu0 0.0
  %1302 = vmatprep.subr.mxu0 0.0
  %1303 = vmatpush1.msra.mxu0 0.0
  %1304 = vmatprep.subr.mxu0 0.0
  %1305 = vmatpush1.msra.mxu0 0.0
  %1306 = vmatprep.subr.mxu0 0.0
  %1307 = vmatpush1.msra.mxu0 0.0
  %1308 = vmatprep.subr.mxu0 0.0
  %1309 = vmatpush1.msra.mxu0 0.0
  %1310 = vmatprep.subr.mxu0 0.0
  %1311 = vmatpush1.msra.mxu0 0.0
  %1312 = vmatprep.subr.mxu0 0.0
  %1313 = vmatpush1.msra.mxu0 0.0
  %1314 = vmatprep.subr.mxu0 0.0
  %1315 = vmatpush1.msra.mxu0 0.0
  %1316 = vmatprep.subr.mxu0 0.0
  %1317 = vmatpush1.msra.mxu0 0.0
  %1318 = vmatprep.subr.mxu0 0.0
  %1319 = vmatpush1.msra.mxu0 0.0
  %1320 = vmatprep.subr.mxu0 0.0
  %1321 = vmatpush1.msra.mxu0 0.0
  %1322 = vmatprep.subr.mxu0 0.0
  %1323 = vmatpush1.msra.mxu0 0.0
  %1324 = vmatprep.subr.mxu0 0.0
  %1325 = vmatpush1.msra.mxu0 0.0
  %1326 = vmatprep.subr.mxu0 0.0
  %1327 = vmatpush1.msra.mxu0 0.0
  %1328 = vmatprep.subr.mxu0 0.0
  %1329 = vmatpush1.msra.mxu0 0.0
  %1330 = vmatprep.subr.mxu0 0.0
  %1331 = vmatpush1.msra.mxu0 0.0
  %1332 = vmatprep.subr.mxu0 0.0
  %1333 = vmatpush1.msra.mxu0 0.0
  %1334 = vmatprep.subr.mxu0 0.0
  %1335 = vmatpush1.msra.mxu0 0.0
  %1336 = vmatprep.subr.mxu0 0.0
  %1337 = vmatpush1.msra.mxu0 0.0
  %1338 = vmatprep.subr.mxu0 0.0
  %1339 = vmatpush1.msra.mxu0 0.0
  %1340 = vmatprep.subr.mxu0 0.0
  %1341 = vmatpush1.msra.mxu0 0.0
  %1342 = vmatprep.subr.mxu0 0.0
  %1343 = vmatpush1.msra.mxu0 0.0
  %1344 = vmatprep.subr.mxu0 0.0
  %1345 = vmatpush1.msra.mxu0 0.0
  %1346 = vmatprep.subr.mxu0 0.0
  %1347 = vmatpush1.msra.mxu0 0.0
  %1348 = vmatprep.subr.mxu0 0.0
  %1349 = vmatpush1.msra.mxu0 0.0
  %1350 = vmatprep.mubr.f32.mxu0 0.0
  %v1351 = vand.u32 %v1030, 4294901760
  %v1352 = vsub.f32 %v1030, %v1351
  %v1353 = vand.u32 %v1352, 4294901760
  %1354 = vmatmul.mubr.f32.gmra.mrb[0].mxu0 %v1353
  %v1355 = vpop.f32.mrb[0].mxu0
  %v1356 = vadd.f32 %v1279, %v1355
  %v1357 = vpop.f32.mrb[0].mxu0
  %1358 = vdwg.mxu0
  %1359 = vmatprep.subr.mxu0 0.0
  %v1360 = vand.u32 %v18, 4294901760
  %v1361 = vsub.f32 %v18, %v1360
  %v1362 = vand.u32 %v1361, 4294901760
  %1363 = vmatpush1.msra.mxu0 %v1362
  %1364 = vmatprep.subr.mxu0 0.0
  %v1365 = vand.u32 %v19, 4294901760
  %v1366 = vsub.f32 %v19, %v1365
  %v1367 = vand.u32 %v1366, 4294901760
  %1368 = vmatpush1.msra.mxu0 %v1367
  %1369 = vmatprep.subr.mxu0 0.0
  %v1370 = vand.u32 %v20, 4294901760
  %v1371 = vsub.f32 %v20, %v1370
  %v1372 = vand.u32 %v1371, 4294901760
  %1373 = vmatpush1.msra.mxu0 %v1372
  %1374 = vmatprep.subr.mxu0 0.0
  %v1375 = vand.u32 %v21, 4294901760
  %v1376 = vsub.f32 %v21, %v1375
  %v1377 = vand.u32 %v1376, 4294901760
  %1378 = vmatpush1.msra.mxu0 %v1377
  %1379 = vmatprep.subr.mxu0 0.0
  %1380 = vmatpush1.msra.mxu0 0.0
  %1381 = vmatprep.subr.mxu0 0.0
  %1382 = vmatpush1.msra.mxu0 0.0
  %1383 = vmatprep.subr.mxu0 0.0
  %1384 = vmatpush1.msra.mxu0 0.0
  %1385 = vmatprep.subr.mxu0 0.0
  %1386 = vmatpush1.msra.mxu0 0.0
  %1387 = vmatprep.subr.mxu0 0.0
  %1388 = vmatpush1.msra.mxu0 0.0
  %1389 = vmatprep.subr.mxu0 0.0
  %1390 = vmatpush1.msra.mxu0 0.0
  %1391 = vmatprep.subr.mxu0 0.0
  %1392 = vmatpush1.msra.mxu0 0.0
  %1393 = vmatprep.subr.mxu0 0.0
  %1394 = vmatpush1.msra.mxu0 0.0
  %1395 = vmatprep.subr.mxu0 0.0
  %1396 = vmatpush1.msra.mxu0 0.0
  %1397 = vmatprep.subr.mxu0 0.0
  %1398 = vmatpush1.msra.mxu0 0.0
  %1399 = vmatprep.subr.mxu0 0.0
  %1400 = vmatpush1.msra.mxu0 0.0
  %1401 = vmatprep.subr.mxu0 0.0
  %1402 = vmatpush1.msra.mxu0 0.0
  %1403 = vmatprep.subr.mxu0 0.0
  %1404 = vmatpush1.msra.mxu0 0.0
  %1405 = vmatprep.subr.mxu0 0.0
  %1406 = vmatpush1.msra.mxu0 0.0
  %1407 = vmatprep.subr.mxu0 0.0
  %1408 = vmatpush1.msra.mxu0 0.0
  %1409 = vmatprep.subr.mxu0 0.0
  %1410 = vmatpush1.msra.mxu0 0.0
  %1411 = vmatprep.subr.mxu0 0.0
  %1412 = vmatpush1.msra.mxu0 0.0
  %1413 = vmatprep.subr.mxu0 0.0
  %1414 = vmatpush1.msra.mxu0 0.0
  %1415 = vmatprep.subr.mxu0 0.0
  %1416 = vmatpush1.msra.mxu0 0.0
  %1417 = vmatprep.subr.mxu0 0.0
  %1418 = vmatpush1.msra.mxu0 0.0
  %1419 = vmatprep.subr.mxu0 0.0
  %1420 = vmatpush1.msra.mxu0 0.0
  %1421 = vmatprep.subr.mxu0 0.0
  %1422 = vmatpush1.msra.mxu0 0.0
  %1423 = vmatprep.subr.mxu0 0.0
  %1424 = vmatpush1.msra.mxu0 0.0
  %1425 = vmatprep.subr.mxu0 0.0
  %1426 = vmatpush1.msra.mxu0 0.0
  %1427 = vmatprep.subr.mxu0 0.0
  %1428 = vmatpush1.msra.mxu0 0.0
  %1429 = vmatprep.subr.mxu0 0.0
  %1430 = vmatpush1.msra.mxu0 0.0
  %1431 = vmatprep.subr.mxu0 0.0
  %1432 = vmatpush1.msra.mxu0 0.0
  %1433 = vmatprep.subr.mxu0 0.0
  %1434 = vmatpush1.msra.mxu0 0.0
  %1435 = vmatprep.mubr.f32.mxu0 0.0
  %v1436 = vand.u32 %v1030, 4294901760
  %1437 = vmatmul.mubr.f32.gmra.mrb[0].mxu0 %v1436
  %v1438 = vpop.f32.mrb[0].mxu0
  %v1439 = vadd.f32 %v1356, %v1438
  %v1440 = vpop.f32.mrb[0].mxu0
  %1441 = vdwg.mxu0
  %1442 = vmatprep.subr.mxu0 0.0
  %v1443 = vand.u32 %v18, 4294901760
  %1444 = vmatpush1.msra.mxu0 %v1443
  %1445 = vmatprep.subr.mxu0 0.0
  %v1446 = vand.u32 %v19, 4294901760
  %1447 = vmatpush1.msra.mxu0 %v1446
  %1448 = vmatprep.subr.mxu0 0.0
  %v1449 = vand.u32 %v20, 4294901760
  %1450 = vmatpush1.msra.mxu0 %v1449
  %1451 = vmatprep.subr.mxu0 0.0
  %v1452 = vand.u32 %v21, 4294901760
  %1453 = vmatpush1.msra.mxu0 %v1452
  %1454 = vmatprep.subr.mxu0 0.0
  %1455 = vmatpush1.msra.mxu0 0.0
  %1456 = vmatprep.subr.mxu0 0.0
  %1457 = vmatpush1.msra.mxu0 0.0
  %1458 = vmatprep.subr.mxu0 0.0
  %1459 = vmatpush1.msra.mxu0 0.0
  %1460 = vmatprep.subr.mxu0 0.0
  %1461 = vmatpush1.msra.mxu0 0.0
  %1462 = vmatprep.subr.mxu0 0.0
  %1463 = vmatpush1.msra.mxu0 0.0
  %1464 = vmatprep.subr.mxu0 0.0
  %1465 = vmatpush1.msra.mxu0 0.0
  %1466 = vmatprep.subr.mxu0 0.0
  %1467 = vmatpush1.msra.mxu0 0.0
  %1468 = vmatprep.subr.mxu0 0.0
  %1469 = vmatpush1.msra.mxu0 0.0
  %1470 = vmatprep.subr.mxu0 0.0
  %1471 = vmatpush1.msra.mxu0 0.0
  %1472 = vmatprep.subr.mxu0 0.0
  %1473 = vmatpush1.msra.mxu0 0.0
  %1474 = vmatprep.subr.mxu0 0.0
  %1475 = vmatpush1.msra.mxu0 0.0
  %1476 = vmatprep.subr.mxu0 0.0
  %1477 = vmatpush1.msra.mxu0 0.0
  %1478 = vmatprep.subr.mxu0 0.0
  %1479 = vmatpush1.msra.mxu0 0.0
  %1480 = vmatprep.subr.mxu0 0.0
  %1481 = vmatpush1.msra.mxu0 0.0
  %1482 = vmatprep.subr.mxu0 0.0
  %1483 = vmatpush1.msra.mxu0 0.0
  %1484 = vmatprep.subr.mxu0 0.0
  %1485 = vmatpush1.msra.mxu0 0.0
  %1486 = vmatprep.subr.mxu0 0.0
  %1487 = vmatpush1.msra.mxu0 0.0
  %1488 = vmatprep.subr.mxu0 0.0
  %1489 = vmatpush1.msra.mxu0 0.0
  %1490 = vmatprep.subr.mxu0 0.0
  %1491 = vmatpush1.msra.mxu0 0.0
  %1492 = vmatprep.subr.mxu0 0.0
  %1493 = vmatpush1.msra.mxu0 0.0
  %1494 = vmatprep.subr.mxu0 0.0
  %1495 = vmatpush1.msra.mxu0 0.0
  %1496 = vmatprep.subr.mxu0 0.0
  %1497 = vmatpush1.msra.mxu0 0.0
  %1498 = vmatprep.subr.mxu0 0.0
  %1499 = vmatpush1.msra.mxu0 0.0
  %1500 = vmatprep.subr.mxu0 0.0
  %1501 = vmatpush1.msra.mxu0 0.0
  %1502 = vmatprep.subr.mxu0 0.0
  %1503 = vmatpush1.msra.mxu0 0.0
  %1504 = vmatprep.subr.mxu0 0.0
  %1505 = vmatpush1.msra.mxu0 0.0
  %1506 = vmatprep.subr.mxu0 0.0
  %1507 = vmatpush1.msra.mxu0 0.0
  %1508 = vmatprep.subr.mxu0 0.0
  %1509 = vmatpush1.msra.mxu0 0.0
  %1510 = vmatprep.mubr.f32.mxu0 0.0
  %v1511 = vand.u32 %v1030, 4294901760
  %1512 = vmatmul.mubr.f32.gmra.mrb[0].mxu0 %v1511
  %v1513 = vpop.f32.mrb[0].mxu0
  %v1514 = vadd.f32 %v1439, %v1513
  %v1515 = vpop.f32.mrb[0].mxu0
  %1516 = vdwg.mxu0
  %v1517 = vmul.f32 %v1514, %v1514
  %vm1518 = vcmask 15360
  %v1519 = vsel %vm1518, %v1517, 0.0
  %1520 = vadd.xlane.f32.xlu0 %v1519
  %v1521 = vpop.xlane.xlu0 %1520
  %v1522 = vlaneseq
  %v1523 = vshrl.u32 %v1522, 7
  %v1524 = vsub.s32 0, %v1523
  %v1525 = vrot.slane %v34, %v1524
  %1526 = vmatprep.subr.mxu0 0.0
  %v1527 = vand.u32 %v22, 4294901760
  %1528 = vmatpush1.msra.mxu0 %v1527
  %1529 = vmatprep.subr.mxu0 0.0
  %v1530 = vand.u32 %v23, 4294901760
  %1531 = vmatpush1.msra.mxu0 %v1530
  %1532 = vmatprep.subr.mxu0 0.0
  %v1533 = vand.u32 %v24, 4294901760
  %1534 = vmatpush1.msra.mxu0 %v1533
  %1535 = vmatprep.subr.mxu0 0.0
  %v1536 = vand.u32 %v25, 4294901760
  %1537 = vmatpush1.msra.mxu0 %v1536
  %1538 = vmatprep.subr.mxu0 0.0
  %1539 = vmatpush1.msra.mxu0 0.0
  %1540 = vmatprep.subr.mxu0 0.0
  %1541 = vmatpush1.msra.mxu0 0.0
  %1542 = vmatprep.subr.mxu0 0.0
  %1543 = vmatpush1.msra.mxu0 0.0
  %1544 = vmatprep.subr.mxu0 0.0
  %1545 = vmatpush1.msra.mxu0 0.0
  %1546 = vmatprep.subr.mxu0 0.0
  %1547 = vmatpush1.msra.mxu0 0.0
  %1548 = vmatprep.subr.mxu0 0.0
  %1549 = vmatpush1.msra.mxu0 0.0
  %1550 = vmatprep.subr.mxu0 0.0
  %1551 = vmatpush1.msra.mxu0 0.0
  %1552 = vmatprep.subr.mxu0 0.0
  %1553 = vmatpush1.msra.mxu0 0.0
  %1554 = vmatprep.subr.mxu0 0.0
  %1555 = vmatpush1.msra.mxu0 0.0
  %1556 = vmatprep.subr.mxu0 0.0
  %1557 = vmatpush1.msra.mxu0 0.0
  %1558 = vmatprep.subr.mxu0 0.0
  %1559 = vmatpush1.msra.mxu0 0.0
  %1560 = vmatprep.subr.mxu0 0.0
  %1561 = vmatpush1.msra.mxu0 0.0
  %1562 = vmatprep.subr.mxu0 0.0
  %1563 = vmatpush1.msra.mxu0 0.0
  %1564 = vmatprep.subr.mxu0 0.0
  %1565 = vmatpush1.msra.mxu0 0.0
  %1566 = vmatprep.subr.mxu0 0.0
  %1567 = vmatpush1.msra.mxu0 0.0
  %1568 = vmatprep.subr.mxu0 0.0
  %1569 = vmatpush1.msra.mxu0 0.0
  %1570 = vmatprep.subr.mxu0 0.0
  %1571 = vmatpush1.msra.mxu0 0.0
  %1572 = vmatprep.subr.mxu0 0.0
  %1573 = vmatpush1.msra.mxu0 0.0
  %1574 = vmatprep.subr.mxu0 0.0
  %1575 = vmatpush1.msra.mxu0 0.0
  %1576 = vmatprep.subr.mxu0 0.0
  %1577 = vmatpush1.msra.mxu0 0.0
  %1578 = vmatprep.subr.mxu0 0.0
  %1579 = vmatpush1.msra.mxu0 0.0
  %1580 = vmatprep.subr.mxu0 0.0
  %1581 = vmatpush1.msra.mxu0 0.0
  %1582 = vmatprep.subr.mxu0 0.0
  %1583 = vmatpush1.msra.mxu0 0.0
  %1584 = vmatprep.subr.mxu0 0.0
  %1585 = vmatpush1.msra.mxu0 0.0
  %1586 = vmatprep.subr.mxu0 0.0
  %1587 = vmatpush1.msra.mxu0 0.0
  %1588 = vmatprep.subr.mxu0 0.0
  %1589 = vmatpush1.msra.mxu0 0.0
  %1590 = vmatprep.subr.mxu0 0.0
  %1591 = vmatpush1.msra.mxu0 0.0
  %1592 = vmatprep.subr.mxu0 0.0
  %1593 = vmatpush1.msra.mxu0 0.0
  %1594 = vmatprep.mubr.f32.mxu0 0.0
  %v1595 = vand.u32 %v1030, 4294901760
  %v1596 = vsub.f32 %v1030, %v1595
  %v1597 = vand.u32 %v1596, 4294901760
  %v1598 = vsub.f32 %v1596, %v1597
  %v1599 = vand.u32 %v1598, 4294901760
  %1600 = vmatmul.mubr.f32.gmra.mrb[0].mxu0 %v1599
  %v1601 = vpop.f32.mrb[0].mxu0
  %v1602 = vadd.f32 %v1525, %v1601
  %v1603 = vpop.f32.mrb[0].mxu0
  %1604 = vdwg.mxu0
  %1605 = vmatprep.subr.mxu0 0.0
  %v1606 = vand.u32 %v22, 4294901760
  %v1607 = vsub.f32 %v22, %v1606
  %v1608 = vand.u32 %v1607, 4294901760
  %v1609 = vsub.f32 %v1607, %v1608
  %v1610 = vand.u32 %v1609, 4294901760
  %1611 = vmatpush1.msra.mxu0 %v1610
  %1612 = vmatprep.subr.mxu0 0.0
  %v1613 = vand.u32 %v23, 4294901760
  %v1614 = vsub.f32 %v23, %v1613
  %v1615 = vand.u32 %v1614, 4294901760
  %v1616 = vsub.f32 %v1614, %v1615
  %v1617 = vand.u32 %v1616, 4294901760
  %1618 = vmatpush1.msra.mxu0 %v1617
  %1619 = vmatprep.subr.mxu0 0.0
  %v1620 = vand.u32 %v24, 4294901760
  %v1621 = vsub.f32 %v24, %v1620
  %v1622 = vand.u32 %v1621, 4294901760
  %v1623 = vsub.f32 %v1621, %v1622
  %v1624 = vand.u32 %v1623, 4294901760
  %1625 = vmatpush1.msra.mxu0 %v1624
  %1626 = vmatprep.subr.mxu0 0.0
  %v1627 = vand.u32 %v25, 4294901760
  %v1628 = vsub.f32 %v25, %v1627
  %v1629 = vand.u32 %v1628, 4294901760
  %v1630 = vsub.f32 %v1628, %v1629
  %v1631 = vand.u32 %v1630, 4294901760
  %1632 = vmatpush1.msra.mxu0 %v1631
  %1633 = vmatprep.subr.mxu0 0.0
  %1634 = vmatpush1.msra.mxu0 0.0
  %1635 = vmatprep.subr.mxu0 0.0
  %1636 = vmatpush1.msra.mxu0 0.0
  %1637 = vmatprep.subr.mxu0 0.0
  %1638 = vmatpush1.msra.mxu0 0.0
  %1639 = vmatprep.subr.mxu0 0.0
  %1640 = vmatpush1.msra.mxu0 0.0
  %1641 = vmatprep.subr.mxu0 0.0
  %1642 = vmatpush1.msra.mxu0 0.0
  %1643 = vmatprep.subr.mxu0 0.0
  %1644 = vmatpush1.msra.mxu0 0.0
  %1645 = vmatprep.subr.mxu0 0.0
  %1646 = vmatpush1.msra.mxu0 0.0
  %1647 = vmatprep.subr.mxu0 0.0
  %1648 = vmatpush1.msra.mxu0 0.0
  %1649 = vmatprep.subr.mxu0 0.0
  %1650 = vmatpush1.msra.mxu0 0.0
  %1651 = vmatprep.subr.mxu0 0.0
  %1652 = vmatpush1.msra.mxu0 0.0
  %1653 = vmatprep.subr.mxu0 0.0
  %1654 = vmatpush1.msra.mxu0 0.0
  %1655 = vmatprep.subr.mxu0 0.0
  %1656 = vmatpush1.msra.mxu0 0.0
  %1657 = vmatprep.subr.mxu0 0.0
  %1658 = vmatpush1.msra.mxu0 0.0
  %1659 = vmatprep.subr.mxu0 0.0
  %1660 = vmatpush1.msra.mxu0 0.0
  %1661 = vmatprep.subr.mxu0 0.0
  %1662 = vmatpush1.msra.mxu0 0.0
  %1663 = vmatprep.subr.mxu0 0.0
  %1664 = vmatpush1.msra.mxu0 0.0
  %1665 = vmatprep.subr.mxu0 0.0
  %1666 = vmatpush1.msra.mxu0 0.0
  %1667 = vmatprep.subr.mxu0 0.0
  %1668 = vmatpush1.msra.mxu0 0.0
  %1669 = vmatprep.subr.mxu0 0.0
  %1670 = vmatpush1.msra.mxu0 0.0
  %1671 = vmatprep.subr.mxu0 0.0
  %1672 = vmatpush1.msra.mxu0 0.0
  %1673 = vmatprep.subr.mxu0 0.0
  %1674 = vmatpush1.msra.mxu0 0.0
  %1675 = vmatprep.subr.mxu0 0.0
  %1676 = vmatpush1.msra.mxu0 0.0
  %1677 = vmatprep.subr.mxu0 0.0
  %1678 = vmatpush1.msra.mxu0 0.0
  %1679 = vmatprep.subr.mxu0 0.0
  %1680 = vmatpush1.msra.mxu0 0.0
  %1681 = vmatprep.subr.mxu0 0.0
  %1682 = vmatpush1.msra.mxu0 0.0
  %1683 = vmatprep.subr.mxu0 0.0
  %1684 = vmatpush1.msra.mxu0 0.0
  %1685 = vmatprep.subr.mxu0 0.0
  %1686 = vmatpush1.msra.mxu0 0.0
  %1687 = vmatprep.subr.mxu0 0.0
  %1688 = vmatpush1.msra.mxu0 0.0
  %1689 = vmatprep.mubr.f32.mxu0 0.0
  %v1690 = vand.u32 %v1030, 4294901760
  %1691 = vmatmul.mubr.f32.gmra.mrb[0].mxu0 %v1690
  %v1692 = vpop.f32.mrb[0].mxu0
  %v1693 = vadd.f32 %v1602, %v1692
  %v1694 = vpop.f32.mrb[0].mxu0
  %1695 = vdwg.mxu0
  %1696 = vmatprep.subr.mxu0 0.0
  %v1697 = vand.u32 %v22, 4294901760
  %v1698 = vsub.f32 %v22, %v1697
  %1699 = vmatpush1.msra.mxu0 %v1698
  %1700 = vmatprep.subr.mxu0 0.0
  %v1701 = vand.u32 %v23, 4294901760
  %v1702 = vsub.f32 %v23, %v1701
  %1703 = vmatpush1.msra.mxu0 %v1702
  %1704 = vmatprep.subr.mxu0 0.0
  %v1705 = vand.u32 %v24, 4294901760
  %v1706 = vsub.f32 %v24, %v1705
  %1707 = vmatpush1.msra.mxu0 %v1706
  %1708 = vmatprep.subr.mxu0 0.0
  %v1709 = vand.u32 %v25, 4294901760
  %v1710 = vsub.f32 %v25, %v1709
  %1711 = vmatpush1.msra.mxu0 %v1710
  %1712 = vmatprep.subr.mxu0 0.0
  %1713 = vmatpush1.msra.mxu0 0.0
  %1714 = vmatprep.subr.mxu0 0.0
  %1715 = vmatpush1.msra.mxu0 0.0
  %1716 = vmatprep.subr.mxu0 0.0
  %1717 = vmatpush1.msra.mxu0 0.0
  %1718 = vmatprep.subr.mxu0 0.0
  %1719 = vmatpush1.msra.mxu0 0.0
  %1720 = vmatprep.subr.mxu0 0.0
  %1721 = vmatpush1.msra.mxu0 0.0
  %1722 = vmatprep.subr.mxu0 0.0
  %1723 = vmatpush1.msra.mxu0 0.0
  %1724 = vmatprep.subr.mxu0 0.0
  %1725 = vmatpush1.msra.mxu0 0.0
  %1726 = vmatprep.subr.mxu0 0.0
  %1727 = vmatpush1.msra.mxu0 0.0
  %1728 = vmatprep.subr.mxu0 0.0
  %1729 = vmatpush1.msra.mxu0 0.0
  %1730 = vmatprep.subr.mxu0 0.0
  %1731 = vmatpush1.msra.mxu0 0.0
  %1732 = vmatprep.subr.mxu0 0.0
  %1733 = vmatpush1.msra.mxu0 0.0
  %1734 = vmatprep.subr.mxu0 0.0
  %1735 = vmatpush1.msra.mxu0 0.0
  %1736 = vmatprep.subr.mxu0 0.0
  %1737 = vmatpush1.msra.mxu0 0.0
  %1738 = vmatprep.subr.mxu0 0.0
  %1739 = vmatpush1.msra.mxu0 0.0
  %1740 = vmatprep.subr.mxu0 0.0
  %1741 = vmatpush1.msra.mxu0 0.0
  %1742 = vmatprep.subr.mxu0 0.0
  %1743 = vmatpush1.msra.mxu0 0.0
  %1744 = vmatprep.subr.mxu0 0.0
  %1745 = vmatpush1.msra.mxu0 0.0
  %1746 = vmatprep.subr.mxu0 0.0
  %1747 = vmatpush1.msra.mxu0 0.0
  %1748 = vmatprep.subr.mxu0 0.0
  %1749 = vmatpush1.msra.mxu0 0.0
  %1750 = vmatprep.subr.mxu0 0.0
  %1751 = vmatpush1.msra.mxu0 0.0
  %1752 = vmatprep.subr.mxu0 0.0
  %1753 = vmatpush1.msra.mxu0 0.0
  %1754 = vmatprep.subr.mxu0 0.0
  %1755 = vmatpush1.msra.mxu0 0.0
  %1756 = vmatprep.subr.mxu0 0.0
  %1757 = vmatpush1.msra.mxu0 0.0
  %1758 = vmatprep.subr.mxu0 0.0
  %1759 = vmatpush1.msra.mxu0 0.0
  %1760 = vmatprep.subr.mxu0 0.0
  %1761 = vmatpush1.msra.mxu0 0.0
  %1762 = vmatprep.subr.mxu0 0.0
  %1763 = vmatpush1.msra.mxu0 0.0
  %1764 = vmatprep.subr.mxu0 0.0
  %1765 = vmatpush1.msra.mxu0 0.0
  %1766 = vmatprep.subr.mxu0 0.0
  %1767 = vmatpush1.msra.mxu0 0.0
  %1768 = vmatprep.mubr.f32.mxu0 0.0
  %v1769 = vand.u32 %v1030, 4294901760
  %v1770 = vsub.f32 %v1030, %v1769
  %1771 = vmatmul.mubr.f32.gmra.mrb[0].mxu0 %v1770
  %v1772 = vpop.f32.mrb[0].mxu0
  %v1773 = vadd.f32 %v1693, %v1772
  %v1774 = vpop.f32.mrb[0].mxu0
  %1775 = vdwg.mxu0
  %1776 = vmatprep.subr.mxu0 0.0
  %v1777 = vand.u32 %v22, 4294901760
  %1778 = vmatpush1.msra.mxu0 %v1777
  %1779 = vmatprep.subr.mxu0 0.0
  %v1780 = vand.u32 %v23, 4294901760
  %1781 = vmatpush1.msra.mxu0 %v1780
  %1782 = vmatprep.subr.mxu0 0.0
  %v1783 = vand.u32 %v24, 4294901760
  %1784 = vmatpush1.msra.mxu0 %v1783
  %1785 = vmatprep.subr.mxu0 0.0
  %v1786 = vand.u32 %v25, 4294901760
  %1787 = vmatpush1.msra.mxu0 %v1786
  %1788 = vmatprep.subr.mxu0 0.0
  %1789 = vmatpush1.msra.mxu0 0.0
  %1790 = vmatprep.subr.mxu0 0.0
  %1791 = vmatpush1.msra.mxu0 0.0
  %1792 = vmatprep.subr.mxu0 0.0
  %1793 = vmatpush1.msra.mxu0 0.0
  %1794 = vmatprep.subr.mxu0 0.0
  %1795 = vmatpush1.msra.mxu0 0.0
  %1796 = vmatprep.subr.mxu0 0.0
  %1797 = vmatpush1.msra.mxu0 0.0
  %1798 = vmatprep.subr.mxu0 0.0
  %1799 = vmatpush1.msra.mxu0 0.0
  %1800 = vmatprep.subr.mxu0 0.0
  %1801 = vmatpush1.msra.mxu0 0.0
  %1802 = vmatprep.subr.mxu0 0.0
  %1803 = vmatpush1.msra.mxu0 0.0
  %1804 = vmatprep.subr.mxu0 0.0
  %1805 = vmatpush1.msra.mxu0 0.0
  %1806 = vmatprep.subr.mxu0 0.0
  %1807 = vmatpush1.msra.mxu0 0.0
  %1808 = vmatprep.subr.mxu0 0.0
  %1809 = vmatpush1.msra.mxu0 0.0
  %1810 = vmatprep.subr.mxu0 0.0
  %1811 = vmatpush1.msra.mxu0 0.0
  %1812 = vmatprep.subr.mxu0 0.0
  %1813 = vmatpush1.msra.mxu0 0.0
  %1814 = vmatprep.subr.mxu0 0.0
  %1815 = vmatpush1.msra.mxu0 0.0
  %1816 = vmatprep.subr.mxu0 0.0
  %1817 = vmatpush1.msra.mxu0 0.0
  %1818 = vmatprep.subr.mxu0 0.0
  %1819 = vmatpush1.msra.mxu0 0.0
  %1820 = vmatprep.subr.mxu0 0.0
  %1821 = vmatpush1.msra.mxu0 0.0
  %1822 = vmatprep.subr.mxu0 0.0
  %1823 = vmatpush1.msra.mxu0 0.0
  %1824 = vmatprep.subr.mxu0 0.0
  %1825 = vmatpush1.msra.mxu0 0.0
  %1826 = vmatprep.subr.mxu0 0.0
  %1827 = vmatpush1.msra.mxu0 0.0
  %1828 = vmatprep.subr.mxu0 0.0
  %1829 = vmatpush1.msra.mxu0 0.0
  %1830 = vmatprep.subr.mxu0 0.0
  %1831 = vmatpush1.msra.mxu0 0.0
  %1832 = vmatprep.subr.mxu0 0.0
  %1833 = vmatpush1.msra.mxu0 0.0
  %1834 = vmatprep.subr.mxu0 0.0
  %1835 = vmatpush1.msra.mxu0 0.0
  %1836 = vmatprep.subr.mxu0 0.0
  %1837 = vmatpush1.msra.mxu0 0.0
  %1838 = vmatprep.subr.mxu0 0.0
  %1839 = vmatpush1.msra.mxu0 0.0
  %1840 = vmatprep.subr.mxu0 0.0
  %1841 = vmatpush1.msra.mxu0 0.0
  %1842 = vmatprep.subr.mxu0 0.0
  %1843 = vmatpush1.msra.mxu0 0.0
  %1844 = vmatprep.mubr.f32.mxu0 0.0
  %v1845 = vand.u32 %v1030, 4294901760
  %v1846 = vsub.f32 %v1030, %v1845
  %v1847 = vand.u32 %v1846, 4294901760
  %1848 = vmatmul.mubr.f32.gmra.mrb[0].mxu0 %v1847
  %v1849 = vpop.f32.mrb[0].mxu0
  %v1850 = vadd.f32 %v1773, %v1849
  %v1851 = vpop.f32.mrb[0].mxu0
  %1852 = vdwg.mxu0
  %1853 = vmatprep.subr.mxu0 0.0
  %v1854 = vand.u32 %v22, 4294901760
  %v1855 = vsub.f32 %v22, %v1854
  %v1856 = vand.u32 %v1855, 4294901760
  %1857 = vmatpush1.msra.mxu0 %v1856
  %1858 = vmatprep.subr.mxu0 0.0
  %v1859 = vand.u32 %v23, 4294901760
  %v1860 = vsub.f32 %v23, %v1859
  %v1861 = vand.u32 %v1860, 4294901760
  %1862 = vmatpush1.msra.mxu0 %v1861
  %1863 = vmatprep.subr.mxu0 0.0
  %v1864 = vand.u32 %v24, 4294901760
  %v1865 = vsub.f32 %v24, %v1864
  %v1866 = vand.u32 %v1865, 4294901760
  %1867 = vmatpush1.msra.mxu0 %v1866
  %1868 = vmatprep.subr.mxu0 0.0
  %v1869 = vand.u32 %v25, 4294901760
  %v1870 = vsub.f32 %v25, %v1869
  %v1871 = vand.u32 %v1870, 4294901760
  %1872 = vmatpush1.msra.mxu0 %v1871
  %1873 = vmatprep.subr.mxu0 0.0
  %1874 = vmatpush1.msra.mxu0 0.0
  %1875 = vmatprep.subr.mxu0 0.0
  %1876 = vmatpush1.msra.mxu0 0.0
  %1877 = vmatprep.subr.mxu0 0.0
  %1878 = vmatpush1.msra.mxu0 0.0
  %1879 = vmatprep.subr.mxu0 0.0
  %1880 = vmatpush1.msra.mxu0 0.0
  %1881 = vmatprep.subr.mxu0 0.0
  %1882 = vmatpush1.msra.mxu0 0.0
  %1883 = vmatprep.subr.mxu0 0.0
  %1884 = vmatpush1.msra.mxu0 0.0
  %1885 = vmatprep.subr.mxu0 0.0
  %1886 = vmatpush1.msra.mxu0 0.0
  %1887 = vmatprep.subr.mxu0 0.0
  %1888 = vmatpush1.msra.mxu0 0.0
  %1889 = vmatprep.subr.mxu0 0.0
  %1890 = vmatpush1.msra.mxu0 0.0
  %1891 = vmatprep.subr.mxu0 0.0
  %1892 = vmatpush1.msra.mxu0 0.0
  %1893 = vmatprep.subr.mxu0 0.0
  %1894 = vmatpush1.msra.mxu0 0.0
  %1895 = vmatprep.subr.mxu0 0.0
  %1896 = vmatpush1.msra.mxu0 0.0
  %1897 = vmatprep.subr.mxu0 0.0
  %1898 = vmatpush1.msra.mxu0 0.0
  %1899 = vmatprep.subr.mxu0 0.0
  %1900 = vmatpush1.msra.mxu0 0.0
  %1901 = vmatprep.subr.mxu0 0.0
  %1902 = vmatpush1.msra.mxu0 0.0
  %1903 = vmatprep.subr.mxu0 0.0
  %1904 = vmatpush1.msra.mxu0 0.0
  %1905 = vmatprep.subr.mxu0 0.0
  %1906 = vmatpush1.msra.mxu0 0.0
  %1907 = vmatprep.subr.mxu0 0.0
  %1908 = vmatpush1.msra.mxu0 0.0
  %1909 = vmatprep.subr.mxu0 0.0
  %1910 = vmatpush1.msra.mxu0 0.0
  %1911 = vmatprep.subr.mxu0 0.0
  %1912 = vmatpush1.msra.mxu0 0.0
  %1913 = vmatprep.subr.mxu0 0.0
  %1914 = vmatpush1.msra.mxu0 0.0
  %1915 = vmatprep.subr.mxu0 0.0
  %1916 = vmatpush1.msra.mxu0 0.0
  %1917 = vmatprep.subr.mxu0 0.0
  %1918 = vmatpush1.msra.mxu0 0.0
  %1919 = vmatprep.subr.mxu0 0.0
  %1920 = vmatpush1.msra.mxu0 0.0
  %1921 = vmatprep.subr.mxu0 0.0
  %1922 = vmatpush1.msra.mxu0 0.0
  %1923 = vmatprep.subr.mxu0 0.0
  %1924 = vmatpush1.msra.mxu0 0.0
  %1925 = vmatprep.subr.mxu0 0.0
  %1926 = vmatpush1.msra.mxu0 0.0
  %1927 = vmatprep.subr.mxu0 0.0
  %1928 = vmatpush1.msra.mxu0 0.0
  %1929 = vmatprep.mubr.f32.mxu0 0.0
  %v1930 = vand.u32 %v1030, 4294901760
  %1931 = vmatmul.mubr.f32.gmra.mrb[0].mxu0 %v1930
  %v1932 = vpop.f32.mrb[0].mxu0
  %v1933 = vadd.f32 %v1850, %v1932
  %v1934 = vpop.f32.mrb[0].mxu0
  %1935 = vdwg.mxu0
  %1936 = vmatprep.subr.mxu0 0.0
  %v1937 = vand.u32 %v22, 4294901760
  %1938 = vmatpush1.msra.mxu0 %v1937
  %1939 = vmatprep.subr.mxu0 0.0
  %v1940 = vand.u32 %v23, 4294901760
  %1941 = vmatpush1.msra.mxu0 %v1940
  %1942 = vmatprep.subr.mxu0 0.0
  %v1943 = vand.u32 %v24, 4294901760
  %1944 = vmatpush1.msra.mxu0 %v1943
  %1945 = vmatprep.subr.mxu0 0.0
  %v1946 = vand.u32 %v25, 4294901760
  %1947 = vmatpush1.msra.mxu0 %v1946
  %1948 = vmatprep.subr.mxu0 0.0
  %1949 = vmatpush1.msra.mxu0 0.0
  %1950 = vmatprep.subr.mxu0 0.0
  %1951 = vmatpush1.msra.mxu0 0.0
  %1952 = vmatprep.subr.mxu0 0.0
  %1953 = vmatpush1.msra.mxu0 0.0
  %1954 = vmatprep.subr.mxu0 0.0
  %1955 = vmatpush1.msra.mxu0 0.0
  %1956 = vmatprep.subr.mxu0 0.0
  %1957 = vmatpush1.msra.mxu0 0.0
  %1958 = vmatprep.subr.mxu0 0.0
  %1959 = vmatpush1.msra.mxu0 0.0
  %1960 = vmatprep.subr.mxu0 0.0
  %1961 = vmatpush1.msra.mxu0 0.0
  %1962 = vmatprep.subr.mxu0 0.0
  %1963 = vmatpush1.msra.mxu0 0.0
  %1964 = vmatprep.subr.mxu0 0.0
  %1965 = vmatpush1.msra.mxu0 0.0
  %1966 = vmatprep.subr.mxu0 0.0
  %1967 = vmatpush1.msra.mxu0 0.0
  %1968 = vmatprep.subr.mxu0 0.0
  %1969 = vmatpush1.msra.mxu0 0.0
  %1970 = vmatprep.subr.mxu0 0.0
  %1971 = vmatpush1.msra.mxu0 0.0
  %1972 = vmatprep.subr.mxu0 0.0
  %1973 = vmatpush1.msra.mxu0 0.0
  %1974 = vmatprep.subr.mxu0 0.0
  %1975 = vmatpush1.msra.mxu0 0.0
  %1976 = vmatprep.subr.mxu0 0.0
  %1977 = vmatpush1.msra.mxu0 0.0
  %1978 = vmatprep.subr.mxu0 0.0
  %1979 = vmatpush1.msra.mxu0 0.0
  %1980 = vmatprep.subr.mxu0 0.0
  %1981 = vmatpush1.msra.mxu0 0.0
  %1982 = vmatprep.subr.mxu0 0.0
  %1983 = vmatpush1.msra.mxu0 0.0
  %1984 = vmatprep.subr.mxu0 0.0
  %1985 = vmatpush1.msra.mxu0 0.0
  %1986 = vmatprep.subr.mxu0 0.0
  %1987 = vmatpush1.msra.mxu0 0.0
  %1988 = vmatprep.subr.mxu0 0.0
  %1989 = vmatpush1.msra.mxu0 0.0
  %1990 = vmatprep.subr.mxu0 0.0
  %1991 = vmatpush1.msra.mxu0 0.0
  %1992 = vmatprep.subr.mxu0 0.0
  %1993 = vmatpush1.msra.mxu0 0.0
  %1994 = vmatprep.subr.mxu0 0.0
  %1995 = vmatpush1.msra.mxu0 0.0
  %1996 = vmatprep.subr.mxu0 0.0
  %1997 = vmatpush1.msra.mxu0 0.0
  %1998 = vmatprep.subr.mxu0 0.0
  %1999 = vmatpush1.msra.mxu0 0.0
  %2000 = vmatprep.subr.mxu0 0.0
  %2001 = vmatpush1.msra.mxu0 0.0
  %2002 = vmatprep.subr.mxu0 0.0
  %2003 = vmatpush1.msra.mxu0 0.0
  %2004 = vmatprep.mubr.f32.mxu0 0.0
  %v2005 = vand.u32 %v1030, 4294901760
  %2006 = vmatmul.mubr.f32.gmra.mrb[0].mxu0 %v2005
  %v2007 = vpop.f32.mrb[0].mxu0
  %v2008 = vadd.f32 %v1933, %v2007
  %v2009 = vpop.f32.mrb[0].mxu0
  %2010 = vdwg.mxu0
  %v2011 = vlaneseq
  %v2012 = vshrl.u32 %v2011, 7
  %v2013 = vsub.s32 0, %v2012
  %v2014 = vrot.slane %v35, %v2013
  %v2015 = vmul.f32 %v1521, %v2014
  %v2016 = vadd.f32 %v2015, %v2008
  %v2017 = vmax.f32 %v2016, 0.0
  %v2018 = vadd.f32 %v2017, 1.0
  %v2019 = vrsqrt.pop %v2018
  %v2020 = vmul.f32 %v2018, %v2019
  %v2021 = vlaneseq
  %v2022 = vshrl.u32 %v2021, 7
  %v2023 = vsub.s32 0, %v2022
  %v2024 = vrot.slane %v36, %v2023
  %vm2025 = vcmask 130048
  %v2027 = vsel %vm2025, %v2020, 0
  %2029 = vmatprep.subr.mxu0 0.0
  %v2030 = vand.u32 %v28, 4294901760
  %2031 = vmatpush1.msra.mxu0 %v2030
  %2032 = vmatprep.subr.mxu0 0.0
  %v2033 = vand.u32 %v29, 4294901760
  %2034 = vmatpush1.msra.mxu0 %v2033
  %2035 = vmatprep.subr.mxu0 0.0
  %2036 = vmatpush1.msra.mxu0 0.0
  %2037 = vmatprep.subr.mxu0 0.0
  %2038 = vmatpush1.msra.mxu0 0.0
  %2039 = vmatprep.subr.mxu0 0.0
  %2040 = vmatpush1.msra.mxu0 0.0
  %2041 = vmatprep.subr.mxu0 0.0
  %2042 = vmatpush1.msra.mxu0 0.0
  %2043 = vmatprep.subr.mxu0 0.0
  %2044 = vmatpush1.msra.mxu0 0.0
  %2045 = vmatprep.subr.mxu0 0.0
  %2046 = vmatpush1.msra.mxu0 0.0
  %2047 = vmatprep.subr.mxu0 0.0
  %2048 = vmatpush1.msra.mxu0 0.0
  %2049 = vmatprep.subr.mxu0 0.0
  %2050 = vmatpush1.msra.mxu0 0.0
  %2051 = vmatprep.subr.mxu0 0.0
  %2052 = vmatpush1.msra.mxu0 0.0
  %2053 = vmatprep.subr.mxu0 0.0
  %2054 = vmatpush1.msra.mxu0 0.0
  %2055 = vmatprep.subr.mxu0 0.0
  %2056 = vmatpush1.msra.mxu0 0.0
  %2057 = vmatprep.subr.mxu0 0.0
  %2058 = vmatpush1.msra.mxu0 0.0
  %2059 = vmatprep.subr.mxu0 0.0
  %2060 = vmatpush1.msra.mxu0 0.0
  %2061 = vmatprep.subr.mxu0 0.0
  %2062 = vmatpush1.msra.mxu0 0.0
  %2063 = vmatprep.subr.mxu0 0.0
  %2064 = vmatpush1.msra.mxu0 0.0
  %2065 = vmatprep.subr.mxu0 0.0
  %2066 = vmatpush1.msra.mxu0 0.0
  %2067 = vmatprep.subr.mxu0 0.0
  %2068 = vmatpush1.msra.mxu0 0.0
  %2069 = vmatprep.subr.mxu0 0.0
  %2070 = vmatpush1.msra.mxu0 0.0
  %2071 = vmatprep.subr.mxu0 0.0
  %2072 = vmatpush1.msra.mxu0 0.0
  %2073 = vmatprep.subr.mxu0 0.0
  %2074 = vmatpush1.msra.mxu0 0.0
  %2075 = vmatprep.subr.mxu0 0.0
  %2076 = vmatpush1.msra.mxu0 0.0
  %2077 = vmatprep.subr.mxu0 0.0
  %2078 = vmatpush1.msra.mxu0 0.0
  %2079 = vmatprep.subr.mxu0 0.0
  %2080 = vmatpush1.msra.mxu0 0.0
  %2081 = vmatprep.subr.mxu0 0.0
  %2082 = vmatpush1.msra.mxu0 0.0
  %2083 = vmatprep.subr.mxu0 0.0
  %2084 = vmatpush1.msra.mxu0 0.0
  %2085 = vmatprep.subr.mxu0 0.0
  %2086 = vmatpush1.msra.mxu0 0.0
  %2087 = vmatprep.subr.mxu0 0.0
  %2088 = vmatpush1.msra.mxu0 0.0
  %2089 = vmatprep.subr.mxu0 0.0
  %2090 = vmatpush1.msra.mxu0 0.0
  %2091 = vmatprep.subr.mxu0 0.0
  %2092 = vmatpush1.msra.mxu0 0.0
  %2093 = vmatprep.subr.mxu0 0.0
  %2094 = vmatpush1.msra.mxu0 0.0
  %2095 = vmatprep.mubr.f32.mxu0 0.0
  %v2096 = vand.u32 %v2027, 4294901760
  %v2097 = vsub.f32 %v2027, %v2096
  %v2098 = vand.u32 %v2097, 4294901760
  %v2099 = vsub.f32 %v2097, %v2098
  %v2100 = vand.u32 %v2099, 4294901760
  %2101 = vmatmul.mubr.f32.gmra.mrb[0].mxu0 %v2100
  %v2102 = vpop.f32.mrb[0].mxu0
  %v2103 = vadd.f32 %v2024, %v2102
  %v2104 = vpop.f32.mrb[0].mxu0
  %2105 = vdwg.mxu0
  %2106 = vmatprep.subr.mxu0 0.0
  %v2107 = vand.u32 %v28, 4294901760
  %v2108 = vsub.f32 %v28, %v2107
  %v2109 = vand.u32 %v2108, 4294901760
  %v2110 = vsub.f32 %v2108, %v2109
  %v2111 = vand.u32 %v2110, 4294901760
  %2112 = vmatpush1.msra.mxu0 %v2111
  %2113 = vmatprep.subr.mxu0 0.0
  %v2114 = vand.u32 %v29, 4294901760
  %v2115 = vsub.f32 %v29, %v2114
  %v2116 = vand.u32 %v2115, 4294901760
  %v2117 = vsub.f32 %v2115, %v2116
  %v2118 = vand.u32 %v2117, 4294901760
  %2119 = vmatpush1.msra.mxu0 %v2118
  %2120 = vmatprep.subr.mxu0 0.0
  %2121 = vmatpush1.msra.mxu0 0.0
  %2122 = vmatprep.subr.mxu0 0.0
  %2123 = vmatpush1.msra.mxu0 0.0
  %2124 = vmatprep.subr.mxu0 0.0
  %2125 = vmatpush1.msra.mxu0 0.0
  %2126 = vmatprep.subr.mxu0 0.0
  %2127 = vmatpush1.msra.mxu0 0.0
  %2128 = vmatprep.subr.mxu0 0.0
  %2129 = vmatpush1.msra.mxu0 0.0
  %2130 = vmatprep.subr.mxu0 0.0
  %2131 = vmatpush1.msra.mxu0 0.0
  %2132 = vmatprep.subr.mxu0 0.0
  %2133 = vmatpush1.msra.mxu0 0.0
  %2134 = vmatprep.subr.mxu0 0.0
  %2135 = vmatpush1.msra.mxu0 0.0
  %2136 = vmatprep.subr.mxu0 0.0
  %2137 = vmatpush1.msra.mxu0 0.0
  %2138 = vmatprep.subr.mxu0 0.0
  %2139 = vmatpush1.msra.mxu0 0.0
  %2140 = vmatprep.subr.mxu0 0.0
  %2141 = vmatpush1.msra.mxu0 0.0
  %2142 = vmatprep.subr.mxu0 0.0
  %2143 = vmatpush1.msra.mxu0 0.0
  %2144 = vmatprep.subr.mxu0 0.0
  %2145 = vmatpush1.msra.mxu0 0.0
  %2146 = vmatprep.subr.mxu0 0.0
  %2147 = vmatpush1.msra.mxu0 0.0
  %2148 = vmatprep.subr.mxu0 0.0
  %2149 = vmatpush1.msra.mxu0 0.0
  %2150 = vmatprep.subr.mxu0 0.0
  %2151 = vmatpush1.msra.mxu0 0.0
  %2152 = vmatprep.subr.mxu0 0.0
  %2153 = vmatpush1.msra.mxu0 0.0
  %2154 = vmatprep.subr.mxu0 0.0
  %2155 = vmatpush1.msra.mxu0 0.0
  %2156 = vmatprep.subr.mxu0 0.0
  %2157 = vmatpush1.msra.mxu0 0.0
  %2158 = vmatprep.subr.mxu0 0.0
  %2159 = vmatpush1.msra.mxu0 0.0
  %2160 = vmatprep.subr.mxu0 0.0
  %2161 = vmatpush1.msra.mxu0 0.0
  %2162 = vmatprep.subr.mxu0 0.0
  %2163 = vmatpush1.msra.mxu0 0.0
  %2164 = vmatprep.subr.mxu0 0.0
  %2165 = vmatpush1.msra.mxu0 0.0
  %2166 = vmatprep.subr.mxu0 0.0
  %2167 = vmatpush1.msra.mxu0 0.0
  %2168 = vmatprep.subr.mxu0 0.0
  %2169 = vmatpush1.msra.mxu0 0.0
  %2170 = vmatprep.subr.mxu0 0.0
  %2171 = vmatpush1.msra.mxu0 0.0
  %2172 = vmatprep.subr.mxu0 0.0
  %2173 = vmatpush1.msra.mxu0 0.0
  %2174 = vmatprep.subr.mxu0 0.0
  %2175 = vmatpush1.msra.mxu0 0.0
  %2176 = vmatprep.subr.mxu0 0.0
  %2177 = vmatpush1.msra.mxu0 0.0
  %2178 = vmatprep.subr.mxu0 0.0
  %2179 = vmatpush1.msra.mxu0 0.0
  %2180 = vmatprep.mubr.f32.mxu0 0.0
  %v2181 = vand.u32 %v2027, 4294901760
  %2182 = vmatmul.mubr.f32.gmra.mrb[0].mxu0 %v2181
  %v2183 = vpop.f32.mrb[0].mxu0
  %v2184 = vadd.f32 %v2103, %v2183
  %v2185 = vpop.f32.mrb[0].mxu0
  %2186 = vdwg.mxu0
  %2187 = vmatprep.subr.mxu0 0.0
  %v2188 = vand.u32 %v28, 4294901760
  %v2189 = vsub.f32 %v28, %v2188
  %2190 = vmatpush1.msra.mxu0 %v2189
  %2191 = vmatprep.subr.mxu0 0.0
  %v2192 = vand.u32 %v29, 4294901760
  %v2193 = vsub.f32 %v29, %v2192
  %2194 = vmatpush1.msra.mxu0 %v2193
  %2195 = vmatprep.subr.mxu0 0.0
  %2196 = vmatpush1.msra.mxu0 0.0
  %2197 = vmatprep.subr.mxu0 0.0
  %2198 = vmatpush1.msra.mxu0 0.0
  %2199 = vmatprep.subr.mxu0 0.0
  %2200 = vmatpush1.msra.mxu0 0.0
  %2201 = vmatprep.subr.mxu0 0.0
  %2202 = vmatpush1.msra.mxu0 0.0
  %2203 = vmatprep.subr.mxu0 0.0
  %2204 = vmatpush1.msra.mxu0 0.0
  %2205 = vmatprep.subr.mxu0 0.0
  %2206 = vmatpush1.msra.mxu0 0.0
  %2207 = vmatprep.subr.mxu0 0.0
  %2208 = vmatpush1.msra.mxu0 0.0
  %2209 = vmatprep.subr.mxu0 0.0
  %2210 = vmatpush1.msra.mxu0 0.0
  %2211 = vmatprep.subr.mxu0 0.0
  %2212 = vmatpush1.msra.mxu0 0.0
  %2213 = vmatprep.subr.mxu0 0.0
  %2214 = vmatpush1.msra.mxu0 0.0
  %2215 = vmatprep.subr.mxu0 0.0
  %2216 = vmatpush1.msra.mxu0 0.0
  %2217 = vmatprep.subr.mxu0 0.0
  %2218 = vmatpush1.msra.mxu0 0.0
  %2219 = vmatprep.subr.mxu0 0.0
  %2220 = vmatpush1.msra.mxu0 0.0
  %2221 = vmatprep.subr.mxu0 0.0
  %2222 = vmatpush1.msra.mxu0 0.0
  %2223 = vmatprep.subr.mxu0 0.0
  %2224 = vmatpush1.msra.mxu0 0.0
  %2225 = vmatprep.subr.mxu0 0.0
  %2226 = vmatpush1.msra.mxu0 0.0
  %2227 = vmatprep.subr.mxu0 0.0
  %2228 = vmatpush1.msra.mxu0 0.0
  %2229 = vmatprep.subr.mxu0 0.0
  %2230 = vmatpush1.msra.mxu0 0.0
  %2231 = vmatprep.subr.mxu0 0.0
  %2232 = vmatpush1.msra.mxu0 0.0
  %2233 = vmatprep.subr.mxu0 0.0
  %2234 = vmatpush1.msra.mxu0 0.0
  %2235 = vmatprep.subr.mxu0 0.0
  %2236 = vmatpush1.msra.mxu0 0.0
  %2237 = vmatprep.subr.mxu0 0.0
  %2238 = vmatpush1.msra.mxu0 0.0
  %2239 = vmatprep.subr.mxu0 0.0
  %2240 = vmatpush1.msra.mxu0 0.0
  %2241 = vmatprep.subr.mxu0 0.0
  %2242 = vmatpush1.msra.mxu0 0.0
  %2243 = vmatprep.subr.mxu0 0.0
  %2244 = vmatpush1.msra.mxu0 0.0
  %2245 = vmatprep.subr.mxu0 0.0
  %2246 = vmatpush1.msra.mxu0 0.0
  %2247 = vmatprep.subr.mxu0 0.0
  %2248 = vmatpush1.msra.mxu0 0.0
  %2249 = vmatprep.subr.mxu0 0.0
  %2250 = vmatpush1.msra.mxu0 0.0
  %2251 = vmatprep.subr.mxu0 0.0
  %2252 = vmatpush1.msra.mxu0 0.0
  %2253 = vmatprep.subr.mxu0 0.0
  %2254 = vmatpush1.msra.mxu0 0.0
  %2255 = vmatprep.mubr.f32.mxu0 0.0
  %v2256 = vand.u32 %v2027, 4294901760
  %v2257 = vsub.f32 %v2027, %v2256
  %2258 = vmatmul.mubr.f32.gmra.mrb[0].mxu0 %v2257
  %v2259 = vpop.f32.mrb[0].mxu0
  %v2260 = vadd.f32 %v2184, %v2259
  %v2261 = vpop.f32.mrb[0].mxu0
  %2262 = vdwg.mxu0
  %2263 = vmatprep.subr.mxu0 0.0
  %v2264 = vand.u32 %v28, 4294901760
  %2265 = vmatpush1.msra.mxu0 %v2264
  %2266 = vmatprep.subr.mxu0 0.0
  %v2267 = vand.u32 %v29, 4294901760
  %2268 = vmatpush1.msra.mxu0 %v2267
  %2269 = vmatprep.subr.mxu0 0.0
  %2270 = vmatpush1.msra.mxu0 0.0
  %2271 = vmatprep.subr.mxu0 0.0
  %2272 = vmatpush1.msra.mxu0 0.0
  %2273 = vmatprep.subr.mxu0 0.0
  %2274 = vmatpush1.msra.mxu0 0.0
  %2275 = vmatprep.subr.mxu0 0.0
  %2276 = vmatpush1.msra.mxu0 0.0
  %2277 = vmatprep.subr.mxu0 0.0
  %2278 = vmatpush1.msra.mxu0 0.0
  %2279 = vmatprep.subr.mxu0 0.0
  %2280 = vmatpush1.msra.mxu0 0.0
  %2281 = vmatprep.subr.mxu0 0.0
  %2282 = vmatpush1.msra.mxu0 0.0
  %2283 = vmatprep.subr.mxu0 0.0
  %2284 = vmatpush1.msra.mxu0 0.0
  %2285 = vmatprep.subr.mxu0 0.0
  %2286 = vmatpush1.msra.mxu0 0.0
  %2287 = vmatprep.subr.mxu0 0.0
  %2288 = vmatpush1.msra.mxu0 0.0
  %2289 = vmatprep.subr.mxu0 0.0
  %2290 = vmatpush1.msra.mxu0 0.0
  %2291 = vmatprep.subr.mxu0 0.0
  %2292 = vmatpush1.msra.mxu0 0.0
  %2293 = vmatprep.subr.mxu0 0.0
  %2294 = vmatpush1.msra.mxu0 0.0
  %2295 = vmatprep.subr.mxu0 0.0
  %2296 = vmatpush1.msra.mxu0 0.0
  %2297 = vmatprep.subr.mxu0 0.0
  %2298 = vmatpush1.msra.mxu0 0.0
  %2299 = vmatprep.subr.mxu0 0.0
  %2300 = vmatpush1.msra.mxu0 0.0
  %2301 = vmatprep.subr.mxu0 0.0
  %2302 = vmatpush1.msra.mxu0 0.0
  %2303 = vmatprep.subr.mxu0 0.0
  %2304 = vmatpush1.msra.mxu0 0.0
  %2305 = vmatprep.subr.mxu0 0.0
  %2306 = vmatpush1.msra.mxu0 0.0
  %2307 = vmatprep.subr.mxu0 0.0
  %2308 = vmatpush1.msra.mxu0 0.0
  %2309 = vmatprep.subr.mxu0 0.0
  %2310 = vmatpush1.msra.mxu0 0.0
  %2311 = vmatprep.subr.mxu0 0.0
  %2312 = vmatpush1.msra.mxu0 0.0
  %2313 = vmatprep.subr.mxu0 0.0
  %2314 = vmatpush1.msra.mxu0 0.0
  %2315 = vmatprep.subr.mxu0 0.0
  %2316 = vmatpush1.msra.mxu0 0.0
  %2317 = vmatprep.subr.mxu0 0.0
  %2318 = vmatpush1.msra.mxu0 0.0
  %2319 = vmatprep.subr.mxu0 0.0
  %2320 = vmatpush1.msra.mxu0 0.0
  %2321 = vmatprep.subr.mxu0 0.0
  %2322 = vmatpush1.msra.mxu0 0.0
  %2323 = vmatprep.subr.mxu0 0.0
  %2324 = vmatpush1.msra.mxu0 0.0
  %2325 = vmatprep.subr.mxu0 0.0
  %2326 = vmatpush1.msra.mxu0 0.0
  %2327 = vmatprep.subr.mxu0 0.0
  %2328 = vmatpush1.msra.mxu0 0.0
  %2329 = vmatprep.mubr.f32.mxu0 0.0
  %v2330 = vand.u32 %v2027, 4294901760
  %v2331 = vsub.f32 %v2027, %v2330
  %v2332 = vand.u32 %v2331, 4294901760
  %2333 = vmatmul.mubr.f32.gmra.mrb[0].mxu0 %v2332
  %v2334 = vpop.f32.mrb[0].mxu0
  %v2335 = vadd.f32 %v2260, %v2334
  %v2336 = vpop.f32.mrb[0].mxu0
  %2337 = vdwg.mxu0
  %2338 = vmatprep.subr.mxu0 0.0
  %v2339 = vand.u32 %v28, 4294901760
  %v2340 = vsub.f32 %v28, %v2339
  %v2341 = vand.u32 %v2340, 4294901760
  %2342 = vmatpush1.msra.mxu0 %v2341
  %2343 = vmatprep.subr.mxu0 0.0
  %v2344 = vand.u32 %v29, 4294901760
  %v2345 = vsub.f32 %v29, %v2344
  %v2346 = vand.u32 %v2345, 4294901760
  %2347 = vmatpush1.msra.mxu0 %v2346
  %2348 = vmatprep.subr.mxu0 0.0
  %2349 = vmatpush1.msra.mxu0 0.0
  %2350 = vmatprep.subr.mxu0 0.0
  %2351 = vmatpush1.msra.mxu0 0.0
  %2352 = vmatprep.subr.mxu0 0.0
  %2353 = vmatpush1.msra.mxu0 0.0
  %2354 = vmatprep.subr.mxu0 0.0
  %2355 = vmatpush1.msra.mxu0 0.0
  %2356 = vmatprep.subr.mxu0 0.0
  %2357 = vmatpush1.msra.mxu0 0.0
  %2358 = vmatprep.subr.mxu0 0.0
  %2359 = vmatpush1.msra.mxu0 0.0
  %2360 = vmatprep.subr.mxu0 0.0
  %2361 = vmatpush1.msra.mxu0 0.0
  %2362 = vmatprep.subr.mxu0 0.0
  %2363 = vmatpush1.msra.mxu0 0.0
  %2364 = vmatprep.subr.mxu0 0.0
  %2365 = vmatpush1.msra.mxu0 0.0
  %2366 = vmatprep.subr.mxu0 0.0
  %2367 = vmatpush1.msra.mxu0 0.0
  %2368 = vmatprep.subr.mxu0 0.0
  %2369 = vmatpush1.msra.mxu0 0.0
  %2370 = vmatprep.subr.mxu0 0.0
  %2371 = vmatpush1.msra.mxu0 0.0
  %2372 = vmatprep.subr.mxu0 0.0
  %2373 = vmatpush1.msra.mxu0 0.0
  %2374 = vmatprep.subr.mxu0 0.0
  %2375 = vmatpush1.msra.mxu0 0.0
  %2376 = vmatprep.subr.mxu0 0.0
  %2377 = vmatpush1.msra.mxu0 0.0
  %2378 = vmatprep.subr.mxu0 0.0
  %2379 = vmatpush1.msra.mxu0 0.0
  %2380 = vmatprep.subr.mxu0 0.0
  %2381 = vmatpush1.msra.mxu0 0.0
  %2382 = vmatprep.subr.mxu0 0.0
  %2383 = vmatpush1.msra.mxu0 0.0
  %2384 = vmatprep.subr.mxu0 0.0
  %2385 = vmatpush1.msra.mxu0 0.0
  %2386 = vmatprep.subr.mxu0 0.0
  %2387 = vmatpush1.msra.mxu0 0.0
  %2388 = vmatprep.subr.mxu0 0.0
  %2389 = vmatpush1.msra.mxu0 0.0
  %2390 = vmatprep.subr.mxu0 0.0
  %2391 = vmatpush1.msra.mxu0 0.0
  %2392 = vmatprep.subr.mxu0 0.0
  %2393 = vmatpush1.msra.mxu0 0.0
  %2394 = vmatprep.subr.mxu0 0.0
  %2395 = vmatpush1.msra.mxu0 0.0
  %2396 = vmatprep.subr.mxu0 0.0
  %2397 = vmatpush1.msra.mxu0 0.0
  %2398 = vmatprep.subr.mxu0 0.0
  %2399 = vmatpush1.msra.mxu0 0.0
  %2400 = vmatprep.subr.mxu0 0.0
  %2401 = vmatpush1.msra.mxu0 0.0
  %2402 = vmatprep.subr.mxu0 0.0
  %2403 = vmatpush1.msra.mxu0 0.0
  %2404 = vmatprep.subr.mxu0 0.0
  %2405 = vmatpush1.msra.mxu0 0.0
  %2406 = vmatprep.subr.mxu0 0.0
  %2407 = vmatpush1.msra.mxu0 0.0
  %2408 = vmatprep.mubr.f32.mxu0 0.0
  %v2409 = vand.u32 %v2027, 4294901760
  %2410 = vmatmul.mubr.f32.gmra.mrb[0].mxu0 %v2409
  %v2411 = vpop.f32.mrb[0].mxu0
  %v2412 = vadd.f32 %v2335, %v2411
  %v2413 = vpop.f32.mrb[0].mxu0
  %2414 = vdwg.mxu0
  %2415 = vmatprep.subr.mxu0 0.0
  %v2416 = vand.u32 %v28, 4294901760
  %2417 = vmatpush1.msra.mxu0 %v2416
  %2418 = vmatprep.subr.mxu0 0.0
  %v2419 = vand.u32 %v29, 4294901760
  %2420 = vmatpush1.msra.mxu0 %v2419
  %2421 = vmatprep.subr.mxu0 0.0
  %2422 = vmatpush1.msra.mxu0 0.0
  %2423 = vmatprep.subr.mxu0 0.0
  %2424 = vmatpush1.msra.mxu0 0.0
  %2425 = vmatprep.subr.mxu0 0.0
  %2426 = vmatpush1.msra.mxu0 0.0
  %2427 = vmatprep.subr.mxu0 0.0
  %2428 = vmatpush1.msra.mxu0 0.0
  %2429 = vmatprep.subr.mxu0 0.0
  %2430 = vmatpush1.msra.mxu0 0.0
  %2431 = vmatprep.subr.mxu0 0.0
  %2432 = vmatpush1.msra.mxu0 0.0
  %2433 = vmatprep.subr.mxu0 0.0
  %2434 = vmatpush1.msra.mxu0 0.0
  %2435 = vmatprep.subr.mxu0 0.0
  %2436 = vmatpush1.msra.mxu0 0.0
  %2437 = vmatprep.subr.mxu0 0.0
  %2438 = vmatpush1.msra.mxu0 0.0
  %2439 = vmatprep.subr.mxu0 0.0
  %2440 = vmatpush1.msra.mxu0 0.0
  %2441 = vmatprep.subr.mxu0 0.0
  %2442 = vmatpush1.msra.mxu0 0.0
  %2443 = vmatprep.subr.mxu0 0.0
  %2444 = vmatpush1.msra.mxu0 0.0
  %2445 = vmatprep.subr.mxu0 0.0
  %2446 = vmatpush1.msra.mxu0 0.0
  %2447 = vmatprep.subr.mxu0 0.0
  %2448 = vmatpush1.msra.mxu0 0.0
  %2449 = vmatprep.subr.mxu0 0.0
  %2450 = vmatpush1.msra.mxu0 0.0
  %2451 = vmatprep.subr.mxu0 0.0
  %2452 = vmatpush1.msra.mxu0 0.0
  %2453 = vmatprep.subr.mxu0 0.0
  %2454 = vmatpush1.msra.mxu0 0.0
  %2455 = vmatprep.subr.mxu0 0.0
  %2456 = vmatpush1.msra.mxu0 0.0
  %2457 = vmatprep.subr.mxu0 0.0
  %2458 = vmatpush1.msra.mxu0 0.0
  %2459 = vmatprep.subr.mxu0 0.0
  %2460 = vmatpush1.msra.mxu0 0.0
  %2461 = vmatprep.subr.mxu0 0.0
  %2462 = vmatpush1.msra.mxu0 0.0
  %2463 = vmatprep.subr.mxu0 0.0
  %2464 = vmatpush1.msra.mxu0 0.0
  %2465 = vmatprep.subr.mxu0 0.0
  %2466 = vmatpush1.msra.mxu0 0.0
  %2467 = vmatprep.subr.mxu0 0.0
  %2468 = vmatpush1.msra.mxu0 0.0
  %2469 = vmatprep.subr.mxu0 0.0
  %2470 = vmatpush1.msra.mxu0 0.0
  %2471 = vmatprep.subr.mxu0 0.0
  %2472 = vmatpush1.msra.mxu0 0.0
  %2473 = vmatprep.subr.mxu0 0.0
  %2474 = vmatpush1.msra.mxu0 0.0
  %2475 = vmatprep.subr.mxu0 0.0
  %2476 = vmatpush1.msra.mxu0 0.0
  %2477 = vmatprep.subr.mxu0 0.0
  %2478 = vmatpush1.msra.mxu0 0.0
  %2479 = vmatprep.subr.mxu0 0.0
  %2480 = vmatpush1.msra.mxu0 0.0
  %2481 = vmatprep.mubr.f32.mxu0 0.0
  %v2482 = vand.u32 %v2027, 4294901760
  %2483 = vmatmul.mubr.f32.gmra.mrb[0].mxu0 %v2482
  %v2484 = vpop.f32.mrb[0].mxu0
  %v2485 = vadd.f32 %v2412, %v2484
  %v2486 = vpop.f32.mrb[0].mxu0
  %2487 = vdwg.mxu0
  %v2488 = vtanh.pop %v2485
  %v2489 = vmul.f32 %v2488, %v2488
  %v2490 = vsub.f32 1.0, %v2489
  %v2492 = vsel %vm2025, %v2019, 0
  %2494 = vmatprep.subr.mxu0 0.0
  %v2495 = vand.u32 %v26, 4294901760
  %2496 = vmatpush1.msra.mxu0 %v2495
  %2497 = vmatprep.subr.mxu0 0.0
  %v2498 = vand.u32 %v27, 4294901760
  %2499 = vmatpush1.msra.mxu0 %v2498
  %2500 = vmatprep.subr.mxu0 0.0
  %2501 = vmatpush1.msra.mxu0 0.0
  %2502 = vmatprep.subr.mxu0 0.0
  %2503 = vmatpush1.msra.mxu0 0.0
  %2504 = vmatprep.subr.mxu0 0.0
  %2505 = vmatpush1.msra.mxu0 0.0
  %2506 = vmatprep.subr.mxu0 0.0
  %2507 = vmatpush1.msra.mxu0 0.0
  %2508 = vmatprep.subr.mxu0 0.0
  %2509 = vmatpush1.msra.mxu0 0.0
  %2510 = vmatprep.subr.mxu0 0.0
  %2511 = vmatpush1.msra.mxu0 0.0
  %2512 = vmatprep.subr.mxu0 0.0
  %2513 = vmatpush1.msra.mxu0 0.0
  %2514 = vmatprep.subr.mxu0 0.0
  %2515 = vmatpush1.msra.mxu0 0.0
  %2516 = vmatprep.subr.mxu0 0.0
  %2517 = vmatpush1.msra.mxu0 0.0
  %2518 = vmatprep.subr.mxu0 0.0
  %2519 = vmatpush1.msra.mxu0 0.0
  %2520 = vmatprep.subr.mxu0 0.0
  %2521 = vmatpush1.msra.mxu0 0.0
  %2522 = vmatprep.subr.mxu0 0.0
  %2523 = vmatpush1.msra.mxu0 0.0
  %2524 = vmatprep.subr.mxu0 0.0
  %2525 = vmatpush1.msra.mxu0 0.0
  %2526 = vmatprep.subr.mxu0 0.0
  %2527 = vmatpush1.msra.mxu0 0.0
  %2528 = vmatprep.subr.mxu0 0.0
  %2529 = vmatpush1.msra.mxu0 0.0
  %2530 = vmatprep.subr.mxu0 0.0
  %2531 = vmatpush1.msra.mxu0 0.0
  %2532 = vmatprep.subr.mxu0 0.0
  %2533 = vmatpush1.msra.mxu0 0.0
  %2534 = vmatprep.subr.mxu0 0.0
  %2535 = vmatpush1.msra.mxu0 0.0
  %2536 = vmatprep.subr.mxu0 0.0
  %2537 = vmatpush1.msra.mxu0 0.0
  %2538 = vmatprep.subr.mxu0 0.0
  %2539 = vmatpush1.msra.mxu0 0.0
  %2540 = vmatprep.subr.mxu0 0.0
  %2541 = vmatpush1.msra.mxu0 0.0
  %2542 = vmatprep.subr.mxu0 0.0
  %2543 = vmatpush1.msra.mxu0 0.0
  %2544 = vmatprep.subr.mxu0 0.0
  %2545 = vmatpush1.msra.mxu0 0.0
  %2546 = vmatprep.subr.mxu0 0.0
  %2547 = vmatpush1.msra.mxu0 0.0
  %2548 = vmatprep.subr.mxu0 0.0
  %2549 = vmatpush1.msra.mxu0 0.0
  %2550 = vmatprep.subr.mxu0 0.0
  %2551 = vmatpush1.msra.mxu0 0.0
  %2552 = vmatprep.subr.mxu0 0.0
  %2553 = vmatpush1.msra.mxu0 0.0
  %2554 = vmatprep.subr.mxu0 0.0
  %2555 = vmatpush1.msra.mxu0 0.0
  %2556 = vmatprep.subr.mxu0 0.0
  %2557 = vmatpush1.msra.mxu0 0.0
  %2558 = vmatprep.subr.mxu0 0.0
  %2559 = vmatpush1.msra.mxu0 0.0
  %2560 = vmatprep.mubr.f32.mxu0 0.0
  %v2561 = vand.u32 %v2492, 4294901760
  %v2562 = vsub.f32 %v2492, %v2561
  %v2563 = vand.u32 %v2562, 4294901760
  %v2564 = vsub.f32 %v2562, %v2563
  %v2565 = vand.u32 %v2564, 4294901760
  %2566 = vmatmul.mubr.f32.gmra.mrb[0].mxu0 %v2565
  %v2567 = vpop.f32.mrb[0].mxu0
  %v2568 = vadd.f32 0.0, %v2567
  %v2569 = vpop.f32.mrb[0].mxu0
  %2570 = vdwg.mxu0
  %2571 = vmatprep.subr.mxu0 0.0
  %v2572 = vand.u32 %v26, 4294901760
  %v2573 = vsub.f32 %v26, %v2572
  %v2574 = vand.u32 %v2573, 4294901760
  %v2575 = vsub.f32 %v2573, %v2574
  %v2576 = vand.u32 %v2575, 4294901760
  %2577 = vmatpush1.msra.mxu0 %v2576
  %2578 = vmatprep.subr.mxu0 0.0
  %v2579 = vand.u32 %v27, 4294901760
  %v2580 = vsub.f32 %v27, %v2579
  %v2581 = vand.u32 %v2580, 4294901760
  %v2582 = vsub.f32 %v2580, %v2581
  %v2583 = vand.u32 %v2582, 4294901760
  %2584 = vmatpush1.msra.mxu0 %v2583
  %2585 = vmatprep.subr.mxu0 0.0
  %2586 = vmatpush1.msra.mxu0 0.0
  %2587 = vmatprep.subr.mxu0 0.0
  %2588 = vmatpush1.msra.mxu0 0.0
  %2589 = vmatprep.subr.mxu0 0.0
  %2590 = vmatpush1.msra.mxu0 0.0
  %2591 = vmatprep.subr.mxu0 0.0
  %2592 = vmatpush1.msra.mxu0 0.0
  %2593 = vmatprep.subr.mxu0 0.0
  %2594 = vmatpush1.msra.mxu0 0.0
  %2595 = vmatprep.subr.mxu0 0.0
  %2596 = vmatpush1.msra.mxu0 0.0
  %2597 = vmatprep.subr.mxu0 0.0
  %2598 = vmatpush1.msra.mxu0 0.0
  %2599 = vmatprep.subr.mxu0 0.0
  %2600 = vmatpush1.msra.mxu0 0.0
  %2601 = vmatprep.subr.mxu0 0.0
  %2602 = vmatpush1.msra.mxu0 0.0
  %2603 = vmatprep.subr.mxu0 0.0
  %2604 = vmatpush1.msra.mxu0 0.0
  %2605 = vmatprep.subr.mxu0 0.0
  %2606 = vmatpush1.msra.mxu0 0.0
  %2607 = vmatprep.subr.mxu0 0.0
  %2608 = vmatpush1.msra.mxu0 0.0
  %2609 = vmatprep.subr.mxu0 0.0
  %2610 = vmatpush1.msra.mxu0 0.0
  %2611 = vmatprep.subr.mxu0 0.0
  %2612 = vmatpush1.msra.mxu0 0.0
  %2613 = vmatprep.subr.mxu0 0.0
  %2614 = vmatpush1.msra.mxu0 0.0
  %2615 = vmatprep.subr.mxu0 0.0
  %2616 = vmatpush1.msra.mxu0 0.0
  %2617 = vmatprep.subr.mxu0 0.0
  %2618 = vmatpush1.msra.mxu0 0.0
  %2619 = vmatprep.subr.mxu0 0.0
  %2620 = vmatpush1.msra.mxu0 0.0
  %2621 = vmatprep.subr.mxu0 0.0
  %2622 = vmatpush1.msra.mxu0 0.0
  %2623 = vmatprep.subr.mxu0 0.0
  %2624 = vmatpush1.msra.mxu0 0.0
  %2625 = vmatprep.subr.mxu0 0.0
  %2626 = vmatpush1.msra.mxu0 0.0
  %2627 = vmatprep.subr.mxu0 0.0
  %2628 = vmatpush1.msra.mxu0 0.0
  %2629 = vmatprep.subr.mxu0 0.0
  %2630 = vmatpush1.msra.mxu0 0.0
  %2631 = vmatprep.subr.mxu0 0.0
  %2632 = vmatpush1.msra.mxu0 0.0
  %2633 = vmatprep.subr.mxu0 0.0
  %2634 = vmatpush1.msra.mxu0 0.0
  %2635 = vmatprep.subr.mxu0 0.0
  %2636 = vmatpush1.msra.mxu0 0.0
  %2637 = vmatprep.subr.mxu0 0.0
  %2638 = vmatpush1.msra.mxu0 0.0
  %2639 = vmatprep.subr.mxu0 0.0
  %2640 = vmatpush1.msra.mxu0 0.0
  %2641 = vmatprep.subr.mxu0 0.0
  %2642 = vmatpush1.msra.mxu0 0.0
  %2643 = vmatprep.subr.mxu0 0.0
  %2644 = vmatpush1.msra.mxu0 0.0
  %2645 = vmatprep.mubr.f32.mxu0 0.0
  %v2646 = vand.u32 %v2492, 4294901760
  %2647 = vmatmul.mubr.f32.gmra.mrb[0].mxu0 %v2646
  %v2648 = vpop.f32.mrb[0].mxu0
  %v2649 = vadd.f32 %v2568, %v2648
  %v2650 = vpop.f32.mrb[0].mxu0
  %2651 = vdwg.mxu0
  %2652 = vmatprep.subr.mxu0 0.0
  %v2653 = vand.u32 %v26, 4294901760
  %v2654 = vsub.f32 %v26, %v2653
  %2655 = vmatpush1.msra.mxu0 %v2654
  %2656 = vmatprep.subr.mxu0 0.0
  %v2657 = vand.u32 %v27, 4294901760
  %v2658 = vsub.f32 %v27, %v2657
  %2659 = vmatpush1.msra.mxu0 %v2658
  %2660 = vmatprep.subr.mxu0 0.0
  %2661 = vmatpush1.msra.mxu0 0.0
  %2662 = vmatprep.subr.mxu0 0.0
  %2663 = vmatpush1.msra.mxu0 0.0
  %2664 = vmatprep.subr.mxu0 0.0
  %2665 = vmatpush1.msra.mxu0 0.0
  %2666 = vmatprep.subr.mxu0 0.0
  %2667 = vmatpush1.msra.mxu0 0.0
  %2668 = vmatprep.subr.mxu0 0.0
  %2669 = vmatpush1.msra.mxu0 0.0
  %2670 = vmatprep.subr.mxu0 0.0
  %2671 = vmatpush1.msra.mxu0 0.0
  %2672 = vmatprep.subr.mxu0 0.0
  %2673 = vmatpush1.msra.mxu0 0.0
  %2674 = vmatprep.subr.mxu0 0.0
  %2675 = vmatpush1.msra.mxu0 0.0
  %2676 = vmatprep.subr.mxu0 0.0
  %2677 = vmatpush1.msra.mxu0 0.0
  %2678 = vmatprep.subr.mxu0 0.0
  %2679 = vmatpush1.msra.mxu0 0.0
  %2680 = vmatprep.subr.mxu0 0.0
  %2681 = vmatpush1.msra.mxu0 0.0
  %2682 = vmatprep.subr.mxu0 0.0
  %2683 = vmatpush1.msra.mxu0 0.0
  %2684 = vmatprep.subr.mxu0 0.0
  %2685 = vmatpush1.msra.mxu0 0.0
  %2686 = vmatprep.subr.mxu0 0.0
  %2687 = vmatpush1.msra.mxu0 0.0
  %2688 = vmatprep.subr.mxu0 0.0
  %2689 = vmatpush1.msra.mxu0 0.0
  %2690 = vmatprep.subr.mxu0 0.0
  %2691 = vmatpush1.msra.mxu0 0.0
  %2692 = vmatprep.subr.mxu0 0.0
  %2693 = vmatpush1.msra.mxu0 0.0
  %2694 = vmatprep.subr.mxu0 0.0
  %2695 = vmatpush1.msra.mxu0 0.0
  %2696 = vmatprep.subr.mxu0 0.0
  %2697 = vmatpush1.msra.mxu0 0.0
  %2698 = vmatprep.subr.mxu0 0.0
  %2699 = vmatpush1.msra.mxu0 0.0
  %2700 = vmatprep.subr.mxu0 0.0
  %2701 = vmatpush1.msra.mxu0 0.0
  %2702 = vmatprep.subr.mxu0 0.0
  %2703 = vmatpush1.msra.mxu0 0.0
  %2704 = vmatprep.subr.mxu0 0.0
  %2705 = vmatpush1.msra.mxu0 0.0
  %2706 = vmatprep.subr.mxu0 0.0
  %2707 = vmatpush1.msra.mxu0 0.0
  %2708 = vmatprep.subr.mxu0 0.0
  %2709 = vmatpush1.msra.mxu0 0.0
  %2710 = vmatprep.subr.mxu0 0.0
  %2711 = vmatpush1.msra.mxu0 0.0
  %2712 = vmatprep.subr.mxu0 0.0
  %2713 = vmatpush1.msra.mxu0 0.0
  %2714 = vmatprep.subr.mxu0 0.0
  %2715 = vmatpush1.msra.mxu0 0.0
  %2716 = vmatprep.subr.mxu0 0.0
  %2717 = vmatpush1.msra.mxu0 0.0
  %2718 = vmatprep.subr.mxu0 0.0
  %2719 = vmatpush1.msra.mxu0 0.0
  %2720 = vmatprep.mubr.f32.mxu0 0.0
  %v2721 = vand.u32 %v2492, 4294901760
  %v2722 = vsub.f32 %v2492, %v2721
  %2723 = vmatmul.mubr.f32.gmra.mrb[0].mxu0 %v2722
  %v2724 = vpop.f32.mrb[0].mxu0
  %v2725 = vadd.f32 %v2649, %v2724
  %v2726 = vpop.f32.mrb[0].mxu0
  %2727 = vdwg.mxu0
  %2728 = vmatprep.subr.mxu0 0.0
  %v2729 = vand.u32 %v26, 4294901760
  %2730 = vmatpush1.msra.mxu0 %v2729
  %2731 = vmatprep.subr.mxu0 0.0
  %v2732 = vand.u32 %v27, 4294901760
  %2733 = vmatpush1.msra.mxu0 %v2732
  %2734 = vmatprep.subr.mxu0 0.0
  %2735 = vmatpush1.msra.mxu0 0.0
  %2736 = vmatprep.subr.mxu0 0.0
  %2737 = vmatpush1.msra.mxu0 0.0
  %2738 = vmatprep.subr.mxu0 0.0
  %2739 = vmatpush1.msra.mxu0 0.0
  %2740 = vmatprep.subr.mxu0 0.0
  %2741 = vmatpush1.msra.mxu0 0.0
  %2742 = vmatprep.subr.mxu0 0.0
  %2743 = vmatpush1.msra.mxu0 0.0
  %2744 = vmatprep.subr.mxu0 0.0
  %2745 = vmatpush1.msra.mxu0 0.0
  %2746 = vmatprep.subr.mxu0 0.0
  %2747 = vmatpush1.msra.mxu0 0.0
  %2748 = vmatprep.subr.mxu0 0.0
  %2749 = vmatpush1.msra.mxu0 0.0
  %2750 = vmatprep.subr.mxu0 0.0
  %2751 = vmatpush1.msra.mxu0 0.0
  %2752 = vmatprep.subr.mxu0 0.0
  %2753 = vmatpush1.msra.mxu0 0.0
  %2754 = vmatprep.subr.mxu0 0.0
  %2755 = vmatpush1.msra.mxu0 0.0
  %2756 = vmatprep.subr.mxu0 0.0
  %2757 = vmatpush1.msra.mxu0 0.0
  %2758 = vmatprep.subr.mxu0 0.0
  %2759 = vmatpush1.msra.mxu0 0.0
  %2760 = vmatprep.subr.mxu0 0.0
  %2761 = vmatpush1.msra.mxu0 0.0
  %2762 = vmatprep.subr.mxu0 0.0
  %2763 = vmatpush1.msra.mxu0 0.0
  %2764 = vmatprep.subr.mxu0 0.0
  %2765 = vmatpush1.msra.mxu0 0.0
  %2766 = vmatprep.subr.mxu0 0.0
  %2767 = vmatpush1.msra.mxu0 0.0
  %2768 = vmatprep.subr.mxu0 0.0
  %2769 = vmatpush1.msra.mxu0 0.0
  %2770 = vmatprep.subr.mxu0 0.0
  %2771 = vmatpush1.msra.mxu0 0.0
  %2772 = vmatprep.subr.mxu0 0.0
  %2773 = vmatpush1.msra.mxu0 0.0
  %2774 = vmatprep.subr.mxu0 0.0
  %2775 = vmatpush1.msra.mxu0 0.0
  %2776 = vmatprep.subr.mxu0 0.0
  %2777 = vmatpush1.msra.mxu0 0.0
  %2778 = vmatprep.subr.mxu0 0.0
  %2779 = vmatpush1.msra.mxu0 0.0
  %2780 = vmatprep.subr.mxu0 0.0
  %2781 = vmatpush1.msra.mxu0 0.0
  %2782 = vmatprep.subr.mxu0 0.0
  %2783 = vmatpush1.msra.mxu0 0.0
  %2784 = vmatprep.subr.mxu0 0.0
  %2785 = vmatpush1.msra.mxu0 0.0
  %2786 = vmatprep.subr.mxu0 0.0
  %2787 = vmatpush1.msra.mxu0 0.0
  %2788 = vmatprep.subr.mxu0 0.0
  %2789 = vmatpush1.msra.mxu0 0.0
  %2790 = vmatprep.subr.mxu0 0.0
  %2791 = vmatpush1.msra.mxu0 0.0
  %2792 = vmatprep.subr.mxu0 0.0
  %2793 = vmatpush1.msra.mxu0 0.0
  %2794 = vmatprep.mubr.f32.mxu0 0.0
  %v2795 = vand.u32 %v2492, 4294901760
  %v2796 = vsub.f32 %v2492, %v2795
  %v2797 = vand.u32 %v2796, 4294901760
  %2798 = vmatmul.mubr.f32.gmra.mrb[0].mxu0 %v2797
  %v2799 = vpop.f32.mrb[0].mxu0
  %v2800 = vadd.f32 %v2725, %v2799
  %v2801 = vpop.f32.mrb[0].mxu0
  %2802 = vdwg.mxu0
  %2803 = vmatprep.subr.mxu0 0.0
  %v2804 = vand.u32 %v26, 4294901760
  %v2805 = vsub.f32 %v26, %v2804
  %v2806 = vand.u32 %v2805, 4294901760
  %2807 = vmatpush1.msra.mxu0 %v2806
  %2808 = vmatprep.subr.mxu0 0.0
  %v2809 = vand.u32 %v27, 4294901760
  %v2810 = vsub.f32 %v27, %v2809
  %v2811 = vand.u32 %v2810, 4294901760
  %2812 = vmatpush1.msra.mxu0 %v2811
  %2813 = vmatprep.subr.mxu0 0.0
  %2814 = vmatpush1.msra.mxu0 0.0
  %2815 = vmatprep.subr.mxu0 0.0
  %2816 = vmatpush1.msra.mxu0 0.0
  %2817 = vmatprep.subr.mxu0 0.0
  %2818 = vmatpush1.msra.mxu0 0.0
  %2819 = vmatprep.subr.mxu0 0.0
  %2820 = vmatpush1.msra.mxu0 0.0
  %2821 = vmatprep.subr.mxu0 0.0
  %2822 = vmatpush1.msra.mxu0 0.0
  %2823 = vmatprep.subr.mxu0 0.0
  %2824 = vmatpush1.msra.mxu0 0.0
  %2825 = vmatprep.subr.mxu0 0.0
  %2826 = vmatpush1.msra.mxu0 0.0
  %2827 = vmatprep.subr.mxu0 0.0
  %2828 = vmatpush1.msra.mxu0 0.0
  %2829 = vmatprep.subr.mxu0 0.0
  %2830 = vmatpush1.msra.mxu0 0.0
  %2831 = vmatprep.subr.mxu0 0.0
  %2832 = vmatpush1.msra.mxu0 0.0
  %2833 = vmatprep.subr.mxu0 0.0
  %2834 = vmatpush1.msra.mxu0 0.0
  %2835 = vmatprep.subr.mxu0 0.0
  %2836 = vmatpush1.msra.mxu0 0.0
  %2837 = vmatprep.subr.mxu0 0.0
  %2838 = vmatpush1.msra.mxu0 0.0
  %2839 = vmatprep.subr.mxu0 0.0
  %2840 = vmatpush1.msra.mxu0 0.0
  %2841 = vmatprep.subr.mxu0 0.0
  %2842 = vmatpush1.msra.mxu0 0.0
  %2843 = vmatprep.subr.mxu0 0.0
  %2844 = vmatpush1.msra.mxu0 0.0
  %2845 = vmatprep.subr.mxu0 0.0
  %2846 = vmatpush1.msra.mxu0 0.0
  %2847 = vmatprep.subr.mxu0 0.0
  %2848 = vmatpush1.msra.mxu0 0.0
  %2849 = vmatprep.subr.mxu0 0.0
  %2850 = vmatpush1.msra.mxu0 0.0
  %2851 = vmatprep.subr.mxu0 0.0
  %2852 = vmatpush1.msra.mxu0 0.0
  %2853 = vmatprep.subr.mxu0 0.0
  %2854 = vmatpush1.msra.mxu0 0.0
  %2855 = vmatprep.subr.mxu0 0.0
  %2856 = vmatpush1.msra.mxu0 0.0
  %2857 = vmatprep.subr.mxu0 0.0
  %2858 = vmatpush1.msra.mxu0 0.0
  %2859 = vmatprep.subr.mxu0 0.0
  %2860 = vmatpush1.msra.mxu0 0.0
  %2861 = vmatprep.subr.mxu0 0.0
  %2862 = vmatpush1.msra.mxu0 0.0
  %2863 = vmatprep.subr.mxu0 0.0
  %2864 = vmatpush1.msra.mxu0 0.0
  %2865 = vmatprep.subr.mxu0 0.0
  %2866 = vmatpush1.msra.mxu0 0.0
  %2867 = vmatprep.subr.mxu0 0.0
  %2868 = vmatpush1.msra.mxu0 0.0
  %2869 = vmatprep.subr.mxu0 0.0
  %2870 = vmatpush1.msra.mxu0 0.0
  %2871 = vmatprep.subr.mxu0 0.0
  %2872 = vmatpush1.msra.mxu0 0.0
  %2873 = vmatprep.mubr.f32.mxu0 0.0
  %v2874 = vand.u32 %v2492, 4294901760
  %2875 = vmatmul.mubr.f32.gmra.mrb[0].mxu0 %v2874
  %v2876 = vpop.f32.mrb[0].mxu0
  %v2877 = vadd.f32 %v2800, %v2876
  %v2878 = vpop.f32.mrb[0].mxu0
  %2879 = vdwg.mxu0
  %2880 = vmatprep.subr.mxu0 0.0
  %v2881 = vand.u32 %v26, 4294901760
  %2882 = vmatpush1.msra.mxu0 %v2881
  %2883 = vmatprep.subr.mxu0 0.0
  %v2884 = vand.u32 %v27, 4294901760
  %2885 = vmatpush1.msra.mxu0 %v2884
  %2886 = vmatprep.subr.mxu0 0.0
  %2887 = vmatpush1.msra.mxu0 0.0
  %2888 = vmatprep.subr.mxu0 0.0
  %2889 = vmatpush1.msra.mxu0 0.0
  %2890 = vmatprep.subr.mxu0 0.0
  %2891 = vmatpush1.msra.mxu0 0.0
  %2892 = vmatprep.subr.mxu0 0.0
  %2893 = vmatpush1.msra.mxu0 0.0
  %2894 = vmatprep.subr.mxu0 0.0
  %2895 = vmatpush1.msra.mxu0 0.0
  %2896 = vmatprep.subr.mxu0 0.0
  %2897 = vmatpush1.msra.mxu0 0.0
  %2898 = vmatprep.subr.mxu0 0.0
  %2899 = vmatpush1.msra.mxu0 0.0
  %2900 = vmatprep.subr.mxu0 0.0
  %2901 = vmatpush1.msra.mxu0 0.0
  %2902 = vmatprep.subr.mxu0 0.0
  %2903 = vmatpush1.msra.mxu0 0.0
  %2904 = vmatprep.subr.mxu0 0.0
  %2905 = vmatpush1.msra.mxu0 0.0
  %2906 = vmatprep.subr.mxu0 0.0
  %2907 = vmatpush1.msra.mxu0 0.0
  %2908 = vmatprep.subr.mxu0 0.0
  %2909 = vmatpush1.msra.mxu0 0.0
  %2910 = vmatprep.subr.mxu0 0.0
  %2911 = vmatpush1.msra.mxu0 0.0
  %2912 = vmatprep.subr.mxu0 0.0
  %2913 = vmatpush1.msra.mxu0 0.0
  %2914 = vmatprep.subr.mxu0 0.0
  %2915 = vmatpush1.msra.mxu0 0.0
  %2916 = vmatprep.subr.mxu0 0.0
  %2917 = vmatpush1.msra.mxu0 0.0
  %2918 = vmatprep.subr.mxu0 0.0
  %2919 = vmatpush1.msra.mxu0 0.0
  %2920 = vmatprep.subr.mxu0 0.0
  %2921 = vmatpush1.msra.mxu0 0.0
  %2922 = vmatprep.subr.mxu0 0.0
  %2923 = vmatpush1.msra.mxu0 0.0
  %2924 = vmatprep.subr.mxu0 0.0
  %2925 = vmatpush1.msra.mxu0 0.0
  %2926 = vmatprep.subr.mxu0 0.0
  %2927 = vmatpush1.msra.mxu0 0.0
  %2928 = vmatprep.subr.mxu0 0.0
  %2929 = vmatpush1.msra.mxu0 0.0
  %2930 = vmatprep.subr.mxu0 0.0
  %2931 = vmatpush1.msra.mxu0 0.0
  %2932 = vmatprep.subr.mxu0 0.0
  %2933 = vmatpush1.msra.mxu0 0.0
  %2934 = vmatprep.subr.mxu0 0.0
  %2935 = vmatpush1.msra.mxu0 0.0
  %2936 = vmatprep.subr.mxu0 0.0
  %2937 = vmatpush1.msra.mxu0 0.0
  %2938 = vmatprep.subr.mxu0 0.0
  %2939 = vmatpush1.msra.mxu0 0.0
  %2940 = vmatprep.subr.mxu0 0.0
  %2941 = vmatpush1.msra.mxu0 0.0
  %2942 = vmatprep.subr.mxu0 0.0
  %2943 = vmatpush1.msra.mxu0 0.0
  %2944 = vmatprep.subr.mxu0 0.0
  %2945 = vmatpush1.msra.mxu0 0.0
  %2946 = vmatprep.mubr.f32.mxu0 0.0
  %v2947 = vand.u32 %v2492, 4294901760
  %2948 = vmatmul.mubr.f32.gmra.mrb[0].mxu0 %v2947
  %v2949 = vpop.f32.mrb[0].mxu0
  %v2950 = vadd.f32 %v2877, %v2949
  %v2951 = vpop.f32.mrb[0].mxu0
  %2952 = vdwg.mxu0
  %2954 = vset.pattern.permute.xlu0 2
  %2955 = vperm.xlu0 %2954, %v2950
  %v2956 = vpop.permute.xlu0 %2955
  %v2958 = vmul.f32 %v2956, %v1514
  %v2959 = vsub.f32 %v2958, %v2950
  %2961 = vset.pattern.permute.xlu0 0
  %2962 = vperm.xlu0 %2961, %v2490
  %v2963 = vpop.permute.xlu0 %2962
  %v2965 = vmul.f32 %v2959, %v2963
  %v2966 = vadd.f32 %v2965, %v1514
  %v2968 = vsel %vm1518, %v2966, 0
  %vm2970 = vcmask 1041408
  %v2972 = vsel %vm2970, %v30, 0
  %2974 = vmatprep.subr.mxu0 0.0
  %v2975 = vand.u32 %v2972, 4294901760
  %2976 = vmatpush1.msra.mxu0 %v2975
  %2977 = vmatprep.subr.mxu0 0.0
  %2978 = vmatpush1.msra.mxu0 0.0
  %2979 = vmatprep.subr.mxu0 0.0
  %2980 = vmatpush1.msra.mxu0 0.0
  %2981 = vmatprep.subr.mxu0 0.0
  %2982 = vmatpush1.msra.mxu0 0.0
  %2983 = vmatprep.subr.mxu0 0.0
  %2984 = vmatpush1.msra.mxu0 0.0
  %2985 = vmatprep.subr.mxu0 0.0
  %2986 = vmatpush1.msra.mxu0 0.0
  %2987 = vmatprep.subr.mxu0 0.0
  %2988 = vmatpush1.msra.mxu0 0.0
  %2989 = vmatprep.subr.mxu0 0.0
  %2990 = vmatpush1.msra.mxu0 0.0
  %2991 = vmatprep.subr.mxu0 0.0
  %2992 = vmatpush1.msra.mxu0 0.0
  %2993 = vmatprep.subr.mxu0 0.0
  %2994 = vmatpush1.msra.mxu0 0.0
  %2995 = vmatprep.subr.mxu0 0.0
  %2996 = vmatpush1.msra.mxu0 0.0
  %2997 = vmatprep.subr.mxu0 0.0
  %2998 = vmatpush1.msra.mxu0 0.0
  %2999 = vmatprep.subr.mxu0 0.0
  %3000 = vmatpush1.msra.mxu0 0.0
  %3001 = vmatprep.subr.mxu0 0.0
  %3002 = vmatpush1.msra.mxu0 0.0
  %3003 = vmatprep.subr.mxu0 0.0
  %3004 = vmatpush1.msra.mxu0 0.0
  %3005 = vmatprep.subr.mxu0 0.0
  %3006 = vmatpush1.msra.mxu0 0.0
  %3007 = vmatprep.subr.mxu0 0.0
  %3008 = vmatpush1.msra.mxu0 0.0
  %3009 = vmatprep.subr.mxu0 0.0
  %3010 = vmatpush1.msra.mxu0 0.0
  %3011 = vmatprep.subr.mxu0 0.0
  %3012 = vmatpush1.msra.mxu0 0.0
  %3013 = vmatprep.subr.mxu0 0.0
  %3014 = vmatpush1.msra.mxu0 0.0
  %3015 = vmatprep.subr.mxu0 0.0
  %3016 = vmatpush1.msra.mxu0 0.0
  %3017 = vmatprep.subr.mxu0 0.0
  %3018 = vmatpush1.msra.mxu0 0.0
  %3019 = vmatprep.subr.mxu0 0.0
  %3020 = vmatpush1.msra.mxu0 0.0
  %3021 = vmatprep.subr.mxu0 0.0
  %3022 = vmatpush1.msra.mxu0 0.0
  %3023 = vmatprep.subr.mxu0 0.0
  %3024 = vmatpush1.msra.mxu0 0.0
  %3025 = vmatprep.subr.mxu0 0.0
  %3026 = vmatpush1.msra.mxu0 0.0
  %3027 = vmatprep.subr.mxu0 0.0
  %3028 = vmatpush1.msra.mxu0 0.0
  %3029 = vmatprep.subr.mxu0 0.0
  %3030 = vmatpush1.msra.mxu0 0.0
  %3031 = vmatprep.subr.mxu0 0.0
  %3032 = vmatpush1.msra.mxu0 0.0
  %3033 = vmatprep.subr.mxu0 0.0
  %3034 = vmatpush1.msra.mxu0 0.0
  %3035 = vmatprep.subr.mxu0 0.0
  %3036 = vmatpush1.msra.mxu0 0.0
  %3037 = vmatprep.subr.mxu0 0.0
  %3038 = vmatpush1.msra.mxu0 0.0
  %3039 = vmatprep.mubr.f32.mxu0 0.0
  %v3040 = vand.u32 %v2968, 4294901760
  %v3041 = vsub.f32 %v2968, %v3040
  %v3042 = vand.u32 %v3041, 4294901760
  %v3043 = vsub.f32 %v3041, %v3042
  %v3044 = vand.u32 %v3043, 4294901760
  %3045 = vmatmul.mubr.f32.gmra.mrb[0].mxu0 %v3044
  %v3046 = vpop.f32.mrb[0].mxu0
  %v3047 = vadd.f32 0.0, %v3046
  %v3048 = vpop.f32.mrb[0].mxu0
  %3049 = vdwg.mxu0
  %3050 = vmatprep.subr.mxu0 0.0
  %v3051 = vand.u32 %v2972, 4294901760
  %v3052 = vsub.f32 %v2972, %v3051
  %v3053 = vand.u32 %v3052, 4294901760
  %v3054 = vsub.f32 %v3052, %v3053
  %v3055 = vand.u32 %v3054, 4294901760
  %3056 = vmatpush1.msra.mxu0 %v3055
  %3057 = vmatprep.subr.mxu0 0.0
  %3058 = vmatpush1.msra.mxu0 0.0
  %3059 = vmatprep.subr.mxu0 0.0
  %3060 = vmatpush1.msra.mxu0 0.0
  %3061 = vmatprep.subr.mxu0 0.0
  %3062 = vmatpush1.msra.mxu0 0.0
  %3063 = vmatprep.subr.mxu0 0.0
  %3064 = vmatpush1.msra.mxu0 0.0
  %3065 = vmatprep.subr.mxu0 0.0
  %3066 = vmatpush1.msra.mxu0 0.0
  %3067 = vmatprep.subr.mxu0 0.0
  %3068 = vmatpush1.msra.mxu0 0.0
  %3069 = vmatprep.subr.mxu0 0.0
  %3070 = vmatpush1.msra.mxu0 0.0
  %3071 = vmatprep.subr.mxu0 0.0
  %3072 = vmatpush1.msra.mxu0 0.0
  %3073 = vmatprep.subr.mxu0 0.0
  %3074 = vmatpush1.msra.mxu0 0.0
  %3075 = vmatprep.subr.mxu0 0.0
  %3076 = vmatpush1.msra.mxu0 0.0
  %3077 = vmatprep.subr.mxu0 0.0
  %3078 = vmatpush1.msra.mxu0 0.0
  %3079 = vmatprep.subr.mxu0 0.0
  %3080 = vmatpush1.msra.mxu0 0.0
  %3081 = vmatprep.subr.mxu0 0.0
  %3082 = vmatpush1.msra.mxu0 0.0
  %3083 = vmatprep.subr.mxu0 0.0
  %3084 = vmatpush1.msra.mxu0 0.0
  %3085 = vmatprep.subr.mxu0 0.0
  %3086 = vmatpush1.msra.mxu0 0.0
  %3087 = vmatprep.subr.mxu0 0.0
  %3088 = vmatpush1.msra.mxu0 0.0
  %3089 = vmatprep.subr.mxu0 0.0
  %3090 = vmatpush1.msra.mxu0 0.0
  %3091 = vmatprep.subr.mxu0 0.0
  %3092 = vmatpush1.msra.mxu0 0.0
  %3093 = vmatprep.subr.mxu0 0.0
  %3094 = vmatpush1.msra.mxu0 0.0
  %3095 = vmatprep.subr.mxu0 0.0
  %3096 = vmatpush1.msra.mxu0 0.0
  %3097 = vmatprep.subr.mxu0 0.0
  %3098 = vmatpush1.msra.mxu0 0.0
  %3099 = vmatprep.subr.mxu0 0.0
  %3100 = vmatpush1.msra.mxu0 0.0
  %3101 = vmatprep.subr.mxu0 0.0
  %3102 = vmatpush1.msra.mxu0 0.0
  %3103 = vmatprep.subr.mxu0 0.0
  %3104 = vmatpush1.msra.mxu0 0.0
  %3105 = vmatprep.subr.mxu0 0.0
  %3106 = vmatpush1.msra.mxu0 0.0
  %3107 = vmatprep.subr.mxu0 0.0
  %3108 = vmatpush1.msra.mxu0 0.0
  %3109 = vmatprep.subr.mxu0 0.0
  %3110 = vmatpush1.msra.mxu0 0.0
  %3111 = vmatprep.subr.mxu0 0.0
  %3112 = vmatpush1.msra.mxu0 0.0
  %3113 = vmatprep.subr.mxu0 0.0
  %3114 = vmatpush1.msra.mxu0 0.0
  %3115 = vmatprep.subr.mxu0 0.0
  %3116 = vmatpush1.msra.mxu0 0.0
  %3117 = vmatprep.subr.mxu0 0.0
  %3118 = vmatpush1.msra.mxu0 0.0
  %3119 = vmatprep.mubr.f32.mxu0 0.0
  %v3120 = vand.u32 %v2968, 4294901760
  %3121 = vmatmul.mubr.f32.gmra.mrb[0].mxu0 %v3120
  %v3122 = vpop.f32.mrb[0].mxu0
  %v3123 = vadd.f32 %v3047, %v3122
  %v3124 = vpop.f32.mrb[0].mxu0
  %3125 = vdwg.mxu0
  %3126 = vmatprep.subr.mxu0 0.0
  %v3127 = vand.u32 %v2972, 4294901760
  %v3128 = vsub.f32 %v2972, %v3127
  %3129 = vmatpush1.msra.mxu0 %v3128
  %3130 = vmatprep.subr.mxu0 0.0
  %3131 = vmatpush1.msra.mxu0 0.0
  %3132 = vmatprep.subr.mxu0 0.0
  %3133 = vmatpush1.msra.mxu0 0.0
  %3134 = vmatprep.subr.mxu0 0.0
  %3135 = vmatpush1.msra.mxu0 0.0
  %3136 = vmatprep.subr.mxu0 0.0
  %3137 = vmatpush1.msra.mxu0 0.0
  %3138 = vmatprep.subr.mxu0 0.0
  %3139 = vmatpush1.msra.mxu0 0.0
  %3140 = vmatprep.subr.mxu0 0.0
  %3141 = vmatpush1.msra.mxu0 0.0
  %3142 = vmatprep.subr.mxu0 0.0
  %3143 = vmatpush1.msra.mxu0 0.0
  %3144 = vmatprep.subr.mxu0 0.0
  %3145 = vmatpush1.msra.mxu0 0.0
  %3146 = vmatprep.subr.mxu0 0.0
  %3147 = vmatpush1.msra.mxu0 0.0
  %3148 = vmatprep.subr.mxu0 0.0
  %3149 = vmatpush1.msra.mxu0 0.0
  %3150 = vmatprep.subr.mxu0 0.0
  %3151 = vmatpush1.msra.mxu0 0.0
  %3152 = vmatprep.subr.mxu0 0.0
  %3153 = vmatpush1.msra.mxu0 0.0
  %3154 = vmatprep.subr.mxu0 0.0
  %3155 = vmatpush1.msra.mxu0 0.0
  %3156 = vmatprep.subr.mxu0 0.0
  %3157 = vmatpush1.msra.mxu0 0.0
  %3158 = vmatprep.subr.mxu0 0.0
  %3159 = vmatpush1.msra.mxu0 0.0
  %3160 = vmatprep.subr.mxu0 0.0
  %3161 = vmatpush1.msra.mxu0 0.0
  %3162 = vmatprep.subr.mxu0 0.0
  %3163 = vmatpush1.msra.mxu0 0.0
  %3164 = vmatprep.subr.mxu0 0.0
  %3165 = vmatpush1.msra.mxu0 0.0
  %3166 = vmatprep.subr.mxu0 0.0
  %3167 = vmatpush1.msra.mxu0 0.0
  %3168 = vmatprep.subr.mxu0 0.0
  %3169 = vmatpush1.msra.mxu0 0.0
  %3170 = vmatprep.subr.mxu0 0.0
  %3171 = vmatpush1.msra.mxu0 0.0
  %3172 = vmatprep.subr.mxu0 0.0
  %3173 = vmatpush1.msra.mxu0 0.0
  %3174 = vmatprep.subr.mxu0 0.0
  %3175 = vmatpush1.msra.mxu0 0.0
  %3176 = vmatprep.subr.mxu0 0.0
  %3177 = vmatpush1.msra.mxu0 0.0
  %3178 = vmatprep.subr.mxu0 0.0
  %3179 = vmatpush1.msra.mxu0 0.0
  %3180 = vmatprep.subr.mxu0 0.0
  %3181 = vmatpush1.msra.mxu0 0.0
  %3182 = vmatprep.subr.mxu0 0.0
  %3183 = vmatpush1.msra.mxu0 0.0
  %3184 = vmatprep.subr.mxu0 0.0
  %3185 = vmatpush1.msra.mxu0 0.0
  %3186 = vmatprep.subr.mxu0 0.0
  %3187 = vmatpush1.msra.mxu0 0.0
  %3188 = vmatprep.subr.mxu0 0.0
  %3189 = vmatpush1.msra.mxu0 0.0
  %3190 = vmatprep.subr.mxu0 0.0
  %3191 = vmatpush1.msra.mxu0 0.0
  %3192 = vmatprep.mubr.f32.mxu0 0.0
  %v3193 = vand.u32 %v2968, 4294901760
  %v3194 = vsub.f32 %v2968, %v3193
  %3195 = vmatmul.mubr.f32.gmra.mrb[0].mxu0 %v3194
  %v3196 = vpop.f32.mrb[0].mxu0
  %v3197 = vadd.f32 %v3123, %v3196
  %v3198 = vpop.f32.mrb[0].mxu0
  %3199 = vdwg.mxu0
  %3200 = vmatprep.subr.mxu0 0.0
  %v3201 = vand.u32 %v2972, 4294901760
  %3202 = vmatpush1.msra.mxu0 %v3201
  %3203 = vmatprep.subr.mxu0 0.0
  %3204 = vmatpush1.msra.mxu0 0.0
  %3205 = vmatprep.subr.mxu0 0.0
  %3206 = vmatpush1.msra.mxu0 0.0
  %3207 = vmatprep.subr.mxu0 0.0
  %3208 = vmatpush1.msra.mxu0 0.0
  %3209 = vmatprep.subr.mxu0 0.0
  %3210 = vmatpush1.msra.mxu0 0.0
  %3211 = vmatprep.subr.mxu0 0.0
  %3212 = vmatpush1.msra.mxu0 0.0
  %3213 = vmatprep.subr.mxu0 0.0
  %3214 = vmatpush1.msra.mxu0 0.0
  %3215 = vmatprep.subr.mxu0 0.0
  %3216 = vmatpush1.msra.mxu0 0.0
  %3217 = vmatprep.subr.mxu0 0.0
  %3218 = vmatpush1.msra.mxu0 0.0
  %3219 = vmatprep.subr.mxu0 0.0
  %3220 = vmatpush1.msra.mxu0 0.0
  %3221 = vmatprep.subr.mxu0 0.0
  %3222 = vmatpush1.msra.mxu0 0.0
  %3223 = vmatprep.subr.mxu0 0.0
  %3224 = vmatpush1.msra.mxu0 0.0
  %3225 = vmatprep.subr.mxu0 0.0
  %3226 = vmatpush1.msra.mxu0 0.0
  %3227 = vmatprep.subr.mxu0 0.0
  %3228 = vmatpush1.msra.mxu0 0.0
  %3229 = vmatprep.subr.mxu0 0.0
  %3230 = vmatpush1.msra.mxu0 0.0
  %3231 = vmatprep.subr.mxu0 0.0
  %3232 = vmatpush1.msra.mxu0 0.0
  %3233 = vmatprep.subr.mxu0 0.0
  %3234 = vmatpush1.msra.mxu0 0.0
  %3235 = vmatprep.subr.mxu0 0.0
  %3236 = vmatpush1.msra.mxu0 0.0
  %3237 = vmatprep.subr.mxu0 0.0
  %3238 = vmatpush1.msra.mxu0 0.0
  %3239 = vmatprep.subr.mxu0 0.0
  %3240 = vmatpush1.msra.mxu0 0.0
  %3241 = vmatprep.subr.mxu0 0.0
  %3242 = vmatpush1.msra.mxu0 0.0
  %3243 = vmatprep.subr.mxu0 0.0
  %3244 = vmatpush1.msra.mxu0 0.0
  %3245 = vmatprep.subr.mxu0 0.0
  %3246 = vmatpush1.msra.mxu0 0.0
  %3247 = vmatprep.subr.mxu0 0.0
  %3248 = vmatpush1.msra.mxu0 0.0
  %3249 = vmatprep.subr.mxu0 0.0
  %3250 = vmatpush1.msra.mxu0 0.0
  %3251 = vmatprep.subr.mxu0 0.0
  %3252 = vmatpush1.msra.mxu0 0.0
  %3253 = vmatprep.subr.mxu0 0.0
  %3254 = vmatpush1.msra.mxu0 0.0
  %3255 = vmatprep.subr.mxu0 0.0
  %3256 = vmatpush1.msra.mxu0 0.0
  %3257 = vmatprep.subr.mxu0 0.0
  %3258 = vmatpush1.msra.mxu0 0.0
  %3259 = vmatprep.subr.mxu0 0.0
  %3260 = vmatpush1.msra.mxu0 0.0
  %3261 = vmatprep.subr.mxu0 0.0
  %3262 = vmatpush1.msra.mxu0 0.0
  %3263 = vmatprep.subr.mxu0 0.0
  %3264 = vmatpush1.msra.mxu0 0.0
  %3265 = vmatprep.mubr.f32.mxu0 0.0
  %v3266 = vand.u32 %v2968, 4294901760
  %v3267 = vsub.f32 %v2968, %v3266
  %v3268 = vand.u32 %v3267, 4294901760
  %3269 = vmatmul.mubr.f32.gmra.mrb[0].mxu0 %v3268
  %v3270 = vpop.f32.mrb[0].mxu0
  %v3271 = vadd.f32 %v3197, %v3270
  %v3272 = vpop.f32.mrb[0].mxu0
  %3273 = vdwg.mxu0
  %3274 = vmatprep.subr.mxu0 0.0
  %v3275 = vand.u32 %v2972, 4294901760
  %v3276 = vsub.f32 %v2972, %v3275
  %v3277 = vand.u32 %v3276, 4294901760
  %3278 = vmatpush1.msra.mxu0 %v3277
  %3279 = vmatprep.subr.mxu0 0.0
  %3280 = vmatpush1.msra.mxu0 0.0
  %3281 = vmatprep.subr.mxu0 0.0
  %3282 = vmatpush1.msra.mxu0 0.0
  %3283 = vmatprep.subr.mxu0 0.0
  %3284 = vmatpush1.msra.mxu0 0.0
  %3285 = vmatprep.subr.mxu0 0.0
  %3286 = vmatpush1.msra.mxu0 0.0
  %3287 = vmatprep.subr.mxu0 0.0
  %3288 = vmatpush1.msra.mxu0 0.0
  %3289 = vmatprep.subr.mxu0 0.0
  %3290 = vmatpush1.msra.mxu0 0.0
  %3291 = vmatprep.subr.mxu0 0.0
  %3292 = vmatpush1.msra.mxu0 0.0
  %3293 = vmatprep.subr.mxu0 0.0
  %3294 = vmatpush1.msra.mxu0 0.0
  %3295 = vmatprep.subr.mxu0 0.0
  %3296 = vmatpush1.msra.mxu0 0.0
  %3297 = vmatprep.subr.mxu0 0.0
  %3298 = vmatpush1.msra.mxu0 0.0
  %3299 = vmatprep.subr.mxu0 0.0
  %3300 = vmatpush1.msra.mxu0 0.0
  %3301 = vmatprep.subr.mxu0 0.0
  %3302 = vmatpush1.msra.mxu0 0.0
  %3303 = vmatprep.subr.mxu0 0.0
  %3304 = vmatpush1.msra.mxu0 0.0
  %3305 = vmatprep.subr.mxu0 0.0
  %3306 = vmatpush1.msra.mxu0 0.0
  %3307 = vmatprep.subr.mxu0 0.0
  %3308 = vmatpush1.msra.mxu0 0.0
  %3309 = vmatprep.subr.mxu0 0.0
  %3310 = vmatpush1.msra.mxu0 0.0
  %3311 = vmatprep.subr.mxu0 0.0
  %3312 = vmatpush1.msra.mxu0 0.0
  %3313 = vmatprep.subr.mxu0 0.0
  %3314 = vmatpush1.msra.mxu0 0.0
  %3315 = vmatprep.subr.mxu0 0.0
  %3316 = vmatpush1.msra.mxu0 0.0
  %3317 = vmatprep.subr.mxu0 0.0
  %3318 = vmatpush1.msra.mxu0 0.0
  %3319 = vmatprep.subr.mxu0 0.0
  %3320 = vmatpush1.msra.mxu0 0.0
  %3321 = vmatprep.subr.mxu0 0.0
  %3322 = vmatpush1.msra.mxu0 0.0
  %3323 = vmatprep.subr.mxu0 0.0
  %3324 = vmatpush1.msra.mxu0 0.0
  %3325 = vmatprep.subr.mxu0 0.0
  %3326 = vmatpush1.msra.mxu0 0.0
  %3327 = vmatprep.subr.mxu0 0.0
  %3328 = vmatpush1.msra.mxu0 0.0
  %3329 = vmatprep.subr.mxu0 0.0
  %3330 = vmatpush1.msra.mxu0 0.0
  %3331 = vmatprep.subr.mxu0 0.0
  %3332 = vmatpush1.msra.mxu0 0.0
  %3333 = vmatprep.subr.mxu0 0.0
  %3334 = vmatpush1.msra.mxu0 0.0
  %3335 = vmatprep.subr.mxu0 0.0
  %3336 = vmatpush1.msra.mxu0 0.0
  %3337 = vmatprep.subr.mxu0 0.0
  %3338 = vmatpush1.msra.mxu0 0.0
  %3339 = vmatprep.subr.mxu0 0.0
  %3340 = vmatpush1.msra.mxu0 0.0
  %3341 = vmatprep.mubr.f32.mxu0 0.0
  %v3342 = vand.u32 %v2968, 4294901760
  %3343 = vmatmul.mubr.f32.gmra.mrb[0].mxu0 %v3342
  %v3344 = vpop.f32.mrb[0].mxu0
  %v3345 = vadd.f32 %v3271, %v3344
  %v3346 = vpop.f32.mrb[0].mxu0
  %3347 = vdwg.mxu0
  %3348 = vmatprep.subr.mxu0 0.0
  %v3349 = vand.u32 %v2972, 4294901760
  %3350 = vmatpush1.msra.mxu0 %v3349
  %3351 = vmatprep.subr.mxu0 0.0
  %3352 = vmatpush1.msra.mxu0 0.0
  %3353 = vmatprep.subr.mxu0 0.0
  %3354 = vmatpush1.msra.mxu0 0.0
  %3355 = vmatprep.subr.mxu0 0.0
  %3356 = vmatpush1.msra.mxu0 0.0
  %3357 = vmatprep.subr.mxu0 0.0
  %3358 = vmatpush1.msra.mxu0 0.0
  %3359 = vmatprep.subr.mxu0 0.0
  %3360 = vmatpush1.msra.mxu0 0.0
  %3361 = vmatprep.subr.mxu0 0.0
  %3362 = vmatpush1.msra.mxu0 0.0
  %3363 = vmatprep.subr.mxu0 0.0
  %3364 = vmatpush1.msra.mxu0 0.0
  %3365 = vmatprep.subr.mxu0 0.0
  %3366 = vmatpush1.msra.mxu0 0.0
  %3367 = vmatprep.subr.mxu0 0.0
  %3368 = vmatpush1.msra.mxu0 0.0
  %3369 = vmatprep.subr.mxu0 0.0
  %3370 = vmatpush1.msra.mxu0 0.0
  %3371 = vmatprep.subr.mxu0 0.0
  %3372 = vmatpush1.msra.mxu0 0.0
  %3373 = vmatprep.subr.mxu0 0.0
  %3374 = vmatpush1.msra.mxu0 0.0
  %3375 = vmatprep.subr.mxu0 0.0
  %3376 = vmatpush1.msra.mxu0 0.0
  %3377 = vmatprep.subr.mxu0 0.0
  %3378 = vmatpush1.msra.mxu0 0.0
  %3379 = vmatprep.subr.mxu0 0.0
  %3380 = vmatpush1.msra.mxu0 0.0
  %3381 = vmatprep.subr.mxu0 0.0
  %3382 = vmatpush1.msra.mxu0 0.0
  %3383 = vmatprep.subr.mxu0 0.0
  %3384 = vmatpush1.msra.mxu0 0.0
  %3385 = vmatprep.subr.mxu0 0.0
  %3386 = vmatpush1.msra.mxu0 0.0
  %3387 = vmatprep.subr.mxu0 0.0
  %3388 = vmatpush1.msra.mxu0 0.0
  %3389 = vmatprep.subr.mxu0 0.0
  %3390 = vmatpush1.msra.mxu0 0.0
  %3391 = vmatprep.subr.mxu0 0.0
  %3392 = vmatpush1.msra.mxu0 0.0
  %3393 = vmatprep.subr.mxu0 0.0
  %3394 = vmatpush1.msra.mxu0 0.0
  %3395 = vmatprep.subr.mxu0 0.0
  %3396 = vmatpush1.msra.mxu0 0.0
  %3397 = vmatprep.subr.mxu0 0.0
  %3398 = vmatpush1.msra.mxu0 0.0
  %3399 = vmatprep.subr.mxu0 0.0
  %3400 = vmatpush1.msra.mxu0 0.0
  %3401 = vmatprep.subr.mxu0 0.0
  %3402 = vmatpush1.msra.mxu0 0.0
  %3403 = vmatprep.subr.mxu0 0.0
  %3404 = vmatpush1.msra.mxu0 0.0
  %3405 = vmatprep.subr.mxu0 0.0
  %3406 = vmatpush1.msra.mxu0 0.0
  %3407 = vmatprep.subr.mxu0 0.0
  %3408 = vmatpush1.msra.mxu0 0.0
  %3409 = vmatprep.subr.mxu0 0.0
  %3410 = vmatpush1.msra.mxu0 0.0
  %3411 = vmatprep.subr.mxu0 0.0
  %3412 = vmatpush1.msra.mxu0 0.0
  %3413 = vmatprep.mubr.f32.mxu0 0.0
  %v3414 = vand.u32 %v2968, 4294901760
  %3415 = vmatmul.mubr.f32.gmra.mrb[0].mxu0 %v3414
  %v3416 = vpop.f32.mrb[0].mxu0
  %v3417 = vadd.f32 %v3345, %v3416
  %v3418 = vpop.f32.mrb[0].mxu0
  %3419 = vdwg.mxu0
  %3420 = vst.msk [vmem:[%s2] sm:$0xff] %vm42, %v3417
  // Predicated region
  $region10: #{energy_lat_nn_forward.1} parent=0 // pred_check
    _
  $region11: #{energy_lat_nn_forward.1} parent=0 // pred_check_branch
    %3422 = sbr.rel (0) target = $region13
  $region12: #{energy_lat_nn_forward.1} parent=0 // pred_region
    _
  $region13: #{energy_lat_nn_forward.1} parent=0 // pred_fallthru
    _
  // Predicated region
  $region14: #{energy_lat_nn_forward.1} parent=0 // pred_check
    _
  $region15: #{energy_lat_nn_forward.1} parent=0 // pred_check_branch
    %3424 = sbr.rel (0) target = $region17
  $region16: #{energy_lat_nn_forward.1} parent=0 // pred_region
    _
  $region17: #{energy_lat_nn_forward.1} parent=0 // pred_fallthru
    _

</llo_original>
